<compile_context>
chip_gen: v6e
topology: v6e:2x2x1
jax: 0.10.0
libtpu: 0.0.40
codegen_flags: <defaults>
</compile_context>

<pallas_src>
import numpy as np
import jax
import jax.numpy as jnp
from jax.experimental import pallas as pl
from jax.experimental.pallas import tpu as pltpu


# ----------------------------- fused Pallas kernel --------------------------

def _sigmoid(x):
    # 1 / (1 + exp(-x)); approx reciprocal runs on the EUP (off the VALU slot).
    return pl.reciprocal(1.0 + jnp.exp(-x), approx=True)


def _lenet_kernel(x_ref, c1w_ref, c1b_ref, ph1_ref, pw1_ref,
                  c2w_ref, c2b_ref, ph2_ref, pw2_ref,
                  f1w_ref, f1b_ref, f2w_ref, f2b_ref, f3w_ref, f3b_ref,
                  out_ref, p1_scr, p2_scr):
    f32 = jnp.float32
    bf16 = jnp.bfloat16

    # ---- conv1 + bias + sigmoid -------------------------------------------
    # x_ref[0]: one image, rows = H (32), lanes = w*4 + c (w < 32, c < 3).
    # 5 banded matmuls, one per vertical tap ky; each contracts over (kx, c).
    acc1 = jnp.zeros((28, 256), f32)
    for ky in range(5):
        lhs = x_ref[0, ky:ky + 28, :]                        # (28, 128) bf16
        acc1 = acc1 + jnp.dot(lhs, c1w_ref[ky],
                              preferred_element_type=f32)    # (28, 256) f32
    s1 = _sigmoid(acc1 + c1b_ref[...]).astype(bf16)          # lanes = ox*8+co

    # ---- pool1 (2x2 avg) as two tiny 0.5/0.5 matmuls ------------------------
    t1 = jnp.dot(ph1_ref[...], s1, preferred_element_type=f32).astype(bf16)
    p1 = jnp.dot(t1, pw1_ref[...], preferred_element_type=f32)
    p1_scr[...] = p1.astype(bf16)                # (16,128) rows=i, lanes=j*8+c

    # ---- conv2 + bias + sigmoid ---------------------------------------------
    acc2 = jnp.zeros((10, 256), f32)
    for ky in range(5):
        lhs = p1_scr[ky:ky + 10, :]                          # (10, 128) bf16
        acc2 = acc2 + jnp.dot(lhs, c2w_ref[ky],
                              preferred_element_type=f32)    # (10, 256) f32
    s2 = _sigmoid(acc2 + c2b_ref[...]).astype(bf16)          # lanes = ox2*16+co

    # ---- pool2 (2x2 avg) ----------------------------------------------------
    t2 = jnp.dot(ph2_ref[...], s2, preferred_element_type=f32).astype(bf16)
    p2 = jnp.dot(t2, pw2_ref[...], preferred_element_type=f32)
    p2_scr[...] = p2.astype(bf16)             # (16,128) rows=i2, lanes=j2*16+co

    # ---- fc1 (pool2-flatten folded into 5 per-row slabs) + sigmoid ----------
    h1 = f1b_ref[...]                                        # (1, 128) f32
    for i2 in range(5):
        h1 = h1 + jnp.dot(p2_scr[i2:i2 + 1, :], f1w_ref[i2],
                          preferred_element_type=f32)
    h1 = _sigmoid(h1).astype(bf16)

    # ---- fc2 + sigmoid, fc3 -------------------------------------------------
    h2 = _sigmoid(jnp.dot(h1, f2w_ref[...], preferred_element_type=f32)
                  + f2b_ref[...]).astype(bf16)
    out_ref[0] = (jnp.dot(h2, f3w_ref[...], preferred_element_type=f32)
                  + f3b_ref[...])                            # (1, 128) f32


# ----------------------------- parameter packing (host, one-time) -----------

def pack_params(params):
    """Re-pack torch-layout LeNet params into lane-dense, MXU-friendly slabs."""
    w1 = np.asarray(params["conv1_w"], np.float32)   # (6, 3, 5, 5)
    b1 = np.asarray(params["conv1_b"], np.float32)
    w2 = np.asarray(params["conv2_w"], np.float32)   # (16, 6, 5, 5)
    b2 = np.asarray(params["conv2_b"], np.float32)
    fw1 = np.asarray(params["fc1_w"], np.float32)    # (120, 400)
    fb1 = np.asarray(params["fc1_b"], np.float32)
    fw2 = np.asarray(params["fc2_w"], np.float32)    # (84, 120)
    fb2 = np.asarray(params["fc2_b"], np.float32)
    fw3 = np.asarray(params["fc3_w"], np.float32)    # (num_classes, 84)
    fb3 = np.asarray(params["fc3_b"], np.float32)
    num_classes = fw3.shape[0]

    # conv1 banded slabs: in-lane = w*4 + c, out-lane = ox*8 + co.
    ox = np.arange(28)
    c1w = np.zeros((5, 128, 256), np.float32)
    for ky in range(5):
        for kx in range(5):
            for c in range(3):
                for co in range(6):
                    c1w[ky, (ox + kx) * 4 + c, ox * 8 + co] = w1[co, c, ky, kx]
    c1b = np.zeros((1, 256), np.float32)
    for co in range(6):
        c1b[0, ox * 8 + co] = b1[co]

    # pool1: rows 28->14 (padded to 16), lanes (ox*8+co)->(j*8+co), j<14.
    ph1 = np.zeros((16, 28), np.float32)
    for i in range(14):
        ph1[i, 2 * i:2 * i + 2] = 0.5
    pw1 = np.zeros((256, 128), np.float32)
    for j in range(14):
        for co in range(6):
            pw1[(2 * j) * 8 + co, j * 8 + co] = 0.5
            pw1[(2 * j + 1) * 8 + co, j * 8 + co] = 0.5

    # conv2 banded slabs: in-lane = j*8 + c, out-lane = ox2*16 + co.
    ox2 = np.arange(10)
    c2w = np.zeros((5, 128, 256), np.float32)
    for ky in range(5):
        for kx in range(5):
            for c in range(6):
                for co in range(16):
                    c2w[ky, (ox2 + kx) * 8 + c, ox2 * 16 + co] = w2[co, c, ky, kx]
    c2b = np.zeros((1, 256), np.float32)
    for co in range(16):
        c2b[0, ox2 * 16 + co] = b2[co]

    # pool2: rows 10->5 (padded to 16), lanes (ox2*16+co)->(j2*16+co), j2<5.
    ph2 = np.zeros((16, 10), np.float32)
    for i in range(5):
        ph2[i, 2 * i:2 * i + 2] = 0.5
    pw2 = np.zeros((256, 128), np.float32)
    for j2 in range(5):
        for co in range(16):
            pw2[(2 * j2) * 16 + co, j2 * 16 + co] = 0.5
            pw2[(2 * j2 + 1) * 16 + co, j2 * 16 + co] = 0.5

    # fc1 folded over pooled rows i2 (torch flatten order = co*25 + i2*5 + j2).
    f1w = np.zeros((5, 128, 128), np.float32)
    for i2 in range(5):
        for j2 in range(5):
            for co in range(16):
                f1w[i2, j2 * 16 + co, :120] = fw1[:, co * 25 + i2 * 5 + j2]
    f1b = np.zeros((1, 128), np.float32)
    f1b[0, :120] = fb1

    f2w = np.zeros((128, 128), np.float32)
    f2w[:120, :84] = fw2.T
    f2b = np.zeros((1, 128), np.float32)
    f2b[0, :84] = fb2
    f3w = np.zeros((128, 128), np.float32)
    f3w[:84, :num_classes] = fw3.T
    f3b = np.zeros((1, 128), np.float32)
    f3b[0, :num_classes] = fb3

    bf = jnp.bfloat16
    return dict(
        c1w=jnp.asarray(c1w, bf), c1b=jnp.asarray(c1b),
        ph1=jnp.asarray(ph1, bf), pw1=jnp.asarray(pw1, bf),
        c2w=jnp.asarray(c2w, bf), c2b=jnp.asarray(c2b),
        ph2=jnp.asarray(ph2, bf), pw2=jnp.asarray(pw2, bf),
        f1w=jnp.asarray(f1w, bf), f1b=jnp.asarray(f1b),
        f2w=jnp.asarray(f2w, bf), f2b=jnp.asarray(f2b),
        f3w=jnp.asarray(f3w, bf), f3b=jnp.asarray(f3b),
        num_classes=num_classes,
    )


# ----------------------------- forward wrapper -------------------------------

def _full_spec(a):
    zeros = (0,) * a.ndim
    return pl.BlockSpec(a.shape, lambda i: zeros)


def lenet_forward(x, packed):
    """x: (B, 3, 32, 32) float32 NCHW -> (B, num_classes) float32."""
    b = x.shape[0]
    # Channels-last, channel-padded (3 -> 4) rows: (B, 32, W*4 = 128) bf16.
    xr = jnp.transpose(x, (0, 2, 3, 1))
    xr = jnp.pad(xr, ((0, 0), (0, 0), (0, 0), (0, 1)))
    xr = xr.reshape(b, 32, 128).astype(jnp.bfloat16)

    names = ("c1w", "c1b", "ph1", "pw1", "c2w", "c2b", "ph2", "pw2",
             "f1w", "f1b", "f2w", "f2b", "f3w", "f3b")
    weights = [packed[n] for n in names]

    out = pl.pallas_call(
        _lenet_kernel,
        out_shape=jax.ShapeDtypeStruct((b, 1, 128), jnp.float32),
        grid_spec=pltpu.PrefetchScalarGridSpec(
            num_scalar_prefetch=0,
            grid=(b,),
            in_specs=[pl.BlockSpec((1, 32, 128), lambda i: (i, 0, 0))]
                     + [_full_spec(w) for w in weights],
            out_specs=pl.BlockSpec((1, 1, 128), lambda i: (i, 0, 0)),
            scratch_shapes=[pltpu.VMEM((16, 128), jnp.bfloat16),   # pool1 map
                            pltpu.VMEM((16, 128), jnp.bfloat16)],  # pool2 map
        ),
        compiler_params=pltpu.CompilerParams(
            dimension_semantics=("parallel",)),
    )(xr, *weights)
    return out[:, 0, :packed["num_classes"]]


# ----------------------------- parameter init --------------------------------

def init_params(key, num_classes):
    ks = jax.random.split(key, 10)
    f32 = jnp.float32
    scale = 0.1
    return {
        # torch Conv2d weights: (out_ch, in_ch, kh, kw); Linear: (out, in)
        "conv1_w": scale * jax.random.normal(ks[0], (6, 3, 5, 5), f32),
        "conv1_b": scale * jax.random.normal(ks[1], (6,), f32),
        "conv2_w": scale * jax.random.normal(ks[2], (16, 6, 5, 5), f32),
        "conv2_b": scale * jax.random.normal(ks[3], (16,), f32),
        "fc1_w": scale * jax.random.normal(ks[4], (120, 400), f32),
        "fc1_b": scale * jax.random.normal(ks[5], (120,), f32),
        "fc2_w": scale * jax.random.normal(ks[6], (84, 120), f32),
        "fc2_b": scale * jax.random.normal(ks[7], (84,), f32),
        "fc3_w": scale * jax.random.normal(ks[8], (num_classes, 84), f32),
        "fc3_b": scale * jax.random.normal(ks[9], (num_classes,), f32),
    }


# ----------------------------- main -------------------------------------------

if __name__ == "__main__":
    num_classes = 10
    batch = 2

    key = jax.random.PRNGKey(0)
    k_x, k_p = jax.random.split(key)
    # LeNet for CIFAR-10 structurally requires 3x32x32 inputs (fc1 is 16*5*5).
    x = jax.random.normal(k_x, (batch, 3, 32, 32), jnp.float32)
    params = init_params(k_p, num_classes)

    packed = pack_params(params)
    out = lenet_forward(x, packed)
    out = jax.block_until_ready(out)

    assert out.shape == (batch, num_classes)
    assert out.dtype == jnp.float32
    print("KERNEL_OK")
</pallas_src>

<mosaic_0001>
module attributes {stable_mosaic.version = 11 : i64} {
  func.func @_lenet_kernel(%arg0: i32, %arg1: memref<1x32x128xbf16, #tpu.memory_space<vmem>>, %arg2: memref<5x128x256xbf16, #tpu.memory_space<vmem>>, %arg3: memref<1x256xf32, #tpu.memory_space<vmem>>, %arg4: memref<16x28xbf16, #tpu.memory_space<vmem>>, %arg5: memref<256x128xbf16, #tpu.memory_space<vmem>>, %arg6: memref<5x128x256xbf16, #tpu.memory_space<vmem>>, %arg7: memref<1x256xf32, #tpu.memory_space<vmem>>, %arg8: memref<16x10xbf16, #tpu.memory_space<vmem>>, %arg9: memref<256x128xbf16, #tpu.memory_space<vmem>>, %arg10: memref<5x128x128xbf16, #tpu.memory_space<vmem>>, %arg11: memref<1x128xf32, #tpu.memory_space<vmem>>, %arg12: memref<128x128xbf16, #tpu.memory_space<vmem>>, %arg13: memref<1x128xf32, #tpu.memory_space<vmem>>, %arg14: memref<128x128xbf16, #tpu.memory_space<vmem>>, %arg15: memref<1x128xf32, #tpu.memory_space<vmem>>, %arg16: memref<1x1x128xf32, #tpu.memory_space<vmem>>, %arg17: memref<16x128xbf16, #tpu.memory_space<vmem>>, %arg18: memref<16x128xbf16, #tpu.memory_space<vmem>>) attributes {dimension_semantics = [#tpu.dimension_semantics<parallel>], iteration_bounds = array<i64: 2>, scalar_prefetch = 0 : i64, scratch_operands = 2 : i64, tpu.core_type = #tpu.core_type<tc>, window_params = [{transform_indices = @transform_0, window_bounds = array<i64: 1, 32, 128>}, {pipeline_mode = #tpu.pipeline_mode<synchronous>, transform_indices = @transform_1, window_bounds = array<i64: 5, 128, 256>}, {pipeline_mode = #tpu.pipeline_mode<synchronous>, transform_indices = @transform_2, window_bounds = array<i64: 1, 256>}, {pipeline_mode = #tpu.pipeline_mode<synchronous>, transform_indices = @transform_3, window_bounds = array<i64: 16, 28>}, {pipeline_mode = #tpu.pipeline_mode<synchronous>, transform_indices = @transform_4, window_bounds = array<i64: 256, 128>}, {pipeline_mode = #tpu.pipeline_mode<synchronous>, transform_indices = @transform_5, window_bounds = array<i64: 5, 128, 256>}, {pipeline_mode = #tpu.pipeline_mode<synchronous>, transform_indices = @transform_6, window_bounds = array<i64: 1, 256>}, {pipeline_mode = #tpu.pipeline_mode<synchronous>, transform_indices = @transform_7, window_bounds = array<i64: 16, 10>}, {pipeline_mode = #tpu.pipeline_mode<synchronous>, transform_indices = @transform_8, window_bounds = array<i64: 256, 128>}, {pipeline_mode = #tpu.pipeline_mode<synchronous>, transform_indices = @transform_9, window_bounds = array<i64: 5, 128, 128>}, {pipeline_mode = #tpu.pipeline_mode<synchronous>, transform_indices = @transform_10, window_bounds = array<i64: 1, 128>}, {pipeline_mode = #tpu.pipeline_mode<synchronous>, transform_indices = @transform_11, window_bounds = array<i64: 128, 128>}, {pipeline_mode = #tpu.pipeline_mode<synchronous>, transform_indices = @transform_12, window_bounds = array<i64: 1, 128>}, {pipeline_mode = #tpu.pipeline_mode<synchronous>, transform_indices = @transform_13, window_bounds = array<i64: 128, 128>}, {pipeline_mode = #tpu.pipeline_mode<synchronous>, transform_indices = @transform_14, window_bounds = array<i64: 1, 128>}, {transform_indices = @transform_15, window_bounds = array<i64: 1, 1, 128>}]} {
    %cst = arith.constant 0.000000e+00 : f32
    %0 = vector.broadcast %cst : f32 to vector<28x256xf32>
    %c0 = arith.constant 0 : index
    %c0_0 = arith.constant 0 : index
    %c0_1 = arith.constant 0 : index
    %1 = vector.load %arg1[%c0, %c0_0, %c0_1] : memref<1x32x128xbf16, #tpu.memory_space<vmem>>, vector<1x28x128xbf16>
    %2 = vector.shape_cast %1 : vector<1x28x128xbf16> to vector<28x128xbf16>
    %c0_2 = arith.constant 0 : index
    %c0_3 = arith.constant 0 : index
    %c0_4 = arith.constant 0 : index
    %3 = vector.load %arg2[%c0_2, %c0_3, %c0_4] : memref<5x128x256xbf16, #tpu.memory_space<vmem>>, vector<1x128x256xbf16>
    %4 = vector.shape_cast %3 : vector<1x128x256xbf16> to vector<128x256xbf16>
    %cst_5 = arith.constant dense<0.000000e+00> : vector<28x256xf32>
    %5 = tpu.matmul %2, %4, %cst_5 {dimension_numbers = #tpu.dot_dimension_numbers<[1], [0], [0], [1], [0, 0, 1, 1], [], []>} : vector<28x128xbf16>, vector<128x256xbf16>, vector<28x256xf32> -> vector<28x256xf32>
    %6 = arith.addf %0, %5 : vector<28x256xf32>
    %c0_6 = arith.constant 0 : index
    %c1 = arith.constant 1 : index
    %c0_7 = arith.constant 0 : index
    %7 = vector.load %arg1[%c0_6, %c1, %c0_7] : memref<1x32x128xbf16, #tpu.memory_space<vmem>>, vector<1x28x128xbf16>
    %8 = vector.shape_cast %7 : vector<1x28x128xbf16> to vector<28x128xbf16>
    %c1_8 = arith.constant 1 : index
    %c0_9 = arith.constant 0 : index
    %c0_10 = arith.constant 0 : index
    %9 = vector.load %arg2[%c1_8, %c0_9, %c0_10] : memref<5x128x256xbf16, #tpu.memory_space<vmem>>, vector<1x128x256xbf16>
    %10 = vector.shape_cast %9 : vector<1x128x256xbf16> to vector<128x256xbf16>
    %cst_11 = arith.constant dense<0.000000e+00> : vector<28x256xf32>
    %11 = tpu.matmul %8, %10, %cst_11 {dimension_numbers = #tpu.dot_dimension_numbers<[1], [0], [0], [1], [0, 0, 1, 1], [], []>} : vector<28x128xbf16>, vector<128x256xbf16>, vector<28x256xf32> -> vector<28x256xf32>
    %12 = arith.addf %6, %11 : vector<28x256xf32>
    %c0_12 = arith.constant 0 : index
    %c2 = arith.constant 2 : index
    %c0_13 = arith.constant 0 : index
    %13 = vector.load %arg1[%c0_12, %c2, %c0_13] : memref<1x32x128xbf16, #tpu.memory_space<vmem>>, vector<1x28x128xbf16>
    %14 = vector.shape_cast %13 : vector<1x28x128xbf16> to vector<28x128xbf16>
    %c2_14 = arith.constant 2 : index
    %c0_15 = arith.constant 0 : index
    %c0_16 = arith.constant 0 : index
    %15 = vector.load %arg2[%c2_14, %c0_15, %c0_16] : memref<5x128x256xbf16, #tpu.memory_space<vmem>>, vector<1x128x256xbf16>
    %16 = vector.shape_cast %15 : vector<1x128x256xbf16> to vector<128x256xbf16>
    %cst_17 = arith.constant dense<0.000000e+00> : vector<28x256xf32>
    %17 = tpu.matmul %14, %16, %cst_17 {dimension_numbers = #tpu.dot_dimension_numbers<[1], [0], [0], [1], [0, 0, 1, 1], [], []>} : vector<28x128xbf16>, vector<128x256xbf16>, vector<28x256xf32> -> vector<28x256xf32>
    %18 = arith.addf %12, %17 : vector<28x256xf32>
    %c0_18 = arith.constant 0 : index
    %c3 = arith.constant 3 : index
    %c0_19 = arith.constant 0 : index
    %19 = vector.load %arg1[%c0_18, %c3, %c0_19] : memref<1x32x128xbf16, #tpu.memory_space<vmem>>, vector<1x28x128xbf16>
    %20 = vector.shape_cast %19 : vector<1x28x128xbf16> to vector<28x128xbf16>
    %c3_20 = arith.constant 3 : index
    %c0_21 = arith.constant 0 : index
    %c0_22 = arith.constant 0 : index
    %21 = vector.load %arg2[%c3_20, %c0_21, %c0_22] : memref<5x128x256xbf16, #tpu.memory_space<vmem>>, vector<1x128x256xbf16>
    %22 = vector.shape_cast %21 : vector<1x128x256xbf16> to vector<128x256xbf16>
    %cst_23 = arith.constant dense<0.000000e+00> : vector<28x256xf32>
    %23 = tpu.matmul %20, %22, %cst_23 {dimension_numbers = #tpu.dot_dimension_numbers<[1], [0], [0], [1], [0, 0, 1, 1], [], []>} : vector<28x128xbf16>, vector<128x256xbf16>, vector<28x256xf32> -> vector<28x256xf32>
    %24 = arith.addf %18, %23 : vector<28x256xf32>
    %c0_24 = arith.constant 0 : index
    %c4 = arith.constant 4 : index
    %c0_25 = arith.constant 0 : index
    %25 = vector.load %arg1[%c0_24, %c4, %c0_25] : memref<1x32x128xbf16, #tpu.memory_space<vmem>>, vector<1x28x128xbf16>
    %26 = vector.shape_cast %25 : vector<1x28x128xbf16> to vector<28x128xbf16>
    %c4_26 = arith.constant 4 : index
    %c0_27 = arith.constant 0 : index
    %c0_28 = arith.constant 0 : index
    %27 = vector.load %arg2[%c4_26, %c0_27, %c0_28] : memref<5x128x256xbf16, #tpu.memory_space<vmem>>, vector<1x128x256xbf16>
    %28 = vector.shape_cast %27 : vector<1x128x256xbf16> to vector<128x256xbf16>
    %cst_29 = arith.constant dense<0.000000e+00> : vector<28x256xf32>
    %29 = tpu.matmul %26, %28, %cst_29 {dimension_numbers = #tpu.dot_dimension_numbers<[1], [0], [0], [1], [0, 0, 1, 1], [], []>} : vector<28x128xbf16>, vector<128x256xbf16>, vector<28x256xf32> -> vector<28x256xf32>
    %30 = arith.addf %24, %29 : vector<28x256xf32>
    %c0_30 = arith.constant 0 : index
    %c0_31 = arith.constant 0 : index
    %31 = vector.load %arg3[%c0_30, %c0_31] : memref<1x256xf32, #tpu.memory_space<vmem>>, vector<1x256xf32>
    %32 = vector.broadcast %31 : vector<1x256xf32> to vector<28x256xf32>
    %33 = arith.addf %30, %32 : vector<28x256xf32>
    %cst_32 = arith.constant 0.000000e+00 : f32
    %34 = vector.broadcast %cst_32 : f32 to vector<28x256xf32>
    %35 = arith.subf %34, %33 : vector<28x256xf32>
    %36 = math.exp %35 : vector<28x256xf32>
    %cst_33 = arith.constant 1.000000e+00 : f32
    %37 = vector.broadcast %cst_33 : f32 to vector<28x256xf32>
    %38 = arith.addf %37, %36 : vector<28x256xf32>
    %39 = tpu.reciprocal %38 {approx = true} : vector<28x256xf32> -> vector<28x256xf32>
    %40 = arith.truncf %39 : vector<28x256xf32> to vector<28x256xbf16>
    %c0_34 = arith.constant 0 : index
    %c0_35 = arith.constant 0 : index
    %41 = vector.load %arg4[%c0_34, %c0_35] : memref<16x28xbf16, #tpu.memory_space<vmem>>, vector<16x28xbf16>
    %cst_36 = arith.constant dense<0.000000e+00> : vector<16x256xf32>
    %42 = tpu.matmul %41, %40, %cst_36 {dimension_numbers = #tpu.dot_dimension_numbers<[1], [0], [0], [1], [0, 0, 1, 1], [], []>} : vector<16x28xbf16>, vector<28x256xbf16>, vector<16x256xf32> -> vector<16x256xf32>
    %43 = arith.truncf %42 : vector<16x256xf32> to vector<16x256xbf16>
    %c0_37 = arith.constant 0 : index
    %c0_38 = arith.constant 0 : index
    %44 = vector.load %arg5[%c0_37, %c0_38] : memref<256x128xbf16, #tpu.memory_space<vmem>>, vector<256x128xbf16>
    %cst_39 = arith.constant dense<0.000000e+00> : vector<16x128xf32>
    %45 = tpu.matmul %43, %44, %cst_39 {dimension_numbers = #tpu.dot_dimension_numbers<[1], [0], [0], [1], [0, 0, 1, 1], [], []>} : vector<16x256xbf16>, vector<256x128xbf16>, vector<16x128xf32> -> vector<16x128xf32>
    %46 = arith.truncf %45 : vector<16x128xf32> to vector<16x128xbf16>
    %c0_40 = arith.constant 0 : index
    %c0_41 = arith.constant 0 : index
    %47 = vector.load %arg17[%c0_40, %c0_41] : memref<16x128xbf16, #tpu.memory_space<vmem>>, vector<16x128xbf16>
    tpu.vector_store %arg17[%c0_40, %c0_41], %46 {strides = array<i32>} : memref<16x128xbf16, #tpu.memory_space<vmem>>, vector<16x128xbf16>,
    %cst_42 = arith.constant 0.000000e+00 : f32
    %48 = vector.broadcast %cst_42 : f32 to vector<10x256xf32>
    %c0_43 = arith.constant 0 : index
    %c0_44 = arith.constant 0 : index
    %49 = vector.load %arg17[%c0_43, %c0_44] : memref<16x128xbf16, #tpu.memory_space<vmem>>, vector<10x128xbf16>
    %c0_45 = arith.constant 0 : index
    %c0_46 = arith.constant 0 : index
    %c0_47 = arith.constant 0 : index
    %50 = vector.load %arg6[%c0_45, %c0_46, %c0_47] : memref<5x128x256xbf16, #tpu.memory_space<vmem>>, vector<1x128x256xbf16>
    %51 = vector.shape_cast %50 : vector<1x128x256xbf16> to vector<128x256xbf16>
    %cst_48 = arith.constant dense<0.000000e+00> : vector<10x256xf32>
    %52 = tpu.matmul %49, %51, %cst_48 {dimension_numbers = #tpu.dot_dimension_numbers<[1], [0], [0], [1], [0, 0, 1, 1], [], []>} : vector<10x128xbf16>, vector<128x256xbf16>, vector<10x256xf32> -> vector<10x256xf32>
    %53 = arith.addf %48, %52 : vector<10x256xf32>
    %c1_49 = arith.constant 1 : index
    %c0_50 = arith.constant 0 : index
    %54 = vector.load %arg17[%c1_49, %c0_50] : memref<16x128xbf16, #tpu.memory_space<vmem>>, vector<10x128xbf16>
    %c1_51 = arith.constant 1 : index
    %c0_52 = arith.constant 0 : index
    %c0_53 = arith.constant 0 : index
    %55 = vector.load %arg6[%c1_51, %c0_52, %c0_53] : memref<5x128x256xbf16, #tpu.memory_space<vmem>>, vector<1x128x256xbf16>
    %56 = vector.shape_cast %55 : vector<1x128x256xbf16> to vector<128x256xbf16>
    %cst_54 = arith.constant dense<0.000000e+00> : vector<10x256xf32>
    %57 = tpu.matmul %54, %56, %cst_54 {dimension_numbers = #tpu.dot_dimension_numbers<[1], [0], [0], [1], [0, 0, 1, 1], [], []>} : vector<10x128xbf16>, vector<128x256xbf16>, vector<10x256xf32> -> vector<10x256xf32>
    %58 = arith.addf %53, %57 : vector<10x256xf32>
    %c2_55 = arith.constant 2 : index
    %c0_56 = arith.constant 0 : index
    %59 = vector.load %arg17[%c2_55, %c0_56] : memref<16x128xbf16, #tpu.memory_space<vmem>>, vector<10x128xbf16>
    %c2_57 = arith.constant 2 : index
    %c0_58 = arith.constant 0 : index
    %c0_59 = arith.constant 0 : index
    %60 = vector.load %arg6[%c2_57, %c0_58, %c0_59] : memref<5x128x256xbf16, #tpu.memory_space<vmem>>, vector<1x128x256xbf16>
    %61 = vector.shape_cast %60 : vector<1x128x256xbf16> to vector<128x256xbf16>
    %cst_60 = arith.constant dense<0.000000e+00> : vector<10x256xf32>
    %62 = tpu.matmul %59, %61, %cst_60 {dimension_numbers = #tpu.dot_dimension_numbers<[1], [0], [0], [1], [0, 0, 1, 1], [], []>} : vector<10x128xbf16>, vector<128x256xbf16>, vector<10x256xf32> -> vector<10x256xf32>
    %63 = arith.addf %58, %62 : vector<10x256xf32>
    %c3_61 = arith.constant 3 : index
    %c0_62 = arith.constant 0 : index
    %64 = vector.load %arg17[%c3_61, %c0_62] : memref<16x128xbf16, #tpu.memory_space<vmem>>, vector<10x128xbf16>
    %c3_63 = arith.constant 3 : index
    %c0_64 = arith.constant 0 : index
    %c0_65 = arith.constant 0 : index
    %65 = vector.load %arg6[%c3_63, %c0_64, %c0_65] : memref<5x128x256xbf16, #tpu.memory_space<vmem>>, vector<1x128x256xbf16>
    %66 = vector.shape_cast %65 : vector<1x128x256xbf16> to vector<128x256xbf16>
    %cst_66 = arith.constant dense<0.000000e+00> : vector<10x256xf32>
    %67 = tpu.matmul %64, %66, %cst_66 {dimension_numbers = #tpu.dot_dimension_numbers<[1], [0], [0], [1], [0, 0, 1, 1], [], []>} : vector<10x128xbf16>, vector<128x256xbf16>, vector<10x256xf32> -> vector<10x256xf32>
    %68 = arith.addf %63, %67 : vector<10x256xf32>
    %c4_67 = arith.constant 4 : index
    %c0_68 = arith.constant 0 : index
    %69 = vector.load %arg17[%c4_67, %c0_68] : memref<16x128xbf16, #tpu.memory_space<vmem>>, vector<10x128xbf16>
    %c4_69 = arith.constant 4 : index
    %c0_70 = arith.constant 0 : index
    %c0_71 = arith.constant 0 : index
    %70 = vector.load %arg6[%c4_69, %c0_70, %c0_71] : memref<5x128x256xbf16, #tpu.memory_space<vmem>>, vector<1x128x256xbf16>
    %71 = vector.shape_cast %70 : vector<1x128x256xbf16> to vector<128x256xbf16>
    %cst_72 = arith.constant dense<0.000000e+00> : vector<10x256xf32>
    %72 = tpu.matmul %69, %71, %cst_72 {dimension_numbers = #tpu.dot_dimension_numbers<[1], [0], [0], [1], [0, 0, 1, 1], [], []>} : vector<10x128xbf16>, vector<128x256xbf16>, vector<10x256xf32> -> vector<10x256xf32>
    %73 = arith.addf %68, %72 : vector<10x256xf32>
    %c0_73 = arith.constant 0 : index
    %c0_74 = arith.constant 0 : index
    %74 = vector.load %arg7[%c0_73, %c0_74] : memref<1x256xf32, #tpu.memory_space<vmem>>, vector<1x256xf32>
    %75 = vector.broadcast %74 : vector<1x256xf32> to vector<10x256xf32>
    %76 = arith.addf %73, %75 : vector<10x256xf32>
    %cst_75 = arith.constant 0.000000e+00 : f32
    %77 = vector.broadcast %cst_75 : f32 to vector<10x256xf32>
    %78 = arith.subf %77, %76 : vector<10x256xf32>
    %79 = math.exp %78 : vector<10x256xf32>
    %cst_76 = arith.constant 1.000000e+00 : f32
    %80 = vector.broadcast %cst_76 : f32 to vector<10x256xf32>
    %81 = arith.addf %80, %79 : vector<10x256xf32>
    %82 = tpu.reciprocal %81 {approx = true} : vector<10x256xf32> -> vector<10x256xf32>
    %83 = arith.truncf %82 : vector<10x256xf32> to vector<10x256xbf16>
    %c0_77 = arith.constant 0 : index
    %c0_78 = arith.constant 0 : index
    %84 = vector.load %arg8[%c0_77, %c0_78] : memref<16x10xbf16, #tpu.memory_space<vmem>>, vector<16x10xbf16>
    %cst_79 = arith.constant dense<0.000000e+00> : vector<16x256xf32>
    %85 = tpu.matmul %84, %83, %cst_79 {dimension_numbers = #tpu.dot_dimension_numbers<[1], [0], [0], [1], [0, 0, 1, 1], [], []>} : vector<16x10xbf16>, vector<10x256xbf16>, vector<16x256xf32> -> vector<16x256xf32>
    %86 = arith.truncf %85 : vector<16x256xf32> to vector<16x256xbf16>
    %c0_80 = arith.constant 0 : index
    %c0_81 = arith.constant 0 : index
    %87 = vector.load %arg9[%c0_80, %c0_81] : memref<256x128xbf16, #tpu.memory_space<vmem>>, vector<256x128xbf16>
    %cst_82 = arith.constant dense<0.000000e+00> : vector<16x128xf32>
    %88 = tpu.matmul %86, %87, %cst_82 {dimension_numbers = #tpu.dot_dimension_numbers<[1], [0], [0], [1], [0, 0, 1, 1], [], []>} : vector<16x256xbf16>, vector<256x128xbf16>, vector<16x128xf32> -> vector<16x128xf32>
    %89 = arith.truncf %88 : vector<16x128xf32> to vector<16x128xbf16>
    %c0_83 = arith.constant 0 : index
    %c0_84 = arith.constant 0 : index
    %90 = vector.load %arg18[%c0_83, %c0_84] : memref<16x128xbf16, #tpu.memory_space<vmem>>, vector<16x128xbf16>
    tpu.vector_store %arg18[%c0_83, %c0_84], %89 {strides = array<i32>} : memref<16x128xbf16, #tpu.memory_space<vmem>>, vector<16x128xbf16>,
    %c0_85 = arith.constant 0 : index
    %c0_86 = arith.constant 0 : index
    %91 = vector.load %arg11[%c0_85, %c0_86] : memref<1x128xf32, #tpu.memory_space<vmem>>, vector<1x128xf32>
    %c0_87 = arith.constant 0 : index
    %c0_88 = arith.constant 0 : index
    %92 = vector.load %arg18[%c0_87, %c0_88] : memref<16x128xbf16, #tpu.memory_space<vmem>>, vector<1x128xbf16>
    %c0_89 = arith.constant 0 : index
    %c0_90 = arith.constant 0 : index
    %c0_91 = arith.constant 0 : index
    %93 = vector.load %arg10[%c0_89, %c0_90, %c0_91] : memref<5x128x128xbf16, #tpu.memory_space<vmem>>, vector<1x128x128xbf16>
    %94 = vector.shape_cast %93 : vector<1x128x128xbf16> to vector<128x128xbf16>
    %cst_92 = arith.constant dense<0.000000e+00> : vector<1x128xf32>
    %95 = tpu.matmul %92, %94, %cst_92 {dimension_numbers = #tpu.dot_dimension_numbers<[1], [0], [0], [1], [0, 0, 1, 1], [], []>} : vector<1x128xbf16>, vector<128x128xbf16>, vector<1x128xf32> -> vector<1x128xf32>
    %96 = arith.addf %91, %95 : vector<1x128xf32>
    %c1_93 = arith.constant 1 : index
    %c0_94 = arith.constant 0 : index
    %97 = vector.load %arg18[%c1_93, %c0_94] : memref<16x128xbf16, #tpu.memory_space<vmem>>, vector<1x128xbf16>
    %c1_95 = arith.constant 1 : index
    %c0_96 = arith.constant 0 : index
    %c0_97 = arith.constant 0 : index
    %98 = vector.load %arg10[%c1_95, %c0_96, %c0_97] : memref<5x128x128xbf16, #tpu.memory_space<vmem>>, vector<1x128x128xbf16>
    %99 = vector.shape_cast %98 : vector<1x128x128xbf16> to vector<128x128xbf16>
    %cst_98 = arith.constant dense<0.000000e+00> : vector<1x128xf32>
    %100 = tpu.matmul %97, %99, %cst_98 {dimension_numbers = #tpu.dot_dimension_numbers<[1], [0], [0], [1], [0, 0, 1, 1], [], []>} : vector<1x128xbf16>, vector<128x128xbf16>, vector<1x128xf32> -> vector<1x128xf32>
    %101 = arith.addf %96, %100 : vector<1x128xf32>
    %c2_99 = arith.constant 2 : index
    %c0_100 = arith.constant 0 : index
    %102 = vector.load %arg18[%c2_99, %c0_100] : memref<16x128xbf16, #tpu.memory_space<vmem>>, vector<1x128xbf16>
    %c2_101 = arith.constant 2 : index
    %c0_102 = arith.constant 0 : index
    %c0_103 = arith.constant 0 : index
    %103 = vector.load %arg10[%c2_101, %c0_102, %c0_103] : memref<5x128x128xbf16, #tpu.memory_space<vmem>>, vector<1x128x128xbf16>
    %104 = vector.shape_cast %103 : vector<1x128x128xbf16> to vector<128x128xbf16>
    %cst_104 = arith.constant dense<0.000000e+00> : vector<1x128xf32>
    %105 = tpu.matmul %102, %104, %cst_104 {dimension_numbers = #tpu.dot_dimension_numbers<[1], [0], [0], [1], [0, 0, 1, 1], [], []>} : vector<1x128xbf16>, vector<128x128xbf16>, vector<1x128xf32> -> vector<1x128xf32>
    %106 = arith.addf %101, %105 : vector<1x128xf32>
    %c3_105 = arith.constant 3 : index
    %c0_106 = arith.constant 0 : index
    %107 = vector.load %arg18[%c3_105, %c0_106] : memref<16x128xbf16, #tpu.memory_space<vmem>>, vector<1x128xbf16>
    %c3_107 = arith.constant 3 : index
    %c0_108 = arith.constant 0 : index
    %c0_109 = arith.constant 0 : index
    %108 = vector.load %arg10[%c3_107, %c0_108, %c0_109] : memref<5x128x128xbf16, #tpu.memory_space<vmem>>, vector<1x128x128xbf16>
    %109 = vector.shape_cast %108 : vector<1x128x128xbf16> to vector<128x128xbf16>
    %cst_110 = arith.constant dense<0.000000e+00> : vector<1x128xf32>
    %110 = tpu.matmul %107, %109, %cst_110 {dimension_numbers = #tpu.dot_dimension_numbers<[1], [0], [0], [1], [0, 0, 1, 1], [], []>} : vector<1x128xbf16>, vector<128x128xbf16>, vector<1x128xf32> -> vector<1x128xf32>
    %111 = arith.addf %106, %110 : vector<1x128xf32>
    %c4_111 = arith.constant 4 : index
    %c0_112 = arith.constant 0 : index
    %112 = vector.load %arg18[%c4_111, %c0_112] : memref<16x128xbf16, #tpu.memory_space<vmem>>, vector<1x128xbf16>
    %c4_113 = arith.constant 4 : index
    %c0_114 = arith.constant 0 : index
    %c0_115 = arith.constant 0 : index
    %113 = vector.load %arg10[%c4_113, %c0_114, %c0_115] : memref<5x128x128xbf16, #tpu.memory_space<vmem>>, vector<1x128x128xbf16>
    %114 = vector.shape_cast %113 : vector<1x128x128xbf16> to vector<128x128xbf16>
    %cst_116 = arith.constant dense<0.000000e+00> : vector<1x128xf32>
    %115 = tpu.matmul %112, %114, %cst_116 {dimension_numbers = #tpu.dot_dimension_numbers<[1], [0], [0], [1], [0, 0, 1, 1], [], []>} : vector<1x128xbf16>, vector<128x128xbf16>, vector<1x128xf32> -> vector<1x128xf32>
    %116 = arith.addf %111, %115 : vector<1x128xf32>
    %cst_117 = arith.constant 0.000000e+00 : f32
    %117 = vector.broadcast %cst_117 : f32 to vector<1x128xf32>
    %118 = arith.subf %117, %116 : vector<1x128xf32>
    %119 = math.exp %118 : vector<1x128xf32>
    %cst_118 = arith.constant 1.000000e+00 : f32
    %120 = vector.broadcast %cst_118 : f32 to vector<1x128xf32>
    %121 = arith.addf %120, %119 : vector<1x128xf32>
    %122 = tpu.reciprocal %121 {approx = true} : vector<1x128xf32> -> vector<1x128xf32>
    %123 = arith.truncf %122 : vector<1x128xf32> to vector<1x128xbf16>
    %c0_119 = arith.constant 0 : index
    %c0_120 = arith.constant 0 : index
    %124 = vector.load %arg12[%c0_119, %c0_120] : memref<128x128xbf16, #tpu.memory_space<vmem>>, vector<128x128xbf16>
    %cst_121 = arith.constant dense<0.000000e+00> : vector<1x128xf32>
    %125 = tpu.matmul %123, %124, %cst_121 {dimension_numbers = #tpu.dot_dimension_numbers<[1], [0], [0], [1], [0, 0, 1, 1], [], []>} : vector<1x128xbf16>, vector<128x128xbf16>, vector<1x128xf32> -> vector<1x128xf32>
    %c0_122 = arith.constant 0 : index
    %c0_123 = arith.constant 0 : index
    %126 = vector.load %arg13[%c0_122, %c0_123] : memref<1x128xf32, #tpu.memory_space<vmem>>, vector<1x128xf32>
    %127 = arith.addf %125, %126 : vector<1x128xf32>
    %cst_124 = arith.constant 0.000000e+00 : f32
    %128 = vector.broadcast %cst_124 : f32 to vector<1x128xf32>
    %129 = arith.subf %128, %127 : vector<1x128xf32>
    %130 = math.exp %129 : vector<1x128xf32>
    %cst_125 = arith.constant 1.000000e+00 : f32
    %131 = vector.broadcast %cst_125 : f32 to vector<1x128xf32>
    %132 = arith.addf %131, %130 : vector<1x128xf32>
    %133 = tpu.reciprocal %132 {approx = true} : vector<1x128xf32> -> vector<1x128xf32>
    %134 = arith.truncf %133 : vector<1x128xf32> to vector<1x128xbf16>
    %c0_126 = arith.constant 0 : index
    %c0_127 = arith.constant 0 : index
    %135 = vector.load %arg14[%c0_126, %c0_127] : memref<128x128xbf16, #tpu.memory_space<vmem>>, vector<128x128xbf16>
    %cst_128 = arith.constant dense<0.000000e+00> : vector<1x128xf32>
    %136 = tpu.matmul %134, %135, %cst_128 {dimension_numbers = #tpu.dot_dimension_numbers<[1], [0], [0], [1], [0, 0, 1, 1], [], []>} : vector<1x128xbf16>, vector<128x128xbf16>, vector<1x128xf32> -> vector<1x128xf32>
    %c0_129 = arith.constant 0 : index
    %c0_130 = arith.constant 0 : index
    %137 = vector.load %arg15[%c0_129, %c0_130] : memref<1x128xf32, #tpu.memory_space<vmem>>, vector<1x128xf32>
    %138 = arith.addf %136, %137 : vector<1x128xf32>
    %c0_131 = arith.constant 0 : index
    %c0_132 = arith.constant 0 : index
    %c0_133 = arith.constant 0 : index
    %139 = vector.load %arg16[%c0_131, %c0_132, %c0_133] : memref<1x1x128xf32, #tpu.memory_space<vmem>>, vector<1x1x128xf32>
    %140 = vector.shape_cast %139 : vector<1x1x128xf32> to vector<1x128xf32>
    %141 = vector.shape_cast %138 : vector<1x128xf32> to vector<1x1x128xf32>
    tpu.vector_store %arg16[%c0_131, %c0_132, %c0_133], %141 {strides = array<i32>} : memref<1x1x128xf32, #tpu.memory_space<vmem>>, vector<1x1x128xf32>,
    return
  }
  func.func @transform_0(%arg0: i32) -> (i32, i32, i32) {
    %c0_i32 = arith.constant 0 : i32
    %c0_i32_0 = arith.constant 0 : i32
    %c0_i32_1 = arith.constant 0 : i32
    return %arg0, %c0_i32, %c0_i32_0 : i32, i32, i32
  }
  func.func @transform_1(%arg0: i32) -> (i32, i32, i32) {
    %c0_i32 = arith.constant 0 : i32
    %c0_i32_0 = arith.constant 0 : i32
    %c0_i32_1 = arith.constant 0 : i32
    %c0_i32_2 = arith.constant 0 : i32
    return %c0_i32, %c0_i32_0, %c0_i32_1 : i32, i32, i32
  }
  func.func @transform_2(%arg0: i32) -> (i32, i32) {
    %c0_i32 = arith.constant 0 : i32
    %c0_i32_0 = arith.constant 0 : i32
    %c0_i32_1 = arith.constant 0 : i32
    return %c0_i32, %c0_i32_0 : i32, i32
  }
  func.func @transform_3(%arg0: i32) -> (i32, i32) {
    %c0_i32 = arith.constant 0 : i32
    %c0_i32_0 = arith.constant 0 : i32
    %c0_i32_1 = arith.constant 0 : i32
    return %c0_i32, %c0_i32_0 : i32, i32
  }
  func.func @transform_4(%arg0: i32) -> (i32, i32) {
    %c0_i32 = arith.constant 0 : i32
    %c0_i32_0 = arith.constant 0 : i32
    %c0_i32_1 = arith.constant 0 : i32
    return %c0_i32, %c0_i32_0 : i32, i32
  }
  func.func @transform_5(%arg0: i32) -> (i32, i32, i32) {
    %c0_i32 = arith.constant 0 : i32
    %c0_i32_0 = arith.constant 0 : i32
    %c0_i32_1 = arith.constant 0 : i32
    %c0_i32_2 = arith.constant 0 : i32
    return %c0_i32, %c0_i32_0, %c0_i32_1 : i32, i32, i32
  }
  func.func @transform_6(%arg0: i32) -> (i32, i32) {
    %c0_i32 = arith.constant 0 : i32
    %c0_i32_0 = arith.constant 0 : i32
    %c0_i32_1 = arith.constant 0 : i32
    return %c0_i32, %c0_i32_0 : i32, i32
  }
  func.func @transform_7(%arg0: i32) -> (i32, i32) {
    %c0_i32 = arith.constant 0 : i32
    %c0_i32_0 = arith.constant 0 : i32
    %c0_i32_1 = arith.constant 0 : i32
    return %c0_i32, %c0_i32_0 : i32, i32
  }
  func.func @transform_8(%arg0: i32) -> (i32, i32) {
    %c0_i32 = arith.constant 0 : i32
    %c0_i32_0 = arith.constant 0 : i32
    %c0_i32_1 = arith.constant 0 : i32
    return %c0_i32, %c0_i32_0 : i32, i32
  }
  func.func @transform_9(%arg0: i32) -> (i32, i32, i32) {
    %c0_i32 = arith.constant 0 : i32
    %c0_i32_0 = arith.constant 0 : i32
    %c0_i32_1 = arith.constant 0 : i32
    %c0_i32_2 = arith.constant 0 : i32
    return %c0_i32, %c0_i32_0, %c0_i32_1 : i32, i32, i32
  }
  func.func @transform_10(%arg0: i32) -> (i32, i32) {
    %c0_i32 = arith.constant 0 : i32
    %c0_i32_0 = arith.constant 0 : i32
    %c0_i32_1 = arith.constant 0 : i32
    return %c0_i32, %c0_i32_0 : i32, i32
  }
  func.func @transform_11(%arg0: i32) -> (i32, i32) {
    %c0_i32 = arith.constant 0 : i32
    %c0_i32_0 = arith.constant 0 : i32
    %c0_i32_1 = arith.constant 0 : i32
    return %c0_i32, %c0_i32_0 : i32, i32
  }
  func.func @transform_12(%arg0: i32) -> (i32, i32) {
    %c0_i32 = arith.constant 0 : i32
    %c0_i32_0 = arith.constant 0 : i32
    %c0_i32_1 = arith.constant 0 : i32
    return %c0_i32, %c0_i32_0 : i32, i32
  }
  func.func @transform_13(%arg0: i32) -> (i32, i32) {
    %c0_i32 = arith.constant 0 : i32
    %c0_i32_0 = arith.constant 0 : i32
    %c0_i32_1 = arith.constant 0 : i32
    return %c0_i32, %c0_i32_0 : i32, i32
  }
  func.func @transform_14(%arg0: i32) -> (i32, i32) {
    %c0_i32 = arith.constant 0 : i32
    %c0_i32_0 = arith.constant 0 : i32
    %c0_i32_1 = arith.constant 0 : i32
    return %c0_i32, %c0_i32_0 : i32, i32
  }
  func.func @transform_15(%arg0: i32) -> (i32, i32, i32) {
    %c0_i32 = arith.constant 0 : i32
    %c0_i32_0 = arith.constant 0 : i32
    %c0_i32_1 = arith.constant 0 : i32
    return %arg0, %c0_i32, %c0_i32_0 : i32, i32, i32
  }
}

</mosaic_0001>

<llo_original>
// kernel: tpu_custom_call.1
$region0: #{tpu_custom_call.1}
  #allocation0 [shape = 'u32[]', space=smem, size = 0x4, offset = 0x4, fixed_abs, tag = 'smem constant byte address 0x4 - core index']
  #allocation1 [shape = 'u32[144,128]{1,0:T(1,128)}', space=vmem, size = 0x12000, scoped, tag = 'internal scratch']
  #allocation2 [shape = 'bf16[16,128]{1,0:T(8,128)(2,1)}', space=vmem, size = 0x1000, scoped, tag = 'scratch operand']
  #allocation3 [shape = 'bf16[16,128]{1,0:T(8,128)(2,1)}', space=vmem, size = 0x1000, scoped, tag = 'scratch operand']
  %s0 = inlined_call_operand.hbm [shape: bf16[2,32,128], index: 0, kind: input, shape index: {}]
  %s1 = inlined_call_operand.hbm [shape: bf16[5,128,256], index: 1, kind: input, shape index: {}]
  %s2 = inlined_call_operand.vmem [shape: f32[1,256], index: 2, kind: input, shape index: {}]
  %s3 = inlined_call_operand.hbm [shape: bf16[16,28], index: 3, kind: input, shape index: {}]
  %s4 = inlined_call_operand.hbm [shape: bf16[256,128], index: 4, kind: input, shape index: {}]
  %s5 = inlined_call_operand.hbm [shape: bf16[5,128,256], index: 5, kind: input, shape index: {}]
  %s6 = inlined_call_operand.vmem [shape: f32[1,256], index: 6, kind: input, shape index: {}]
  %s7 = inlined_call_operand.vmem [shape: bf16[16,10], index: 7, kind: input, shape index: {}]
  %s8 = inlined_call_operand.hbm [shape: bf16[256,128], index: 8, kind: input, shape index: {}]
  %s9 = inlined_call_operand.hbm [shape: bf16[5,128,128], index: 9, kind: input, shape index: {}]
  %s10 = inlined_call_operand.vmem [shape: f32[1,128], index: 10, kind: input, shape index: {}]
  %s11 = inlined_call_operand.hbm [shape: bf16[128,128], index: 11, kind: input, shape index: {}]
  %s12 = inlined_call_operand.vmem [shape: f32[1,128], index: 12, kind: input, shape index: {}]
  %s13 = inlined_call_operand.hbm [shape: bf16[128,128], index: 13, kind: input, shape index: {}]
  %s14 = inlined_call_operand.vmem [shape: f32[1,128], index: 14, kind: input, shape index: {}]
  %s15 = inlined_call_operand.hbm [shape: f32[2,1,128], index: 15, kind: output, shape index: {}]
  %s16 = sld [smem:[#allocation0]]
  $region129: #{tpu_custom_call.1} parent=0
    _
  %s18 = ssub.s32 1, %s16
  %s19 = scalar_select 0, %s18, %s16
  $region1: #{tpu_custom_call.1} parent=0
    #allocation4 [shape = 'u8[16384]{0}', space=vmem, size = 0x4000, scoped, tag = 'input window, operand 0']
    #allocation5 [shape = 's32[2]{0}', space=sflag, size = 0x8, scoped, tag = 'scoped memory for tpu_custom_call.1']
    #allocation6 [shape = 's32[2]{0}', space=sflag, size = 0x8, scoped, tag = 'scoped memory for tpu_custom_call.1']
    #allocation7 [shape = 'u8[327680]{0}', space=vmem, size = 0x50000, scoped, tag = 'input window, operand 1, single buffered']
    #allocation8 [shape = 's32[1]{0}', space=sflag, size = 0x4, scoped, tag = 'scoped memory for tpu_custom_call.1']
    #allocation9 [shape = 'u8[4096]{0}', space=vmem, size = 0x1000, scoped, tag = 'input window, operand 3, single buffered']
    #allocation10 [shape = 'u8[65536]{0}', space=vmem, size = 0x10000, scoped, tag = 'input window, operand 4, single buffered']
    #allocation11 [shape = 's32[1]{0}', space=sflag, size = 0x4, scoped, tag = 'scoped memory for tpu_custom_call.1']
    #allocation12 [shape = 'u8[327680]{0}', space=vmem, size = 0x50000, scoped, tag = 'input window, operand 5, single buffered']
    #allocation13 [shape = 'u8[65536]{0}', space=vmem, size = 0x10000, scoped, tag = 'input window, operand 8, single buffered']
    #allocation14 [shape = 's32[1]{0}', space=sflag, size = 0x4, scoped, tag = 'scoped memory for tpu_custom_call.1']
    #allocation15 [shape = 'u8[163840]{0}', space=vmem, size = 0x28000, scoped, tag = 'input window, operand 9, single buffered']
    #allocation16 [shape = 'u8[32768]{0}', space=vmem, size = 0x8000, scoped, tag = 'input window, operand 11, single buffered']
    #allocation17 [shape = 's32[1]{0}', space=sflag, size = 0x4, scoped, tag = 'scoped memory for tpu_custom_call.1']
    #allocation18 [shape = 'u8[32768]{0}', space=vmem, size = 0x8000, scoped, tag = 'input window, operand 13, single buffered']
    #allocation19 [shape = 'u8[1024]{0}', space=vmem, size = 0x400, scoped, tag = 'output window, operand 0']
    %20 = vsyncpa [#allocation5], 0
    %s21 = scalar_lea.sflag [#allocation5], 1
    %22 = vsyncpa %s21, 0
    %23 = vsyncpa [#allocation8], 0
    %24 = vsyncpa [#allocation11], 0
    %25 = vsyncpa [#allocation14], 0
    %26 = vsyncpa [#allocation17], 0
    %27 = vsyncpa [#allocation6], 0
    %s28 = scalar_lea.sflag [#allocation6], 1
    %29 = vsyncpa %s28, 0
    loop: start=0, step=1, limit=4
    $region2: #{tpu_custom_call.1} parent=1 // loop_pre_header
      _
    $region3: #{tpu_custom_call.1} parent=1 // loop_header
      %s31 = sphi 0, %s35
      %p32 = scmp.ge.s32.totalorder %s31, 4
      %s41 = sphi 0, %s43
      %s44 = sphi 0, %s41
      %s45 = sphi 0, %s44
      %s61 = sphi 0, %s45
      %s65 = sphi 0, %s65
      %s67 = sphi 0, %s65
      %s68 = sphi 0, %s67
      %s82 = sphi 0, %s68
      %s86 = sphi 0, %s86
      %s88 = sphi 0, %s86
      %s89 = sphi 0, %s88
      %s103 = sphi 0, %s89
      %s107 = sphi 0, %s107
      %s109 = sphi 0, %s107
      %s110 = sphi 0, %s109
      %s124 = sphi 0, %s110
      %s128 = sphi 0, %s128
      %s130 = sphi 0, %s128
      %s131 = sphi 0, %s130
      %s145 = sphi 0, %s131
      %s149 = sphi 0, %s149
      %s151 = sphi 0, %s149
      %s152 = sphi 0, %s151
      %s166 = sphi 0, %s152
      %s170 = sphi 0, %s170
      %s172 = sphi 0, %s170
      %s173 = sphi 0, %s172
      %s187 = sphi 0, %s173
      %s191 = sphi 0, %s191
      %s193 = sphi 0, %s191
      %s194 = sphi 0, %s193
      %s208 = sphi 0, %s194
      %s212 = sphi 0, %s212
      %s214 = sphi 0, %s212
      %s215 = sphi 0, %s214
      %s229 = sphi 0, %s215
      %s233 = sphi 0, %s233
      %s235 = sphi 0, %s233
      %s236 = sphi 0, %s235
      %s250 = sphi 0, %s236
      %s254 = sphi 0, %s254
      %s256 = sphi 0, %s254
      %s257 = sphi 0, %s256
      %s271 = sphi 0, %s257
      %s275 = sphi 0, %s275
      %s277 = sphi 0, %s275
      %s278 = sphi 0, %s277
      %s292 = sphi 0, %s278
      %s296 = sphi 0, %s296
      %s298 = sphi 0, %s296
      %s299 = sphi 0, %s298
      %s313 = sphi 0, %s299
      %s317 = sphi 0, %s317
      %s319 = sphi 0, %s317
      %s320 = sphi 0, %s319
      %s334 = sphi 0, %s320
      %s338 = sphi 0, %s338
      %s340 = sphi 0, %s338
      %s341 = sphi 0, %s340
      %s355 = sphi 0, %s341
      %s361 = sphi 0, %s363
      %s364 = sphi 0, %s361
      %s365 = sphi 0, %s364
      %s381 = sphi 0, %s365
    $region4: #{tpu_custom_call.1} parent=1 // loop_header_branch
      %34 = sbr.rel (%p32) target = $region8
    $region5: #{tpu_custom_call.1} parent=1 // loop_body
      %s36 = ssub.s32 %s31, 1
      %s37 = ssub.s32 %s31, 2
      %s38 = sadd.s32 %s31, 1
      %s39 = ssub.s32 %s31, %s38
      %p40 = scmp.eq.s32.totalorder %s39, 0
      %s42 = sadd.s32 %s41, 1
      %s43 = scalar_select %p40, %s41, %s42
      %p46 = pneg %p40
      %p47 = scmp.eq.s32.totalorder %s31, 1
      %p48 = por %p46, %p47
      %p49 = scmp.ne.s32.totalorder %s41, %s44
      %p50 = scmp.eq.s32.totalorder %s31, 0
      %p51 = por %p49, %p50
      %p52 = scmp.ne.s32.totalorder %s41, %s44
      %p53 = scmp.eq.s32.totalorder %s36, 1
      %p54 = por %p52, %p53
      %p55 = scmp.ne.s32.totalorder %s44, %s45
      %p56 = scmp.eq.s32.totalorder %s36, 0
      %p57 = por %p55, %p56
      %p58 = scmp.ne.s32.totalorder %s44, %s45
      %p59 = scmp.eq.s32.totalorder %s37, 1
      %p60 = por %p58, %p59
      %p62 = scmp.ne.s32.totalorder %s45, %s61
      %p63 = scmp.eq.s32.totalorder %s37, 0
      %p64 = por %p62, %p63
      %s66 = sadd.s32 %s65, 1
      %p69 = scmp.eq.s32.totalorder %s31, 1
      %p70 = scmp.ne.s32.totalorder %s65, %s67
      %p71 = scmp.eq.s32.totalorder %s31, 0
      %p72 = por %p70, %p71
      %p73 = scmp.ne.s32.totalorder %s65, %s67
      %p74 = scmp.eq.s32.totalorder %s36, 1
      %p75 = por %p73, %p74
      %p76 = scmp.ne.s32.totalorder %s67, %s68
      %p77 = scmp.eq.s32.totalorder %s36, 0
      %p78 = por %p76, %p77
      %p79 = scmp.ne.s32.totalorder %s67, %s68
      %p80 = scmp.eq.s32.totalorder %s37, 1
      %p81 = por %p79, %p80
      %p83 = scmp.ne.s32.totalorder %s68, %s82
      %p84 = scmp.eq.s32.totalorder %s37, 0
      %p85 = por %p83, %p84
      %s87 = sadd.s32 %s86, 1
      %p90 = scmp.eq.s32.totalorder %s31, 1
      %p91 = scmp.ne.s32.totalorder %s86, %s88
      %p92 = scmp.eq.s32.totalorder %s31, 0
      %p93 = por %p91, %p92
      %p94 = scmp.ne.s32.totalorder %s86, %s88
      %p95 = scmp.eq.s32.totalorder %s36, 1
      %p96 = por %p94, %p95
      %p97 = scmp.ne.s32.totalorder %s88, %s89
      %p98 = scmp.eq.s32.totalorder %s36, 0
      %p99 = por %p97, %p98
      %p100 = scmp.ne.s32.totalorder %s88, %s89
      %p101 = scmp.eq.s32.totalorder %s37, 1
      %p102 = por %p100, %p101
      %p104 = scmp.ne.s32.totalorder %s89, %s103
      %p105 = scmp.eq.s32.totalorder %s37, 0
      %p106 = por %p104, %p105
      %s108 = sadd.s32 %s107, 1
      %p111 = scmp.eq.s32.totalorder %s31, 1
      %p112 = scmp.ne.s32.totalorder %s107, %s109
      %p113 = scmp.eq.s32.totalorder %s31, 0
      %p114 = por %p112, %p113
      %p115 = scmp.ne.s32.totalorder %s107, %s109
      %p116 = scmp.eq.s32.totalorder %s36, 1
      %p117 = por %p115, %p116
      %p118 = scmp.ne.s32.totalorder %s109, %s110
      %p119 = scmp.eq.s32.totalorder %s36, 0
      %p120 = por %p118, %p119
      %p121 = scmp.ne.s32.totalorder %s109, %s110
      %p122 = scmp.eq.s32.totalorder %s37, 1
      %p123 = por %p121, %p122
      %p125 = scmp.ne.s32.totalorder %s110, %s124
      %p126 = scmp.eq.s32.totalorder %s37, 0
      %p127 = por %p125, %p126
      %s129 = sadd.s32 %s128, 1
      %p132 = scmp.eq.s32.totalorder %s31, 1
      %p133 = scmp.ne.s32.totalorder %s128, %s130
      %p134 = scmp.eq.s32.totalorder %s31, 0
      %p135 = por %p133, %p134
      %p136 = scmp.ne.s32.totalorder %s128, %s130
      %p137 = scmp.eq.s32.totalorder %s36, 1
      %p138 = por %p136, %p137
      %p139 = scmp.ne.s32.totalorder %s130, %s131
      %p140 = scmp.eq.s32.totalorder %s36, 0
      %p141 = por %p139, %p140
      %p142 = scmp.ne.s32.totalorder %s130, %s131
      %p143 = scmp.eq.s32.totalorder %s37, 1
      %p144 = por %p142, %p143
      %p146 = scmp.ne.s32.totalorder %s131, %s145
      %p147 = scmp.eq.s32.totalorder %s37, 0
      %p148 = por %p146, %p147
      %s150 = sadd.s32 %s149, 1
      %p153 = scmp.eq.s32.totalorder %s31, 1
      %p154 = scmp.ne.s32.totalorder %s149, %s151
      %p155 = scmp.eq.s32.totalorder %s31, 0
      %p156 = por %p154, %p155
      %p157 = scmp.ne.s32.totalorder %s149, %s151
      %p158 = scmp.eq.s32.totalorder %s36, 1
      %p159 = por %p157, %p158
      %p160 = scmp.ne.s32.totalorder %s151, %s152
      %p161 = scmp.eq.s32.totalorder %s36, 0
      %p162 = por %p160, %p161
      %p163 = scmp.ne.s32.totalorder %s151, %s152
      %p164 = scmp.eq.s32.totalorder %s37, 1
      %p165 = por %p163, %p164
      %p167 = scmp.ne.s32.totalorder %s152, %s166
      %p168 = scmp.eq.s32.totalorder %s37, 0
      %p169 = por %p167, %p168
      %s171 = sadd.s32 %s170, 1
      %p174 = scmp.eq.s32.totalorder %s31, 1
      %p175 = scmp.ne.s32.totalorder %s170, %s172
      %p176 = scmp.eq.s32.totalorder %s31, 0
      %p177 = por %p175, %p176
      %p178 = scmp.ne.s32.totalorder %s170, %s172
      %p179 = scmp.eq.s32.totalorder %s36, 1
      %p180 = por %p178, %p179
      %p181 = scmp.ne.s32.totalorder %s172, %s173
      %p182 = scmp.eq.s32.totalorder %s36, 0
      %p183 = por %p181, %p182
      %p184 = scmp.ne.s32.totalorder %s172, %s173
      %p185 = scmp.eq.s32.totalorder %s37, 1
      %p186 = por %p184, %p185
      %p188 = scmp.ne.s32.totalorder %s173, %s187
      %p189 = scmp.eq.s32.totalorder %s37, 0
      %p190 = por %p188, %p189
      %s192 = sadd.s32 %s191, 1
      %p195 = scmp.eq.s32.totalorder %s31, 1
      %p196 = scmp.ne.s32.totalorder %s191, %s193
      %p197 = scmp.eq.s32.totalorder %s31, 0
      %p198 = por %p196, %p197
      %p199 = scmp.ne.s32.totalorder %s191, %s193
      %p200 = scmp.eq.s32.totalorder %s36, 1
      %p201 = por %p199, %p200
      %p202 = scmp.ne.s32.totalorder %s193, %s194
      %p203 = scmp.eq.s32.totalorder %s36, 0
      %p204 = por %p202, %p203
      %p205 = scmp.ne.s32.totalorder %s193, %s194
      %p206 = scmp.eq.s32.totalorder %s37, 1
      %p207 = por %p205, %p206
      %p209 = scmp.ne.s32.totalorder %s194, %s208
      %p210 = scmp.eq.s32.totalorder %s37, 0
      %p211 = por %p209, %p210
      %s213 = sadd.s32 %s212, 1
      %p216 = scmp.eq.s32.totalorder %s31, 1
      %p217 = scmp.ne.s32.totalorder %s212, %s214
      %p218 = scmp.eq.s32.totalorder %s31, 0
      %p219 = por %p217, %p218
      %p220 = scmp.ne.s32.totalorder %s212, %s214
      %p221 = scmp.eq.s32.totalorder %s36, 1
      %p222 = por %p220, %p221
      %p223 = scmp.ne.s32.totalorder %s214, %s215
      %p224 = scmp.eq.s32.totalorder %s36, 0
      %p225 = por %p223, %p224
      %p226 = scmp.ne.s32.totalorder %s214, %s215
      %p227 = scmp.eq.s32.totalorder %s37, 1
      %p228 = por %p226, %p227
      %p230 = scmp.ne.s32.totalorder %s215, %s229
      %p231 = scmp.eq.s32.totalorder %s37, 0
      %p232 = por %p230, %p231
      %s234 = sadd.s32 %s233, 1
      %p237 = scmp.eq.s32.totalorder %s31, 1
      %p238 = scmp.ne.s32.totalorder %s233, %s235
      %p239 = scmp.eq.s32.totalorder %s31, 0
      %p240 = por %p238, %p239
      %p241 = scmp.ne.s32.totalorder %s233, %s235
      %p242 = scmp.eq.s32.totalorder %s36, 1
      %p243 = por %p241, %p242
      %p244 = scmp.ne.s32.totalorder %s235, %s236
      %p245 = scmp.eq.s32.totalorder %s36, 0
      %p246 = por %p244, %p245
      %p247 = scmp.ne.s32.totalorder %s235, %s236
      %p248 = scmp.eq.s32.totalorder %s37, 1
      %p249 = por %p247, %p248
      %p251 = scmp.ne.s32.totalorder %s236, %s250
      %p252 = scmp.eq.s32.totalorder %s37, 0
      %p253 = por %p251, %p252
      %s255 = sadd.s32 %s254, 1
      %p258 = scmp.eq.s32.totalorder %s31, 1
      %p259 = scmp.ne.s32.totalorder %s254, %s256
      %p260 = scmp.eq.s32.totalorder %s31, 0
      %p261 = por %p259, %p260
      %p262 = scmp.ne.s32.totalorder %s254, %s256
      %p263 = scmp.eq.s32.totalorder %s36, 1
      %p264 = por %p262, %p263
      %p265 = scmp.ne.s32.totalorder %s256, %s257
      %p266 = scmp.eq.s32.totalorder %s36, 0
      %p267 = por %p265, %p266
      %p268 = scmp.ne.s32.totalorder %s256, %s257
      %p269 = scmp.eq.s32.totalorder %s37, 1
      %p270 = por %p268, %p269
      %p272 = scmp.ne.s32.totalorder %s257, %s271
      %p273 = scmp.eq.s32.totalorder %s37, 0
      %p274 = por %p272, %p273
      %s276 = sadd.s32 %s275, 1
      %p279 = scmp.eq.s32.totalorder %s31, 1
      %p280 = scmp.ne.s32.totalorder %s275, %s277
      %p281 = scmp.eq.s32.totalorder %s31, 0
      %p282 = por %p280, %p281
      %p283 = scmp.ne.s32.totalorder %s275, %s277
      %p284 = scmp.eq.s32.totalorder %s36, 1
      %p285 = por %p283, %p284
      %p286 = scmp.ne.s32.totalorder %s277, %s278
      %p287 = scmp.eq.s32.totalorder %s36, 0
      %p288 = por %p286, %p287
      %p289 = scmp.ne.s32.totalorder %s277, %s278
      %p290 = scmp.eq.s32.totalorder %s37, 1
      %p291 = por %p289, %p290
      %p293 = scmp.ne.s32.totalorder %s278, %s292
      %p294 = scmp.eq.s32.totalorder %s37, 0
      %p295 = por %p293, %p294
      %s297 = sadd.s32 %s296, 1
      %p300 = scmp.eq.s32.totalorder %s31, 1
      %p301 = scmp.ne.s32.totalorder %s296, %s298
      %p302 = scmp.eq.s32.totalorder %s31, 0
      %p303 = por %p301, %p302
      %p304 = scmp.ne.s32.totalorder %s296, %s298
      %p305 = scmp.eq.s32.totalorder %s36, 1
      %p306 = por %p304, %p305
      %p307 = scmp.ne.s32.totalorder %s298, %s299
      %p308 = scmp.eq.s32.totalorder %s36, 0
      %p309 = por %p307, %p308
      %p310 = scmp.ne.s32.totalorder %s298, %s299
      %p311 = scmp.eq.s32.totalorder %s37, 1
      %p312 = por %p310, %p311
      %p314 = scmp.ne.s32.totalorder %s299, %s313
      %p315 = scmp.eq.s32.totalorder %s37, 0
      %p316 = por %p314, %p315
      %s318 = sadd.s32 %s317, 1
      %p321 = scmp.eq.s32.totalorder %s31, 1
      %p322 = scmp.ne.s32.totalorder %s317, %s319
      %p323 = scmp.eq.s32.totalorder %s31, 0
      %p324 = por %p322, %p323
      %p325 = scmp.ne.s32.totalorder %s317, %s319
      %p326 = scmp.eq.s32.totalorder %s36, 1
      %p327 = por %p325, %p326
      %p328 = scmp.ne.s32.totalorder %s319, %s320
      %p329 = scmp.eq.s32.totalorder %s36, 0
      %p330 = por %p328, %p329
      %p331 = scmp.ne.s32.totalorder %s319, %s320
      %p332 = scmp.eq.s32.totalorder %s37, 1
      %p333 = por %p331, %p332
      %p335 = scmp.ne.s32.totalorder %s320, %s334
      %p336 = scmp.eq.s32.totalorder %s37, 0
      %p337 = por %p335, %p336
      %s339 = sadd.s32 %s338, 1
      %p342 = scmp.eq.s32.totalorder %s31, 1
      %p343 = scmp.ne.s32.totalorder %s338, %s340
      %p344 = scmp.eq.s32.totalorder %s31, 0
      %p345 = por %p343, %p344
      %p346 = scmp.ne.s32.totalorder %s338, %s340
      %p347 = scmp.eq.s32.totalorder %s36, 1
      %p348 = por %p346, %p347
      %p349 = scmp.ne.s32.totalorder %s340, %s341
      %p350 = scmp.eq.s32.totalorder %s36, 0
      %p351 = por %p349, %p350
      %p352 = scmp.ne.s32.totalorder %s340, %s341
      %p353 = scmp.eq.s32.totalorder %s37, 1
      %p354 = por %p352, %p353
      %p356 = scmp.ne.s32.totalorder %s341, %s355
      %p357 = scmp.eq.s32.totalorder %s37, 0
      %p358 = por %p356, %p357
      %s359 = ssub.s32 %s31, %s38
      %p360 = scmp.eq.s32.totalorder %s359, 0
      %s362 = sadd.s32 %s361, 1
      %s363 = scalar_select %p360, %s361, %s362
      %p366 = pneg %p360
      %p367 = scmp.eq.s32.totalorder %s31, 1
      %p368 = por %p366, %p367
      %p369 = scmp.ne.s32.totalorder %s361, %s364
      %p370 = scmp.eq.s32.totalorder %s31, 0
      %p371 = por %p369, %p370
      %p372 = scmp.ne.s32.totalorder %s361, %s364
      %p373 = scmp.eq.s32.totalorder %s36, 1
      %p374 = por %p372, %p373
      %p375 = scmp.ne.s32.totalorder %s364, %s365
      %p376 = scmp.eq.s32.totalorder %s36, 0
      %p377 = por %p375, %p376
      %p378 = scmp.ne.s32.totalorder %s364, %s365
      %p379 = scmp.eq.s32.totalorder %s37, 1
      %p380 = por %p378, %p379
      %p382 = scmp.ne.s32.totalorder %s365, %s381
      %p383 = scmp.eq.s32.totalorder %s37, 0
      %p384 = por %p382, %p383
      %p385 = scmp.le.s32.totalorder 1, %s31
      %p386 = scmp.lt.s32.totalorder %s31, 3
      %p387 = pnand %p385, %p386
      %p388 = pneg %p387
      // Predicated region
      $region9: #{tpu_custom_call.1} parent=5 // pred_check
        _
      $region10: #{tpu_custom_call.1} parent=5 // pred_check_branch
        %390 = sbr.rel (%p387) target = $region12
      $region11: #{tpu_custom_call.1} parent=5 // pred_region
        %s391 = ssub.s32 %s31, 1
        // Predicated region
        $region13: #{tpu_custom_call.1} parent=11 // pred_check
          %p392 = pneg %p78
        $region14: #{tpu_custom_call.1} parent=11 // pred_check_branch
          %394 = sbr.rel (%p392) target = $region16
        $region15: #{tpu_custom_call.1} parent=11 // pred_region
          %s396 = ssub.s32 10240, 10240
          %397 = vsyncadd [#allocation8], %s396
          %s398 = sshll.u32 [#allocation7], 4
          %s399 = int_to_ptr.vmem [resolvable:$true] %s398
          %404 = dma.hbm_to_vmem [thread:$0]  %s1, 10240, %s399, [#allocation8], 128, 128, 8
        $region16: #{tpu_custom_call.1} parent=11 // pred_fallthru
          _
        // Predicated region
        $region17: #{tpu_custom_call.1} parent=11 // pred_check
          %p405 = pneg %p99
        $region18: #{tpu_custom_call.1} parent=11 // pred_check_branch
          %407 = sbr.rel (%p405) target = $region20
        $region19: #{tpu_custom_call.1} parent=11 // pred_region
          _
        $region20: #{tpu_custom_call.1} parent=11 // pred_fallthru
          _
        // Predicated region
        $region21: #{tpu_custom_call.1} parent=11 // pred_check
          %p408 = pneg %p120
        $region22: #{tpu_custom_call.1} parent=11 // pred_check_branch
          %410 = sbr.rel (%p408) target = $region24
        $region23: #{tpu_custom_call.1} parent=11 // pred_region
          %s412 = ssub.s32 128, 128
          %413 = vsyncadd [#allocation8], %s412
          %s414 = sshll.u32 [#allocation9], 4
          %s415 = int_to_ptr.vmem [resolvable:$true] %s414
          %420 = dma.hbm_to_vmem [thread:$0]  %s3, 128, %s415, [#allocation8], 64, 64, 4
        $region24: #{tpu_custom_call.1} parent=11 // pred_fallthru
          _
        // Predicated region
        $region25: #{tpu_custom_call.1} parent=11 // pred_check
          %p421 = pneg %p141
        $region26: #{tpu_custom_call.1} parent=11 // pred_check_branch
          %423 = sbr.rel (%p421) target = $region28
        $region27: #{tpu_custom_call.1} parent=11 // pred_region
          %s425 = ssub.s32 2048, 2048
          %426 = vsyncadd [#allocation11], %s425
          %s427 = sshll.u32 [#allocation10], 4
          %s428 = int_to_ptr.vmem [resolvable:$true] %s427
          %433 = dma.hbm_to_vmem [thread:$0]  %s4, 2048, %s428, [#allocation11], 64, 64, 4
        $region28: #{tpu_custom_call.1} parent=11 // pred_fallthru
          _
        // Predicated region
        $region29: #{tpu_custom_call.1} parent=11 // pred_check
          %p434 = pneg %p162
        $region30: #{tpu_custom_call.1} parent=11 // pred_check_branch
          %436 = sbr.rel (%p434) target = $region32
        $region31: #{tpu_custom_call.1} parent=11 // pred_region
          %s438 = ssub.s32 10240, 10240
          %439 = vsyncadd [#allocation11], %s438
          %s440 = sshll.u32 [#allocation12], 4
          %s441 = int_to_ptr.vmem [resolvable:$true] %s440
          %446 = dma.hbm_to_vmem [thread:$0]  %s5, 10240, %s441, [#allocation11], 128, 128, 8
        $region32: #{tpu_custom_call.1} parent=11 // pred_fallthru
          _
        // Predicated region
        $region33: #{tpu_custom_call.1} parent=11 // pred_check
          %p447 = pneg %p183
        $region34: #{tpu_custom_call.1} parent=11 // pred_check_branch
          %449 = sbr.rel (%p447) target = $region36
        $region35: #{tpu_custom_call.1} parent=11 // pred_region
          _
        $region36: #{tpu_custom_call.1} parent=11 // pred_fallthru
          _
        // Predicated region
        $region37: #{tpu_custom_call.1} parent=11 // pred_check
          %p450 = pneg %p204
        $region38: #{tpu_custom_call.1} parent=11 // pred_check_branch
          %452 = sbr.rel (%p450) target = $region40
        $region39: #{tpu_custom_call.1} parent=11 // pred_region
          _
        $region40: #{tpu_custom_call.1} parent=11 // pred_fallthru
          _
        // Predicated region
        $region41: #{tpu_custom_call.1} parent=11 // pred_check
          %p453 = pneg %p225
        $region42: #{tpu_custom_call.1} parent=11 // pred_check_branch
          %455 = sbr.rel (%p453) target = $region44
        $region43: #{tpu_custom_call.1} parent=11 // pred_region
          %s457 = ssub.s32 2048, 2048
          %458 = vsyncadd [#allocation14], %s457
          %s459 = sshll.u32 [#allocation13], 4
          %s460 = int_to_ptr.vmem [resolvable:$true] %s459
          %465 = dma.hbm_to_vmem [thread:$0]  %s8, 2048, %s460, [#allocation14], 64, 64, 4
        $region44: #{tpu_custom_call.1} parent=11 // pred_fallthru
          _
        // Predicated region
        $region45: #{tpu_custom_call.1} parent=11 // pred_check
          %p466 = pneg %p246
        $region46: #{tpu_custom_call.1} parent=11 // pred_check_branch
          %468 = sbr.rel (%p466) target = $region48
        $region47: #{tpu_custom_call.1} parent=11 // pred_region
          %s470 = ssub.s32 5120, 5120
          %471 = vsyncadd [#allocation14], %s470
          %s472 = sshll.u32 [#allocation15], 4
          %s473 = int_to_ptr.vmem [resolvable:$true] %s472
          %478 = dma.hbm_to_vmem [thread:$0]  %s9, 5120, %s473, [#allocation14], 64, 64, 4
        $region48: #{tpu_custom_call.1} parent=11 // pred_fallthru
          _
        // Predicated region
        $region49: #{tpu_custom_call.1} parent=11 // pred_check
          %p479 = pneg %p267
        $region50: #{tpu_custom_call.1} parent=11 // pred_check_branch
          %481 = sbr.rel (%p479) target = $region52
        $region51: #{tpu_custom_call.1} parent=11 // pred_region
          _
        $region52: #{tpu_custom_call.1} parent=11 // pred_fallthru
          _
        // Predicated region
        $region53: #{tpu_custom_call.1} parent=11 // pred_check
          %p482 = pneg %p288
        $region54: #{tpu_custom_call.1} parent=11 // pred_check_branch
          %484 = sbr.rel (%p482) target = $region56
        $region55: #{tpu_custom_call.1} parent=11 // pred_region
          %s486 = ssub.s32 1024, 1024
          %487 = vsyncadd [#allocation17], %s486
          %s488 = sshll.u32 [#allocation16], 4
          %s489 = int_to_ptr.vmem [resolvable:$true] %s488
          %494 = dma.hbm_to_vmem [thread:$0]  %s11, 1024, %s489, [#allocation17], 64, 64, 4
        $region56: #{tpu_custom_call.1} parent=11 // pred_fallthru
          _
        // Predicated region
        $region57: #{tpu_custom_call.1} parent=11 // pred_check
          %p495 = pneg %p309
        $region58: #{tpu_custom_call.1} parent=11 // pred_check_branch
          %497 = sbr.rel (%p495) target = $region60
        $region59: #{tpu_custom_call.1} parent=11 // pred_region
          _
        $region60: #{tpu_custom_call.1} parent=11 // pred_fallthru
          _
        // Predicated region
        $region61: #{tpu_custom_call.1} parent=11 // pred_check
          %p498 = pneg %p330
        $region62: #{tpu_custom_call.1} parent=11 // pred_check_branch
          %500 = sbr.rel (%p498) target = $region64
        $region63: #{tpu_custom_call.1} parent=11 // pred_region
          %s502 = ssub.s32 1024, 1024
          %503 = vsyncadd [#allocation17], %s502
          %s504 = sshll.u32 [#allocation18], 4
          %s505 = int_to_ptr.vmem [resolvable:$true] %s504
          %510 = dma.hbm_to_vmem [thread:$0]  %s13, 1024, %s505, [#allocation17], 64, 64, 4
        $region64: #{tpu_custom_call.1} parent=11 // pred_fallthru
          _
        // Predicated region
        $region65: #{tpu_custom_call.1} parent=11 // pred_check
          %p511 = pneg %p351
        $region66: #{tpu_custom_call.1} parent=11 // pred_check_branch
          %513 = sbr.rel (%p511) target = $region68
        $region67: #{tpu_custom_call.1} parent=11 // pred_region
          _
        $region68: #{tpu_custom_call.1} parent=11 // pred_fallthru
          _
      $region12: #{tpu_custom_call.1} parent=5 // pred_fallthru
        _
      %p514 = scmp.lt.s32.totalorder %s31, 2
      // Predicated region
      $region69: #{tpu_custom_call.1} parent=5 // pred_check
        %p515 = pneg %p514
      $region70: #{tpu_custom_call.1} parent=5 // pred_check_branch
        %517 = sbr.rel (%p515) target = $region72
      $region71: #{tpu_custom_call.1} parent=5 // pred_region
        // Predicated region
        $region73: #{tpu_custom_call.1} parent=71 // pred_check
          %p518 = pneg %p51
        $region74: #{tpu_custom_call.1} parent=71 // pred_check_branch
          %520 = sbr.rel (%p518) target = $region76
        $region75: #{tpu_custom_call.1} parent=71 // pred_region
          %s521 = sand.u32 %s41, 1
          %s522 = scalar_lea.sflag [#allocation5], %s521
          %s523 = sand.u32 %s41, 1
          %s524 = smul.addr %s523, 16
          %s525 = scalar_lea.vmem [#allocation4], %s524
          %s527 = ssub.s32 256, 256
          %528 = vsyncadd %s522, %s527
          %s529 = smul.addr %s31, 4
          %s530 = smul.addr %s529, 64
          %s531 = scalar_lea.hbm %s0, %s530
          %s532 = sshll.u32 %s525, 4
          %s533 = int_to_ptr.vmem [resolvable:$true] %s532
          %538 = dma.hbm_to_vmem [thread:$0]  %s531, 256, %s533, %s522, 64, 64, 4
        $region76: #{tpu_custom_call.1} parent=71 // pred_fallthru
          _
      $region72: #{tpu_custom_call.1} parent=5 // pred_fallthru
        _
      %p539 = scmp.le.s32.totalorder 1, %s31
      %p540 = scmp.lt.s32.totalorder %s31, 3
      %p541 = pnand %p539, %p540
      %p542 = pneg %p541
      // Predicated region
      $region77: #{tpu_custom_call.1} parent=5 // pred_check
        _
      $region78: #{tpu_custom_call.1} parent=5 // pred_check_branch
        %544 = sbr.rel (%p541) target = $region80
      $region79: #{tpu_custom_call.1} parent=5 // pred_region
        %s545 = ssub.s32 %s31, 1
        %s546 = sand.u32 %s44, 1
        %s547 = scalar_lea.sflag [#allocation5], %s546
        %s548 = sand.u32 %s44, 1
        %s549 = smul.addr %s548, 16
        %s550 = scalar_lea.vmem [#allocation4], %s549
        // Predicated region
        $region81: #{tpu_custom_call.1} parent=79 // pred_check
          %p551 = pneg %p57
        $region82: #{tpu_custom_call.1} parent=79 // pred_check_branch
          %553 = sbr.rel (%p551) target = $region84
        $region83: #{tpu_custom_call.1} parent=79 // pred_region
          %554 = dma.done %s547, 256
        $region84: #{tpu_custom_call.1} parent=79 // pred_fallthru
          _
        // Predicated region
        $region85: #{tpu_custom_call.1} parent=79 // pred_check
          %p555 = pneg %p78
        $region86: #{tpu_custom_call.1} parent=79 // pred_check_branch
          %557 = sbr.rel (%p555) target = $region88
        $region87: #{tpu_custom_call.1} parent=79 // pred_region
          %558 = dma.done [#allocation8], 10240
        $region88: #{tpu_custom_call.1} parent=79 // pred_fallthru
          _
        // Predicated region
        $region89: #{tpu_custom_call.1} parent=79 // pred_check
          %p559 = pneg %p120
        $region90: #{tpu_custom_call.1} parent=79 // pred_check_branch
          %561 = sbr.rel (%p559) target = $region92
        $region91: #{tpu_custom_call.1} parent=79 // pred_region
          %562 = dma.done [#allocation8], 128
        $region92: #{tpu_custom_call.1} parent=79 // pred_fallthru
          _
        // Predicated region
        $region93: #{tpu_custom_call.1} parent=79 // pred_check
          %p563 = pneg %p141
        $region94: #{tpu_custom_call.1} parent=79 // pred_check_branch
          %565 = sbr.rel (%p563) target = $region96
        $region95: #{tpu_custom_call.1} parent=79 // pred_region
          %566 = dma.done [#allocation11], 2048
        $region96: #{tpu_custom_call.1} parent=79 // pred_fallthru
          _
        // Predicated region
        $region97: #{tpu_custom_call.1} parent=79 // pred_check
          %p567 = pneg %p162
        $region98: #{tpu_custom_call.1} parent=79 // pred_check_branch
          %569 = sbr.rel (%p567) target = $region100
        $region99: #{tpu_custom_call.1} parent=79 // pred_region
          %570 = dma.done [#allocation11], 10240
        $region100: #{tpu_custom_call.1} parent=79 // pred_fallthru
          _
        // Predicated region
        $region101: #{tpu_custom_call.1} parent=79 // pred_check
          %p571 = pneg %p225
        $region102: #{tpu_custom_call.1} parent=79 // pred_check_branch
          %573 = sbr.rel (%p571) target = $region104
        $region103: #{tpu_custom_call.1} parent=79 // pred_region
          %574 = dma.done [#allocation14], 2048
        $region104: #{tpu_custom_call.1} parent=79 // pred_fallthru
          _
        // Predicated region
        $region105: #{tpu_custom_call.1} parent=79 // pred_check
          %p575 = pneg %p246
        $region106: #{tpu_custom_call.1} parent=79 // pred_check_branch
          %577 = sbr.rel (%p575) target = $region108
        $region107: #{tpu_custom_call.1} parent=79 // pred_region
          %578 = dma.done [#allocation14], 5120
        $region108: #{tpu_custom_call.1} parent=79 // pred_fallthru
          _
        // Predicated region
        $region109: #{tpu_custom_call.1} parent=79 // pred_check
          %p579 = pneg %p288
        $region110: #{tpu_custom_call.1} parent=79 // pred_check_branch
          %581 = sbr.rel (%p579) target = $region112
        $region111: #{tpu_custom_call.1} parent=79 // pred_region
          %582 = dma.done [#allocation17], 1024
        $region112: #{tpu_custom_call.1} parent=79 // pred_fallthru
          _
        // Predicated region
        $region113: #{tpu_custom_call.1} parent=79 // pred_check
          %p583 = pneg %p330
        $region114: #{tpu_custom_call.1} parent=79 // pred_check_branch
          %585 = sbr.rel (%p583) target = $region116
        $region115: #{tpu_custom_call.1} parent=79 // pred_region
          %586 = dma.done [#allocation17], 1024
        $region116: #{tpu_custom_call.1} parent=79 // pred_fallthru
          _
        %s587 = sand.u32 %s44, 1
        %s588 = scalar_lea.sflag [#allocation5], %s587
        %s589 = sand.u32 %s44, 1
        %s590 = smul.addr %s589, 16
        %s591 = scalar_lea.vmem [#allocation4], %s590
        %p592 = pneg %p57
        %p593 = pneg %p54
        %p594 = pneg %p78
        %p595 = pneg %p75
        %p596 = pneg %p99
        %p597 = pneg %p96
        %p598 = pneg %p120
        %p599 = pneg %p117
        %p600 = pneg %p141
        %p601 = pneg %p138
        %p602 = pneg %p162
        %p603 = pneg %p159
        %p604 = pneg %p183
        %p605 = pneg %p180
        %p606 = pneg %p204
        %p607 = pneg %p201
        %p608 = pneg %p225
        %p609 = pneg %p222
        %p610 = pneg %p246
        %p611 = pneg %p243
        %p612 = pneg %p267
        %p613 = pneg %p264
        %p614 = pneg %p288
        %p615 = pneg %p285
        %p616 = pneg %p309
        %p617 = pneg %p306
        %p618 = pneg %p330
        %p619 = pneg %p327
        %p620 = pneg %p351
        %p621 = pneg %p348
        %p622 = pneg %p377
        %p623 = pneg %p374
        %s624 = sand.u32 %s364, 1
        %s625 = scalar_lea.sflag [#allocation6], %s624
        %s626 = sand.u32 %s364, 1
        %s627 = scalar_lea.vmem [#allocation19], %s626
        %v629 = vld [vmem:[%s550] sm:$0xf]
        %v630 = vld [vmem:[%s550 + $0x4] sm:$0xf]
        %v631 = vld [vmem:[%s550 + $0x8] sm:$0xf]
        %v632 = vld [vmem:[%s550 + $0xc] sm:$0x3]
        %v633 = vld [vmem:[#allocation7] sm:$0xff]
        %v634 = vld [vmem:[#allocation7 + $0x8] sm:$0xff]
        %v635 = vld [vmem:[#allocation7 + $0x10] sm:$0xff]
        %v636 = vld [vmem:[#allocation7 + $0x18] sm:$0xff]
        %v637 = vld [vmem:[#allocation7 + $0x20] sm:$0xff]
        %v638 = vld [vmem:[#allocation7 + $0x28] sm:$0xff]
        %v639 = vld [vmem:[#allocation7 + $0x30] sm:$0xff]
        %v640 = vld [vmem:[#allocation7 + $0x38] sm:$0xff]
        %v641 = vld [vmem:[#allocation7 + $0x40] sm:$0xff]
        %v642 = vld [vmem:[#allocation7 + $0x48] sm:$0xff]
        %v643 = vld [vmem:[#allocation7 + $0x50] sm:$0xff]
        %v644 = vld [vmem:[#allocation7 + $0x58] sm:$0xff]
        %v645 = vld [vmem:[#allocation7 + $0x60] sm:$0xff]
        %v646 = vld [vmem:[#allocation7 + $0x68] sm:$0xff]
        %v647 = vld [vmem:[#allocation7 + $0x70] sm:$0xff]
        %v648 = vld [vmem:[#allocation7 + $0x78] sm:$0xff]
        %v649 = vld [vmem:[%s550 + $0xc] sm:$0x7]
        %s650 = scalar_lea.vmem [#allocation7], 128
        %v651 = vld [vmem:[%s650] sm:$0xff]
        %v652 = vld [vmem:[%s650 + $0x8] sm:$0xff]
        %v653 = vld [vmem:[%s650 + $0x10] sm:$0xff]
        %v654 = vld [vmem:[%s650 + $0x18] sm:$0xff]
        %v655 = vld [vmem:[%s650 + $0x20] sm:$0xff]
        %v656 = vld [vmem:[%s650 + $0x28] sm:$0xff]
        %v657 = vld [vmem:[%s650 + $0x30] sm:$0xff]
        %v658 = vld [vmem:[%s650 + $0x38] sm:$0xff]
        %v659 = vld [vmem:[%s650 + $0x40] sm:$0xff]
        %v660 = vld [vmem:[%s650 + $0x48] sm:$0xff]
        %v661 = vld [vmem:[%s650 + $0x50] sm:$0xff]
        %v662 = vld [vmem:[%s650 + $0x58] sm:$0xff]
        %v663 = vld [vmem:[%s650 + $0x60] sm:$0xff]
        %v664 = vld [vmem:[%s650 + $0x68] sm:$0xff]
        %v665 = vld [vmem:[%s650 + $0x70] sm:$0xff]
        %v666 = vld [vmem:[%s650 + $0x78] sm:$0xff]
        %v671 = vunpack.c.l.b16 %v629
        %v672 = vunpack.c.l.b16 %v630
        %v673 = vunpack.c.l.b16 %v631
        %v674 = vunpack.c.l.b16 %v649
        %v675 = vpack.c.b16 %v672, %v671
        %v676 = vpack.c.b16 %v674, %v673
        %vm677 = vsmask.f32 7424
        %v679 = vshrl.u32 %v675, 16
        %v681 = vshll.u32 %v675, 16
        %v683 = vrot.slane %v681, 1
        %v684 = vor.u32 %v679, %v683
        %v686 = vshll.u32 %v676, 16
        %v688 = vrot.slane %v686, 1
        %v689 = vsel %vm677, %v684, %v688
        %v690 = vshrl.u32 %v676, 16
        %v692 = vor.u32 %v690, %v688
        %v711 = vunpack.c.l.b16 %v651
        %v712 = vunpack.c.h.b16 %v651
        %v713 = vunpack.c.l.b16 %v652
        %v714 = vunpack.c.h.b16 %v652
        %v715 = vunpack.c.l.b16 %v653
        %v716 = vunpack.c.h.b16 %v653
        %v717 = vunpack.c.l.b16 %v654
        %v718 = vunpack.c.h.b16 %v654
        %v719 = vunpack.c.l.b16 %v655
        %v720 = vunpack.c.h.b16 %v655
        %v721 = vunpack.c.l.b16 %v656
        %v722 = vunpack.c.h.b16 %v656
        %v723 = vunpack.c.l.b16 %v657
        %v724 = vunpack.c.h.b16 %v657
        %v725 = vunpack.c.l.b16 %v658
        %v726 = vunpack.c.h.b16 %v658
        %v727 = vunpack.c.l.b16 %v659
        %v728 = vunpack.c.h.b16 %v659
        %v729 = vunpack.c.l.b16 %v660
        %v730 = vunpack.c.h.b16 %v660
        %v731 = vunpack.c.l.b16 %v661
        %v732 = vunpack.c.h.b16 %v661
        %v733 = vunpack.c.l.b16 %v662
        %v734 = vunpack.c.h.b16 %v662
        %v735 = vunpack.c.l.b16 %v663
        %v736 = vunpack.c.h.b16 %v663
        %v737 = vunpack.c.l.b16 %v664
        %v738 = vunpack.c.h.b16 %v664
        %v739 = vunpack.c.l.b16 %v665
        %v740 = vunpack.c.h.b16 %v665
        %v741 = vunpack.c.l.b16 %v666
        %v742 = vunpack.c.h.b16 %v666
        %v743 = vpack.c.b16 %v713, %v711
        %v744 = vpack.c.b16 %v714, %v712
        %v745 = vpack.c.b16 %v717, %v715
        %v746 = vpack.c.b16 %v718, %v716
        %v747 = vpack.c.b16 %v721, %v719
        %v748 = vpack.c.b16 %v722, %v720
        %v749 = vpack.c.b16 %v725, %v723
        %v750 = vpack.c.b16 %v726, %v724
        %v751 = vpack.c.b16 %v729, %v727
        %v752 = vpack.c.b16 %v730, %v728
        %v753 = vpack.c.b16 %v733, %v731
        %v754 = vpack.c.b16 %v734, %v732
        %v755 = vpack.c.b16 %v737, %v735
        %v756 = vpack.c.b16 %v738, %v736
        %v757 = vpack.c.b16 %v741, %v739
        %v758 = vpack.c.b16 %v742, %v740
        %775 = vmatprep.subr.bf16.mxu0 %v758
        %776 = vmatpush1.bf16.msra.mxu0 %v757
        %777 = vmatprep.subr.bf16.mxu0 %v756
        %778 = vmatpush1.bf16.msra.mxu0 %v755
        %779 = vmatprep.subr.bf16.mxu0 %v754
        %780 = vmatpush1.bf16.msra.mxu0 %v753
        %781 = vmatprep.subr.bf16.mxu0 %v752
        %782 = vmatpush1.bf16.msra.mxu0 %v751
        %783 = vmatprep.subr.bf16.mxu0 %v750
        %784 = vmatpush1.bf16.msra.mxu0 %v749
        %785 = vmatprep.subr.bf16.mxu0 %v748
        %786 = vmatpush1.bf16.msra.mxu0 %v747
        %787 = vmatprep.subr.bf16.mxu0 %v746
        %788 = vmatpush1.bf16.msra.mxu0 %v745
        %789 = vmatprep.subr.bf16.mxu0 %v744
        %790 = vmatpush1.bf16.msra.mxu0 %v743
        %791 = vmatprep.subr.bf16.mxu0 0
        %792 = vmatpush2.bf16.msra.mxu0 0
        %793 = vmatprep.subr.bf16.mxu0 0
        %794 = vmatpush2.bf16.msra.mxu0 0
        %795 = vmatprep.subr.bf16.mxu0 0
        %796 = vmatpush2.bf16.msra.mxu0 0
        %797 = vmatprep.subr.bf16.mxu0 0
        %798 = vmatpush2.bf16.msra.mxu0 0
        %799 = vmatprep.subr.bf16.mxu0 0
        %800 = vmatpush2.bf16.msra.mxu0 0
        %801 = vmatprep.subr.bf16.mxu0 0
        %802 = vmatpush2.bf16.msra.mxu0 0
        %803 = vmatprep.subr.bf16.mxu0 0
        %804 = vmatpush2.bf16.msra.mxu0 0
        %805 = vmatprep.subr.bf16.mxu0 0
        %806 = vmatpush2.bf16.msra.mxu0 0
        %807 = vmatprep.mubr.bf16.mxu0 0
        %808 = vmatmul.mubr.bf16.gmra.mxu0 %v689
        %v809 = vpop.f32.mrf.mxu0
        %v810 = vadd.f32 0.0, %v809
        %v811 = vpop.f32.mrf.mxu0
        %v812 = vadd.f32 0.0, %v811
        %v813 = vpop.f32.mrf.mxu0
        %v814 = vadd.f32 0.0, %v813
        %v815 = vpop.f32.mrf.mxu0
        %v816 = vadd.f32 0.0, %v815
        %817 = vmatprep.mubr.bf16.mxu0 0
        %818 = vmatmul.mubr.bf16.gmra.mxu0 %v692
        %v819 = vpop.f32.mrf.mxu0
        %v820 = vadd.f32 0.0, %v819
        %v821 = vpop.f32.mrf.mxu0
        %v822 = vadd.f32 0.0, %v821
        %v823 = vpop.f32.mrf.mxu0
        %v824 = vadd.f32 0.0, %v823
        %v825 = vpop.f32.mrf.mxu0
        %v826 = vadd.f32 0.0, %v825
        %827 = vdwg.mxu0
        %v829 = vunpack.c.l.b16 %v632
        %v830 = vpack.c.b16 %v829, %v673
        %v849 = vunpack.c.l.b16 %v633
        %v850 = vunpack.c.h.b16 %v633
        %v851 = vunpack.c.l.b16 %v634
        %v852 = vunpack.c.h.b16 %v634
        %v853 = vunpack.c.l.b16 %v635
        %v854 = vunpack.c.h.b16 %v635
        %v855 = vunpack.c.l.b16 %v636
        %v856 = vunpack.c.h.b16 %v636
        %v857 = vunpack.c.l.b16 %v637
        %v858 = vunpack.c.h.b16 %v637
        %v859 = vunpack.c.l.b16 %v638
        %v860 = vunpack.c.h.b16 %v638
        %v861 = vunpack.c.l.b16 %v639
        %v862 = vunpack.c.h.b16 %v639
        %v863 = vunpack.c.l.b16 %v640
        %v864 = vunpack.c.h.b16 %v640
        %v865 = vunpack.c.l.b16 %v641
        %v866 = vunpack.c.h.b16 %v641
        %v867 = vunpack.c.l.b16 %v642
        %v868 = vunpack.c.h.b16 %v642
        %v869 = vunpack.c.l.b16 %v643
        %v870 = vunpack.c.h.b16 %v643
        %v871 = vunpack.c.l.b16 %v644
        %v872 = vunpack.c.h.b16 %v644
        %v873 = vunpack.c.l.b16 %v645
        %v874 = vunpack.c.h.b16 %v645
        %v875 = vunpack.c.l.b16 %v646
        %v876 = vunpack.c.h.b16 %v646
        %v877 = vunpack.c.l.b16 %v647
        %v878 = vunpack.c.h.b16 %v647
        %v879 = vunpack.c.l.b16 %v648
        %v880 = vunpack.c.h.b16 %v648
        %v881 = vpack.c.b16 %v851, %v849
        %v882 = vpack.c.b16 %v852, %v850
        %v883 = vpack.c.b16 %v855, %v853
        %v884 = vpack.c.b16 %v856, %v854
        %v885 = vpack.c.b16 %v859, %v857
        %v886 = vpack.c.b16 %v860, %v858
        %v887 = vpack.c.b16 %v863, %v861
        %v888 = vpack.c.b16 %v864, %v862
        %v889 = vpack.c.b16 %v867, %v865
        %v890 = vpack.c.b16 %v868, %v866
        %v891 = vpack.c.b16 %v871, %v869
        %v892 = vpack.c.b16 %v872, %v870
        %v893 = vpack.c.b16 %v875, %v873
        %v894 = vpack.c.b16 %v876, %v874
        %v895 = vpack.c.b16 %v879, %v877
        %v896 = vpack.c.b16 %v880, %v878
        %913 = vmatprep.subr.bf16.mxu0 %v896
        %914 = vmatpush1.bf16.msra.mxu0 %v895
        %915 = vmatprep.subr.bf16.mxu0 %v894
        %916 = vmatpush1.bf16.msra.mxu0 %v893
        %917 = vmatprep.subr.bf16.mxu0 %v892
        %918 = vmatpush1.bf16.msra.mxu0 %v891
        %919 = vmatprep.subr.bf16.mxu0 %v890
        %920 = vmatpush1.bf16.msra.mxu0 %v889
        %921 = vmatprep.subr.bf16.mxu0 %v888
        %922 = vmatpush1.bf16.msra.mxu0 %v887
        %923 = vmatprep.subr.bf16.mxu0 %v886
        %924 = vmatpush1.bf16.msra.mxu0 %v885
        %925 = vmatprep.subr.bf16.mxu0 %v884
        %926 = vmatpush1.bf16.msra.mxu0 %v883
        %927 = vmatprep.subr.bf16.mxu0 %v882
        %928 = vmatpush1.bf16.msra.mxu0 %v881
        %929 = vmatprep.subr.bf16.mxu0 0
        %930 = vmatpush2.bf16.msra.mxu0 0
        %931 = vmatprep.subr.bf16.mxu0 0
        %932 = vmatpush2.bf16.msra.mxu0 0
        %933 = vmatprep.subr.bf16.mxu0 0
        %934 = vmatpush2.bf16.msra.mxu0 0
        %935 = vmatprep.subr.bf16.mxu0 0
        %936 = vmatpush2.bf16.msra.mxu0 0
        %937 = vmatprep.subr.bf16.mxu0 0
        %938 = vmatpush2.bf16.msra.mxu0 0
        %939 = vmatprep.subr.bf16.mxu0 0
        %940 = vmatpush2.bf16.msra.mxu0 0
        %941 = vmatprep.subr.bf16.mxu0 0
        %942 = vmatpush2.bf16.msra.mxu0 0
        %943 = vmatprep.subr.bf16.mxu0 0
        %944 = vmatpush2.bf16.msra.mxu0 0
        %945 = vmatprep.mubr.bf16.mxu0 0
        %946 = vmatmul.mubr.bf16.gmra.mxu0 %v675
        %v947 = vpop.f32.mrf.mxu0
        %v948 = vadd.f32 %v810, %v947
        %v949 = vpop.f32.mrf.mxu0
        %v950 = vadd.f32 %v812, %v949
        %v951 = vpop.f32.mrf.mxu0
        %v952 = vadd.f32 %v814, %v951
        %v953 = vpop.f32.mrf.mxu0
        %v954 = vadd.f32 %v816, %v953
        %955 = vmatprep.mubr.bf16.mxu0 0
        %956 = vmatmul.mubr.bf16.gmra.mxu0 %v830
        %v957 = vpop.f32.mrf.mxu0
        %v958 = vadd.f32 %v820, %v957
        %v959 = vpop.f32.mrf.mxu0
        %v960 = vadd.f32 %v822, %v959
        %v961 = vpop.f32.mrf.mxu0
        %v962 = vadd.f32 %v824, %v961
        %v963 = vpop.f32.mrf.mxu0
        %v964 = vadd.f32 %v826, %v963
        %965 = vdwg.mxu0
        %v966 = vld [vmem:[%s550] sm:$0xe]
        %s967 = scalar_lea.vmem [#allocation7], 256
        %v968 = vld [vmem:[%s967] sm:$0xff]
        %v969 = vld [vmem:[%s967 + $0x8] sm:$0xff]
        %v970 = vld [vmem:[%s967 + $0x10] sm:$0xff]
        %v971 = vld [vmem:[%s967 + $0x18] sm:$0xff]
        %v972 = vld [vmem:[%s967 + $0x20] sm:$0xff]
        %v973 = vld [vmem:[%s967 + $0x28] sm:$0xff]
        %v974 = vld [vmem:[%s967 + $0x30] sm:$0xff]
        %v975 = vld [vmem:[%s967 + $0x38] sm:$0xff]
        %v976 = vld [vmem:[%s967 + $0x40] sm:$0xff]
        %v977 = vld [vmem:[%s967 + $0x48] sm:$0xff]
        %v978 = vld [vmem:[%s967 + $0x50] sm:$0xff]
        %v979 = vld [vmem:[%s967 + $0x58] sm:$0xff]
        %v980 = vld [vmem:[%s967 + $0x60] sm:$0xff]
        %v981 = vld [vmem:[%s967 + $0x68] sm:$0xff]
        %v982 = vld [vmem:[%s967 + $0x70] sm:$0xff]
        %v983 = vld [vmem:[%s967 + $0x78] sm:$0xff]
        %v985 = vunpack.c.l.b16 %v966
        %v986 = vpack.c.b16 %v672, %v985
        %vm987 = vcmask 1046528
        %v988 = vrot.slane %v986, 1
        %v989 = vrot.slane %v676, 1
        %v990 = vsel %vm987, %v988, %v989
        %v1009 = vunpack.c.l.b16 %v968
        %v1010 = vunpack.c.h.b16 %v968
        %v1011 = vunpack.c.l.b16 %v969
        %v1012 = vunpack.c.h.b16 %v969
        %v1013 = vunpack.c.l.b16 %v970
        %v1014 = vunpack.c.h.b16 %v970
        %v1015 = vunpack.c.l.b16 %v971
        %v1016 = vunpack.c.h.b16 %v971
        %v1017 = vunpack.c.l.b16 %v972
        %v1018 = vunpack.c.h.b16 %v972
        %v1019 = vunpack.c.l.b16 %v973
        %v1020 = vunpack.c.h.b16 %v973
        %v1021 = vunpack.c.l.b16 %v974
        %v1022 = vunpack.c.h.b16 %v974
        %v1023 = vunpack.c.l.b16 %v975
        %v1024 = vunpack.c.h.b16 %v975
        %v1025 = vunpack.c.l.b16 %v976
        %v1026 = vunpack.c.h.b16 %v976
        %v1027 = vunpack.c.l.b16 %v977
        %v1028 = vunpack.c.h.b16 %v977
        %v1029 = vunpack.c.l.b16 %v978
        %v1030 = vunpack.c.h.b16 %v978
        %v1031 = vunpack.c.l.b16 %v979
        %v1032 = vunpack.c.h.b16 %v979
        %v1033 = vunpack.c.l.b16 %v980
        %v1034 = vunpack.c.h.b16 %v980
        %v1035 = vunpack.c.l.b16 %v981
        %v1036 = vunpack.c.h.b16 %v981
        %v1037 = vunpack.c.l.b16 %v982
        %v1038 = vunpack.c.h.b16 %v982
        %v1039 = vunpack.c.l.b16 %v983
        %v1040 = vunpack.c.h.b16 %v983
        %v1041 = vpack.c.b16 %v1011, %v1009
        %v1042 = vpack.c.b16 %v1012, %v1010
        %v1043 = vpack.c.b16 %v1015, %v1013
        %v1044 = vpack.c.b16 %v1016, %v1014
        %v1045 = vpack.c.b16 %v1019, %v1017
        %v1046 = vpack.c.b16 %v1020, %v1018
        %v1047 = vpack.c.b16 %v1023, %v1021
        %v1048 = vpack.c.b16 %v1024, %v1022
        %v1049 = vpack.c.b16 %v1027, %v1025
        %v1050 = vpack.c.b16 %v1028, %v1026
        %v1051 = vpack.c.b16 %v1031, %v1029
        %v1052 = vpack.c.b16 %v1032, %v1030
        %v1053 = vpack.c.b16 %v1035, %v1033
        %v1054 = vpack.c.b16 %v1036, %v1034
        %v1055 = vpack.c.b16 %v1039, %v1037
        %v1056 = vpack.c.b16 %v1040, %v1038
        %1073 = vmatprep.subr.bf16.mxu0 %v1056
        %1074 = vmatpush1.bf16.msra.mxu0 %v1055
        %1075 = vmatprep.subr.bf16.mxu0 %v1054
        %1076 = vmatpush1.bf16.msra.mxu0 %v1053
        %1077 = vmatprep.subr.bf16.mxu0 %v1052
        %1078 = vmatpush1.bf16.msra.mxu0 %v1051
        %1079 = vmatprep.subr.bf16.mxu0 %v1050
        %1080 = vmatpush1.bf16.msra.mxu0 %v1049
        %1081 = vmatprep.subr.bf16.mxu0 %v1048
        %1082 = vmatpush1.bf16.msra.mxu0 %v1047
        %1083 = vmatprep.subr.bf16.mxu0 %v1046
        %1084 = vmatpush1.bf16.msra.mxu0 %v1045
        %1085 = vmatprep.subr.bf16.mxu0 %v1044
        %1086 = vmatpush1.bf16.msra.mxu0 %v1043
        %1087 = vmatprep.subr.bf16.mxu0 %v1042
        %1088 = vmatpush1.bf16.msra.mxu0 %v1041
        %1089 = vmatprep.subr.bf16.mxu0 0
        %1090 = vmatpush2.bf16.msra.mxu0 0
        %1091 = vmatprep.subr.bf16.mxu0 0
        %1092 = vmatpush2.bf16.msra.mxu0 0
        %1093 = vmatprep.subr.bf16.mxu0 0
        %1094 = vmatpush2.bf16.msra.mxu0 0
        %1095 = vmatprep.subr.bf16.mxu0 0
        %1096 = vmatpush2.bf16.msra.mxu0 0
        %1097 = vmatprep.subr.bf16.mxu0 0
        %1098 = vmatpush2.bf16.msra.mxu0 0
        %1099 = vmatprep.subr.bf16.mxu0 0
        %1100 = vmatpush2.bf16.msra.mxu0 0
        %1101 = vmatprep.subr.bf16.mxu0 0
        %1102 = vmatpush2.bf16.msra.mxu0 0
        %1103 = vmatprep.subr.bf16.mxu0 0
        %1104 = vmatpush2.bf16.msra.mxu0 0
        %1105 = vmatprep.mubr.bf16.mxu0 0
        %1106 = vmatmul.mubr.bf16.gmra.mxu0 %v990
        %v1107 = vpop.f32.mrf.mxu0
        %v1108 = vadd.f32 0.0, %v1107
        %v1109 = vpop.f32.mrf.mxu0
        %v1110 = vadd.f32 0.0, %v1109
        %v1111 = vpop.f32.mrf.mxu0
        %v1112 = vadd.f32 0.0, %v1111
        %v1113 = vpop.f32.mrf.mxu0
        %v1114 = vadd.f32 0.0, %v1113
        %1115 = vmatprep.mubr.bf16.mxu0 0
        %1116 = vmatmul.mubr.bf16.gmra.mxu0 %v989
        %v1117 = vpop.f32.mrf.mxu0
        %v1118 = vadd.f32 0.0, %v1117
        %v1119 = vpop.f32.mrf.mxu0
        %v1120 = vadd.f32 0.0, %v1119
        %v1121 = vpop.f32.mrf.mxu0
        %v1122 = vadd.f32 0.0, %v1121
        %v1123 = vpop.f32.mrf.mxu0
        %v1124 = vadd.f32 0.0, %v1123
        %1125 = vdwg.mxu0
        %v1126 = vadd.f32 %v948, %v1108
        %v1127 = vadd.f32 %v950, %v1110
        %v1128 = vadd.f32 %v952, %v1112
        %v1129 = vadd.f32 %v954, %v1114
        %v1130 = vadd.f32 %v958, %v1118
        %v1131 = vadd.f32 %v960, %v1120
        %v1132 = vadd.f32 %v962, %v1122
        %v1133 = vadd.f32 %v964, %v1124
        %v1134 = vld [vmem:[%s550 + $0xc] sm:$0xf]
        %s1135 = scalar_lea.vmem [#allocation7], 384
        %v1136 = vld [vmem:[%s1135] sm:$0xff]
        %v1137 = vld [vmem:[%s1135 + $0x8] sm:$0xff]
        %v1138 = vld [vmem:[%s1135 + $0x10] sm:$0xff]
        %v1139 = vld [vmem:[%s1135 + $0x18] sm:$0xff]
        %v1140 = vld [vmem:[%s1135 + $0x20] sm:$0xff]
        %v1141 = vld [vmem:[%s1135 + $0x28] sm:$0xff]
        %v1142 = vld [vmem:[%s1135 + $0x30] sm:$0xff]
        %v1143 = vld [vmem:[%s1135 + $0x38] sm:$0xff]
        %v1144 = vld [vmem:[%s1135 + $0x40] sm:$0xff]
        %v1145 = vld [vmem:[%s1135 + $0x48] sm:$0xff]
        %v1146 = vld [vmem:[%s1135 + $0x50] sm:$0xff]
        %v1147 = vld [vmem:[%s1135 + $0x58] sm:$0xff]
        %v1148 = vld [vmem:[%s1135 + $0x60] sm:$0xff]
        %v1149 = vld [vmem:[%s1135 + $0x68] sm:$0xff]
        %v1150 = vld [vmem:[%s1135 + $0x70] sm:$0xff]
        %v1151 = vld [vmem:[%s1135 + $0x78] sm:$0xff]
        %v1153 = vunpack.c.l.b16 %v1134
        %v1154 = vpack.c.b16 %v1153, %v673
        %vm1155 = vsmask.f32 6400
        %v1157 = vshrl.u32 %v986, 16
        %v1159 = vrot.slane %v1157, 1
        %v1160 = vshll.u32 %v986, 16
        %v1162 = vrot.slane %v1160, 2
        %v1163 = vor.u32 %v1159, %v1162
        %v1165 = vshrl.u32 %v1154, 16
        %v1167 = vrot.slane %v1165, 1
        %v1168 = vshll.u32 %v1154, 16
        %v1170 = vrot.slane %v1168, 2
        %v1171 = vor.u32 %v1167, %v1170
        %v1172 = vsel %vm1155, %v1163, %v1171
        %v1191 = vunpack.c.l.b16 %v1136
        %v1192 = vunpack.c.h.b16 %v1136
        %v1193 = vunpack.c.l.b16 %v1137
        %v1194 = vunpack.c.h.b16 %v1137
        %v1195 = vunpack.c.l.b16 %v1138
        %v1196 = vunpack.c.h.b16 %v1138
        %v1197 = vunpack.c.l.b16 %v1139
        %v1198 = vunpack.c.h.b16 %v1139
        %v1199 = vunpack.c.l.b16 %v1140
        %v1200 = vunpack.c.h.b16 %v1140
        %v1201 = vunpack.c.l.b16 %v1141
        %v1202 = vunpack.c.h.b16 %v1141
        %v1203 = vunpack.c.l.b16 %v1142
        %v1204 = vunpack.c.h.b16 %v1142
        %v1205 = vunpack.c.l.b16 %v1143
        %v1206 = vunpack.c.h.b16 %v1143
        %v1207 = vunpack.c.l.b16 %v1144
        %v1208 = vunpack.c.h.b16 %v1144
        %v1209 = vunpack.c.l.b16 %v1145
        %v1210 = vunpack.c.h.b16 %v1145
        %v1211 = vunpack.c.l.b16 %v1146
        %v1212 = vunpack.c.h.b16 %v1146
        %v1213 = vunpack.c.l.b16 %v1147
        %v1214 = vunpack.c.h.b16 %v1147
        %v1215 = vunpack.c.l.b16 %v1148
        %v1216 = vunpack.c.h.b16 %v1148
        %v1217 = vunpack.c.l.b16 %v1149
        %v1218 = vunpack.c.h.b16 %v1149
        %v1219 = vunpack.c.l.b16 %v1150
        %v1220 = vunpack.c.h.b16 %v1150
        %v1221 = vunpack.c.l.b16 %v1151
        %v1222 = vunpack.c.h.b16 %v1151
        %v1223 = vpack.c.b16 %v1193, %v1191
        %v1224 = vpack.c.b16 %v1194, %v1192
        %v1225 = vpack.c.b16 %v1197, %v1195
        %v1226 = vpack.c.b16 %v1198, %v1196
        %v1227 = vpack.c.b16 %v1201, %v1199
        %v1228 = vpack.c.b16 %v1202, %v1200
        %v1229 = vpack.c.b16 %v1205, %v1203
        %v1230 = vpack.c.b16 %v1206, %v1204
        %v1231 = vpack.c.b16 %v1209, %v1207
        %v1232 = vpack.c.b16 %v1210, %v1208
        %v1233 = vpack.c.b16 %v1213, %v1211
        %v1234 = vpack.c.b16 %v1214, %v1212
        %v1235 = vpack.c.b16 %v1217, %v1215
        %v1236 = vpack.c.b16 %v1218, %v1216
        %v1237 = vpack.c.b16 %v1221, %v1219
        %v1238 = vpack.c.b16 %v1222, %v1220
        %1255 = vmatprep.subr.bf16.mxu0 %v1238
        %1256 = vmatpush1.bf16.msra.mxu0 %v1237
        %1257 = vmatprep.subr.bf16.mxu0 %v1236
        %1258 = vmatpush1.bf16.msra.mxu0 %v1235
        %1259 = vmatprep.subr.bf16.mxu0 %v1234
        %1260 = vmatpush1.bf16.msra.mxu0 %v1233
        %1261 = vmatprep.subr.bf16.mxu0 %v1232
        %1262 = vmatpush1.bf16.msra.mxu0 %v1231
        %1263 = vmatprep.subr.bf16.mxu0 %v1230
        %1264 = vmatpush1.bf16.msra.mxu0 %v1229
        %1265 = vmatprep.subr.bf16.mxu0 %v1228
        %1266 = vmatpush1.bf16.msra.mxu0 %v1227
        %1267 = vmatprep.subr.bf16.mxu0 %v1226
        %1268 = vmatpush1.bf16.msra.mxu0 %v1225
        %1269 = vmatprep.subr.bf16.mxu0 %v1224
        %1270 = vmatpush1.bf16.msra.mxu0 %v1223
        %1271 = vmatprep.subr.bf16.mxu0 0
        %1272 = vmatpush2.bf16.msra.mxu0 0
        %1273 = vmatprep.subr.bf16.mxu0 0
        %1274 = vmatpush2.bf16.msra.mxu0 0
        %1275 = vmatprep.subr.bf16.mxu0 0
        %1276 = vmatpush2.bf16.msra.mxu0 0
        %1277 = vmatprep.subr.bf16.mxu0 0
        %1278 = vmatpush2.bf16.msra.mxu0 0
        %1279 = vmatprep.subr.bf16.mxu0 0
        %1280 = vmatpush2.bf16.msra.mxu0 0
        %1281 = vmatprep.subr.bf16.mxu0 0
        %1282 = vmatpush2.bf16.msra.mxu0 0
        %1283 = vmatprep.subr.bf16.mxu0 0
        %1284 = vmatpush2.bf16.msra.mxu0 0
        %1285 = vmatprep.subr.bf16.mxu0 0
        %1286 = vmatpush2.bf16.msra.mxu0 0
        %1287 = vmatprep.mubr.bf16.mxu0 0
        %1288 = vmatmul.mubr.bf16.gmra.mxu0 %v1172
        %v1289 = vpop.f32.mrf.mxu0
        %v1290 = vadd.f32 0.0, %v1289
        %v1291 = vpop.f32.mrf.mxu0
        %v1292 = vadd.f32 0.0, %v1291
        %v1293 = vpop.f32.mrf.mxu0
        %v1294 = vadd.f32 0.0, %v1293
        %v1295 = vpop.f32.mrf.mxu0
        %v1296 = vadd.f32 0.0, %v1295
        %1297 = vmatprep.mubr.bf16.mxu0 0
        %1298 = vmatmul.mubr.bf16.gmra.mxu0 %v1171
        %v1299 = vpop.f32.mrf.mxu0
        %v1300 = vadd.f32 0.0, %v1299
        %v1301 = vpop.f32.mrf.mxu0
        %v1302 = vadd.f32 0.0, %v1301
        %v1303 = vpop.f32.mrf.mxu0
        %v1304 = vadd.f32 0.0, %v1303
        %v1305 = vpop.f32.mrf.mxu0
        %v1306 = vadd.f32 0.0, %v1305
        %1307 = vdwg.mxu0
        %v1308 = vadd.f32 %v1126, %v1290
        %v1309 = vadd.f32 %v1127, %v1292
        %v1310 = vadd.f32 %v1128, %v1294
        %v1311 = vadd.f32 %v1129, %v1296
        %v1312 = vadd.f32 %v1130, %v1300
        %v1313 = vadd.f32 %v1131, %v1302
        %v1314 = vadd.f32 %v1132, %v1304
        %v1315 = vadd.f32 %v1133, %v1306
        %v1316 = vld [vmem:[%s550] sm:$0xc]
        %s1317 = scalar_lea.vmem [#allocation7], 512
        %v1318 = vld [vmem:[%s1317] sm:$0xff]
        %v1319 = vld [vmem:[%s1317 + $0x8] sm:$0xff]
        %v1320 = vld [vmem:[%s1317 + $0x10] sm:$0xff]
        %v1321 = vld [vmem:[%s1317 + $0x18] sm:$0xff]
        %v1322 = vld [vmem:[%s1317 + $0x20] sm:$0xff]
        %v1323 = vld [vmem:[%s1317 + $0x28] sm:$0xff]
        %v1324 = vld [vmem:[%s1317 + $0x30] sm:$0xff]
        %v1325 = vld [vmem:[%s1317 + $0x38] sm:$0xff]
        %v1326 = vld [vmem:[%s1317 + $0x40] sm:$0xff]
        %v1327 = vld [vmem:[%s1317 + $0x48] sm:$0xff]
        %v1328 = vld [vmem:[%s1317 + $0x50] sm:$0xff]
        %v1329 = vld [vmem:[%s1317 + $0x58] sm:$0xff]
        %v1330 = vld [vmem:[%s1317 + $0x60] sm:$0xff]
        %v1331 = vld [vmem:[%s1317 + $0x68] sm:$0xff]
        %v1332 = vld [vmem:[%s1317 + $0x70] sm:$0xff]
        %v1333 = vld [vmem:[%s1317 + $0x78] sm:$0xff]
        %v1335 = vunpack.c.l.b16 %v1316
        %v1336 = vpack.c.b16 %v672, %v1335
        %vm1337 = vcmask 1045504
        %v1338 = vrot.slane %v1336, 2
        %v1339 = vrot.slane %v1154, 2
        %v1340 = vsel %vm1337, %v1338, %v1339
        %v1359 = vunpack.c.l.b16 %v1318
        %v1360 = vunpack.c.h.b16 %v1318
        %v1361 = vunpack.c.l.b16 %v1319
        %v1362 = vunpack.c.h.b16 %v1319
        %v1363 = vunpack.c.l.b16 %v1320
        %v1364 = vunpack.c.h.b16 %v1320
        %v1365 = vunpack.c.l.b16 %v1321
        %v1366 = vunpack.c.h.b16 %v1321
        %v1367 = vunpack.c.l.b16 %v1322
        %v1368 = vunpack.c.h.b16 %v1322
        %v1369 = vunpack.c.l.b16 %v1323
        %v1370 = vunpack.c.h.b16 %v1323
        %v1371 = vunpack.c.l.b16 %v1324
        %v1372 = vunpack.c.h.b16 %v1324
        %v1373 = vunpack.c.l.b16 %v1325
        %v1374 = vunpack.c.h.b16 %v1325
        %v1375 = vunpack.c.l.b16 %v1326
        %v1376 = vunpack.c.h.b16 %v1326
        %v1377 = vunpack.c.l.b16 %v1327
        %v1378 = vunpack.c.h.b16 %v1327
        %v1379 = vunpack.c.l.b16 %v1328
        %v1380 = vunpack.c.h.b16 %v1328
        %v1381 = vunpack.c.l.b16 %v1329
        %v1382 = vunpack.c.h.b16 %v1329
        %v1383 = vunpack.c.l.b16 %v1330
        %v1384 = vunpack.c.h.b16 %v1330
        %v1385 = vunpack.c.l.b16 %v1331
        %v1386 = vunpack.c.h.b16 %v1331
        %v1387 = vunpack.c.l.b16 %v1332
        %v1388 = vunpack.c.h.b16 %v1332
        %v1389 = vunpack.c.l.b16 %v1333
        %v1390 = vunpack.c.h.b16 %v1333
        %v1391 = vpack.c.b16 %v1361, %v1359
        %v1392 = vpack.c.b16 %v1362, %v1360
        %v1393 = vpack.c.b16 %v1365, %v1363
        %v1394 = vpack.c.b16 %v1366, %v1364
        %v1395 = vpack.c.b16 %v1369, %v1367
        %v1396 = vpack.c.b16 %v1370, %v1368
        %v1397 = vpack.c.b16 %v1373, %v1371
        %v1398 = vpack.c.b16 %v1374, %v1372
        %v1399 = vpack.c.b16 %v1377, %v1375
        %v1400 = vpack.c.b16 %v1378, %v1376
        %v1401 = vpack.c.b16 %v1381, %v1379
        %v1402 = vpack.c.b16 %v1382, %v1380
        %v1403 = vpack.c.b16 %v1385, %v1383
        %v1404 = vpack.c.b16 %v1386, %v1384
        %v1405 = vpack.c.b16 %v1389, %v1387
        %v1406 = vpack.c.b16 %v1390, %v1388
        %1423 = vmatprep.subr.bf16.mxu0 %v1406
        %1424 = vmatpush1.bf16.msra.mxu0 %v1405
        %1425 = vmatprep.subr.bf16.mxu0 %v1404
        %1426 = vmatpush1.bf16.msra.mxu0 %v1403
        %1427 = vmatprep.subr.bf16.mxu0 %v1402
        %1428 = vmatpush1.bf16.msra.mxu0 %v1401
        %1429 = vmatprep.subr.bf16.mxu0 %v1400
        %1430 = vmatpush1.bf16.msra.mxu0 %v1399
        %1431 = vmatprep.subr.bf16.mxu0 %v1398
        %1432 = vmatpush1.bf16.msra.mxu0 %v1397
        %1433 = vmatprep.subr.bf16.mxu0 %v1396
        %1434 = vmatpush1.bf16.msra.mxu0 %v1395
        %1435 = vmatprep.subr.bf16.mxu0 %v1394
        %1436 = vmatpush1.bf16.msra.mxu0 %v1393
        %1437 = vmatprep.subr.bf16.mxu0 %v1392
        %1438 = vmatpush1.bf16.msra.mxu0 %v1391
        %1439 = vmatprep.subr.bf16.mxu0 0
        %1440 = vmatpush2.bf16.msra.mxu0 0
        %1441 = vmatprep.subr.bf16.mxu0 0
        %1442 = vmatpush2.bf16.msra.mxu0 0
        %1443 = vmatprep.subr.bf16.mxu0 0
        %1444 = vmatpush2.bf16.msra.mxu0 0
        %1445 = vmatprep.subr.bf16.mxu0 0
        %1446 = vmatpush2.bf16.msra.mxu0 0
        %1447 = vmatprep.subr.bf16.mxu0 0
        %1448 = vmatpush2.bf16.msra.mxu0 0
        %1449 = vmatprep.subr.bf16.mxu0 0
        %1450 = vmatpush2.bf16.msra.mxu0 0
        %1451 = vmatprep.subr.bf16.mxu0 0
        %1452 = vmatpush2.bf16.msra.mxu0 0
        %1453 = vmatprep.subr.bf16.mxu0 0
        %1454 = vmatpush2.bf16.msra.mxu0 0
        %1455 = vmatprep.mubr.bf16.mxu0 0
        %1456 = vmatmul.mubr.bf16.gmra.mxu0 %v1340
        %v1457 = vpop.f32.mrf.mxu0
        %v1458 = vadd.f32 0.0, %v1457
        %v1459 = vpop.f32.mrf.mxu0
        %v1460 = vadd.f32 0.0, %v1459
        %v1461 = vpop.f32.mrf.mxu0
        %v1462 = vadd.f32 0.0, %v1461
        %v1463 = vpop.f32.mrf.mxu0
        %v1464 = vadd.f32 0.0, %v1463
        %1465 = vmatprep.mubr.bf16.mxu0 0
        %1466 = vmatmul.mubr.bf16.gmra.mxu0 %v1339
        %v1467 = vpop.f32.mrf.mxu0
        %v1468 = vadd.f32 0.0, %v1467
        %v1469 = vpop.f32.mrf.mxu0
        %v1470 = vadd.f32 0.0, %v1469
        %v1471 = vpop.f32.mrf.mxu0
        %v1472 = vadd.f32 0.0, %v1471
        %v1473 = vpop.f32.mrf.mxu0
        %v1474 = vadd.f32 0.0, %v1473
        %1475 = vdwg.mxu0
        %v1476 = vadd.f32 %v1308, %v1458
        %v1477 = vadd.f32 %v1309, %v1460
        %v1478 = vadd.f32 %v1310, %v1462
        %v1479 = vadd.f32 %v1311, %v1464
        %v1480 = vadd.f32 %v1312, %v1468
        %v1481 = vadd.f32 %v1313, %v1470
        %v1482 = vadd.f32 %v1314, %v1472
        %v1483 = vadd.f32 %v1315, %v1474
        %v1484 = vld [vmem:[%s2] sm:$0x3]
        %v1486 = vlaneseq
        %v1487 = vshrl.u32 %v1486, 7
        %v1488 = vsub.s32 0, %v1487
        %v1489 = vrot.slane %v1484, %v1488
        %v1490 = vlaneseq
        %v1491 = vshrl.u32 %v1490, 7
        %v1492 = vsub.s32 1, %v1491
        %v1493 = vrot.slane %v1484, %v1492
        %v1496 = vadd.f32 %v1476, %v1489
        %v1497 = vadd.f32 %v1477, %v1493
        %v1498 = vadd.f32 %v1478, %v1489
        %v1499 = vadd.f32 %v1479, %v1493
        %v1500 = vadd.f32 %v1480, %v1489
        %v1501 = vadd.f32 %v1481, %v1493
        %v1502 = vadd.f32 %v1482, %v1489
        %v1503 = vadd.f32 %v1483, %v1493
        %v1504 = vsub.f32 0.0, %v1496
        %v1505 = vsub.f32 0.0, %v1497
        %v1506 = vsub.f32 0.0, %v1498
        %v1507 = vsub.f32 0.0, %v1499
        %v1508 = vsub.f32 0.0, %v1500
        %v1509 = vsub.f32 0.0, %v1501
        %v1510 = vsub.f32 0.0, %v1502
        %v1511 = vsub.f32 0.0, %v1503
        %v1512 = vmul.f32 %v1504, 1.442695
        %v1513 = vpow.pop %v1512
        %v1514 = vmul.f32 %v1505, 1.442695
        %v1515 = vpow.pop %v1514
        %v1516 = vmul.f32 %v1506, 1.442695
        %v1517 = vpow.pop %v1516
        %v1518 = vmul.f32 %v1507, 1.442695
        %v1519 = vpow.pop %v1518
        %v1520 = vmul.f32 %v1508, 1.442695
        %v1521 = vpow.pop %v1520
        %v1522 = vmul.f32 %v1509, 1.442695
        %v1523 = vpow.pop %v1522
        %v1524 = vmul.f32 %v1510, 1.442695
        %v1525 = vpow.pop %v1524
        %v1526 = vmul.f32 %v1511, 1.442695
        %v1527 = vpow.pop %v1526
        %v1528 = vadd.f32 %v1513, 1.0
        %v1529 = vadd.f32 %v1515, 1.0
        %v1530 = vadd.f32 %v1517, 1.0
        %v1531 = vadd.f32 %v1519, 1.0
        %v1532 = vadd.f32 %v1521, 1.0
        %v1533 = vadd.f32 %v1523, 1.0
        %v1534 = vadd.f32 %v1525, 1.0
        %v1535 = vadd.f32 %v1527, 1.0
        %v1536 = vrcp.pop %v1528
        %v1537 = vrcp.pop %v1529
        %v1538 = vrcp.pop %v1530
        %v1539 = vrcp.pop %v1531
        %v1540 = vrcp.pop %v1532
        %v1541 = vrcp.pop %v1533
        %v1542 = vrcp.pop %v1534
        %v1543 = vrcp.pop %v1535
        %v1544 = vpack.c.bf16 %v1538, %v1536
        %v1545 = vpack.c.bf16 %v1539, %v1537
        %v1546 = vpack.c.bf16 %v1542, %v1540
        %v1547 = vpack.c.bf16 %v1543, %v1541
        %v1548 = vld [vmem:[#allocation9] sm:$0xf]
        %v1549 = vld [vmem:[#allocation9 + $0x4] sm:$0xf]
        %v1552 = vunpack.c.l.b16 %v1548
        %v1553 = vunpack.c.l.b16 %v1549
        %v1554 = vpack.c.b16 %v1553, %v1552
        %vm1555 = vcmask 228352
        %v1557 = vsel %vm1555, %v1554, 0
        %vm1559 = vcmask 1045504
        %v1561 = vsel %vm1559, %v1546, 0
        %v1564 = vsel %vm1559, %v1547, 0
        %1566 = vmatprep.subr.bf16.mxu0 0
        %1567 = vmatpush1.bf16.msra.mxu0 0
        %1568 = vmatprep.subr.bf16.mxu0 0
        %1569 = vmatpush1.bf16.msra.mxu0 0
        %1570 = vmatprep.subr.bf16.mxu0 0
        %1571 = vmatpush1.bf16.msra.mxu0 0
        %1572 = vmatprep.subr.bf16.mxu0 0
        %1573 = vmatpush1.bf16.msra.mxu0 0
        %1574 = vmatprep.subr.bf16.mxu0 0
        %1575 = vmatpush1.bf16.msra.mxu0 0
        %1576 = vmatprep.subr.bf16.mxu0 0
        %1577 = vmatpush1.bf16.msra.mxu0 0
        %1578 = vmatprep.subr.bf16.mxu0 %v1564
        %1579 = vmatpush1.bf16.msra.mxu0 %v1561
        %1580 = vmatprep.subr.bf16.mxu0 %v1545
        %1581 = vmatpush1.bf16.msra.mxu0 %v1544
        %1582 = vmatprep.subr.bf16.mxu0 0
        %1583 = vmatpush2.bf16.msra.mxu0 0
        %1584 = vmatprep.subr.bf16.mxu0 0
        %1585 = vmatpush2.bf16.msra.mxu0 0
        %1586 = vmatprep.subr.bf16.mxu0 0
        %1587 = vmatpush2.bf16.msra.mxu0 0
        %1588 = vmatprep.subr.bf16.mxu0 0
        %1589 = vmatpush2.bf16.msra.mxu0 0
        %1590 = vmatprep.subr.bf16.mxu0 0
        %1591 = vmatpush2.bf16.msra.mxu0 0
        %1592 = vmatprep.subr.bf16.mxu0 0
        %1593 = vmatpush2.bf16.msra.mxu0 0
        %1594 = vmatprep.subr.bf16.mxu0 0
        %1595 = vmatpush2.bf16.msra.mxu0 0
        %1596 = vmatprep.subr.bf16.mxu0 0
        %1597 = vmatpush2.bf16.msra.mxu0 0
        %1598 = vmatprep.mubr.bf16.mxu0 0
        %1599 = vmatmul.mubr.bf16.gmra.mxu0 %v1557
        %v1600 = vpop.f32.mrf.mxu0
        %v1601 = vadd.f32 0.0, %v1600
        %v1602 = vpop.f32.mrf.mxu0
        %v1603 = vadd.f32 0.0, %v1602
        %v1604 = vpop.f32.mrf.mxu0
        %v1605 = vadd.f32 0.0, %v1604
        %v1606 = vpop.f32.mrf.mxu0
        %v1607 = vadd.f32 0.0, %v1606
        %1608 = vdwg.mxu0
        %v1609 = vpack.c.bf16 %v1605, %v1601
        %v1610 = vpack.c.bf16 %v1607, %v1603
        %v1611 = vld [vmem:[#allocation10] sm:$0xf]
        %v1612 = vld [vmem:[#allocation10 + $0x4] sm:$0xf]
        %v1613 = vld [vmem:[#allocation10 + $0x8] sm:$0xf]
        %v1614 = vld [vmem:[#allocation10 + $0xc] sm:$0xf]
        %v1615 = vld [vmem:[#allocation10 + $0x10] sm:$0xf]
        %v1616 = vld [vmem:[#allocation10 + $0x14] sm:$0xf]
        %v1617 = vld [vmem:[#allocation10 + $0x18] sm:$0xf]
        %v1618 = vld [vmem:[#allocation10 + $0x1c] sm:$0xf]
        %v1619 = vld [vmem:[#allocation10 + $0x20] sm:$0xf]
        %v1620 = vld [vmem:[#allocation10 + $0x24] sm:$0xf]
        %v1621 = vld [vmem:[#allocation10 + $0x28] sm:$0xf]
        %v1622 = vld [vmem:[#allocation10 + $0x2c] sm:$0xf]
        %v1623 = vld [vmem:[#allocation10 + $0x30] sm:$0xf]
        %v1624 = vld [vmem:[#allocation10 + $0x34] sm:$0xf]
        %v1625 = vld [vmem:[#allocation10 + $0x38] sm:$0xf]
        %v1626 = vld [vmem:[#allocation10 + $0x3c] sm:$0xf]
        %v1627 = vld [vmem:[#allocation10 + $0x40] sm:$0xf]
        %v1628 = vld [vmem:[#allocation10 + $0x44] sm:$0xf]
        %v1629 = vld [vmem:[#allocation10 + $0x48] sm:$0xf]
        %v1630 = vld [vmem:[#allocation10 + $0x4c] sm:$0xf]
        %v1631 = vld [vmem:[#allocation10 + $0x50] sm:$0xf]
        %v1632 = vld [vmem:[#allocation10 + $0x54] sm:$0xf]
        %v1633 = vld [vmem:[#allocation10 + $0x58] sm:$0xf]
        %v1634 = vld [vmem:[#allocation10 + $0x5c] sm:$0xf]
        %v1635 = vld [vmem:[#allocation10 + $0x60] sm:$0xf]
        %v1636 = vld [vmem:[#allocation10 + $0x64] sm:$0xf]
        %v1637 = vld [vmem:[#allocation10 + $0x68] sm:$0xf]
        %v1638 = vld [vmem:[#allocation10 + $0x6c] sm:$0xf]
        %v1639 = vld [vmem:[#allocation10 + $0x70] sm:$0xf]
        %v1640 = vld [vmem:[#allocation10 + $0x74] sm:$0xf]
        %v1641 = vld [vmem:[#allocation10 + $0x78] sm:$0xf]
        %v1642 = vld [vmem:[#allocation10 + $0x7c] sm:$0xf]
        %v1675 = vunpack.c.l.b16 %v1611
        %v1676 = vunpack.c.l.b16 %v1612
        %v1677 = vunpack.c.l.b16 %v1613
        %v1678 = vunpack.c.l.b16 %v1614
        %v1679 = vunpack.c.l.b16 %v1615
        %v1680 = vunpack.c.l.b16 %v1616
        %v1681 = vunpack.c.l.b16 %v1617
        %v1682 = vunpack.c.l.b16 %v1618
        %v1683 = vunpack.c.l.b16 %v1619
        %v1684 = vunpack.c.l.b16 %v1620
        %v1685 = vunpack.c.l.b16 %v1621
        %v1686 = vunpack.c.l.b16 %v1622
        %v1687 = vunpack.c.l.b16 %v1623
        %v1688 = vunpack.c.l.b16 %v1624
        %v1689 = vunpack.c.l.b16 %v1625
        %v1690 = vunpack.c.l.b16 %v1626
        %v1691 = vunpack.c.l.b16 %v1627
        %v1692 = vunpack.c.l.b16 %v1628
        %v1693 = vunpack.c.l.b16 %v1629
        %v1694 = vunpack.c.l.b16 %v1630
        %v1695 = vunpack.c.l.b16 %v1631
        %v1696 = vunpack.c.l.b16 %v1632
        %v1697 = vunpack.c.l.b16 %v1633
        %v1698 = vunpack.c.l.b16 %v1634
        %v1699 = vunpack.c.l.b16 %v1635
        %v1700 = vunpack.c.l.b16 %v1636
        %v1701 = vunpack.c.l.b16 %v1637
        %v1702 = vunpack.c.l.b16 %v1638
        %v1703 = vunpack.c.l.b16 %v1639
        %v1704 = vunpack.c.l.b16 %v1640
        %v1705 = vunpack.c.l.b16 %v1641
        %v1706 = vunpack.c.l.b16 %v1642
        %v1707 = vpack.c.b16 %v1676, %v1675
        %v1708 = vpack.c.b16 %v1678, %v1677
        %v1709 = vpack.c.b16 %v1680, %v1679
        %v1710 = vpack.c.b16 %v1682, %v1681
        %v1711 = vpack.c.b16 %v1684, %v1683
        %v1712 = vpack.c.b16 %v1686, %v1685
        %v1713 = vpack.c.b16 %v1688, %v1687
        %v1714 = vpack.c.b16 %v1690, %v1689
        %v1715 = vpack.c.b16 %v1692, %v1691
        %v1716 = vpack.c.b16 %v1694, %v1693
        %v1717 = vpack.c.b16 %v1696, %v1695
        %v1718 = vpack.c.b16 %v1698, %v1697
        %v1719 = vpack.c.b16 %v1700, %v1699
        %v1720 = vpack.c.b16 %v1702, %v1701
        %v1721 = vpack.c.b16 %v1704, %v1703
        %v1722 = vpack.c.b16 %v1706, %v1705
        %1739 = vmatprep.subr.bf16.mxu0 0
        %1740 = vmatpush1.bf16.msra.mxu0 %v1714
        %1741 = vmatprep.subr.bf16.mxu0 0
        %1742 = vmatpush1.bf16.msra.mxu0 %v1713
        %1743 = vmatprep.subr.bf16.mxu0 0
        %1744 = vmatpush1.bf16.msra.mxu0 %v1712
        %1745 = vmatprep.subr.bf16.mxu0 0
        %1746 = vmatpush1.bf16.msra.mxu0 %v1711
        %1747 = vmatprep.subr.bf16.mxu0 0
        %1748 = vmatpush1.bf16.msra.mxu0 %v1710
        %1749 = vmatprep.subr.bf16.mxu0 0
        %1750 = vmatpush1.bf16.msra.mxu0 %v1709
        %1751 = vmatprep.subr.bf16.mxu0 0
        %1752 = vmatpush1.bf16.msra.mxu0 %v1708
        %1753 = vmatprep.subr.bf16.mxu0 0
        %1754 = vmatpush1.bf16.msra.mxu0 %v1707
        %1755 = vmatprep.subr.bf16.mxu0 0
        %1756 = vmatpush2.bf16.msra.mxu0 %v1722
        %1757 = vmatprep.subr.bf16.mxu0 0
        %1758 = vmatpush2.bf16.msra.mxu0 %v1721
        %1759 = vmatprep.subr.bf16.mxu0 0
        %1760 = vmatpush2.bf16.msra.mxu0 %v1720
        %1761 = vmatprep.subr.bf16.mxu0 0
        %1762 = vmatpush2.bf16.msra.mxu0 %v1719
        %1763 = vmatprep.subr.bf16.mxu0 0
        %1764 = vmatpush2.bf16.msra.mxu0 %v1718
        %1765 = vmatprep.subr.bf16.mxu0 0
        %1766 = vmatpush2.bf16.msra.mxu0 %v1717
        %1767 = vmatprep.subr.bf16.mxu0 0
        %1768 = vmatpush2.bf16.msra.mxu0 %v1716
        %1769 = vmatprep.subr.bf16.mxu0 0
        %1770 = vmatpush2.bf16.msra.mxu0 %v1715
        %1771 = vmatprep.mubr.bf16.mxu0 %v1610
        %1772 = vmatmul.mubr.bf16.gmra.mxu0 %v1609
        %v1773 = vpop.f32.mrf.mxu0
        %v1774 = vadd.f32 0.0, %v1773
        %v1775 = vpop.f32.mrf.mxu0
        %v1776 = vpop.f32.mrf.mxu0
        %v1777 = vadd.f32 0.0, %v1776
        %v1778 = vpop.f32.mrf.mxu0
        %1779 = vdwg.mxu0
        %v1780 = vpack.c.bf16 %v1777, %v1774
        %v1782 = vunpack.c.l.b16 %v1780
        %v1783 = vunpack.c.h.b16 %v1780
        %v1784 = vpack.c.b16 %v1782, %v1782
        %v1785 = vpack.c.b16 %v1783, %v1783
        %1788 = vst [vmem:[#allocation2] sm:$0xf] %v1784
        %1789 = vst [vmem:[#allocation2 + $0x4] sm:$0xf] %v1785
        %v1790 = vld [vmem:[#allocation2] sm:$0xf]
        %v1791 = vld [vmem:[#allocation2 + $0x4] sm:$0x1]
        %v1792 = vld [vmem:[#allocation12] sm:$0xff]
        %v1793 = vld [vmem:[#allocation12 + $0x8] sm:$0xff]
        %v1794 = vld [vmem:[#allocation12 + $0x10] sm:$0xff]
        %v1795 = vld [vmem:[#allocation12 + $0x18] sm:$0xff]
        %v1796 = vld [vmem:[#allocation12 + $0x20] sm:$0xff]
        %v1797 = vld [vmem:[#allocation12 + $0x28] sm:$0xff]
        %v1798 = vld [vmem:[#allocation12 + $0x30] sm:$0xff]
        %v1799 = vld [vmem:[#allocation12 + $0x38] sm:$0xff]
        %v1800 = vld [vmem:[#allocation12 + $0x40] sm:$0xff]
        %v1801 = vld [vmem:[#allocation12 + $0x48] sm:$0xff]
        %v1802 = vld [vmem:[#allocation12 + $0x50] sm:$0xff]
        %v1803 = vld [vmem:[#allocation12 + $0x58] sm:$0xff]
        %v1804 = vld [vmem:[#allocation12 + $0x60] sm:$0xff]
        %v1805 = vld [vmem:[#allocation12 + $0x68] sm:$0xff]
        %v1806 = vld [vmem:[#allocation12 + $0x70] sm:$0xff]
        %v1807 = vld [vmem:[#allocation12 + $0x78] sm:$0xff]
        %v1808 = vld [vmem:[#allocation2 + $0x4] sm:$0x3]
        %s1809 = scalar_lea.vmem [#allocation12], 128
        %v1810 = vld [vmem:[%s1809] sm:$0xff]
        %v1811 = vld [vmem:[%s1809 + $0x8] sm:$0xff]
        %v1812 = vld [vmem:[%s1809 + $0x10] sm:$0xff]
        %v1813 = vld [vmem:[%s1809 + $0x18] sm:$0xff]
        %v1814 = vld [vmem:[%s1809 + $0x20] sm:$0xff]
        %v1815 = vld [vmem:[%s1809 + $0x28] sm:$0xff]
        %v1816 = vld [vmem:[%s1809 + $0x30] sm:$0xff]
        %v1817 = vld [vmem:[%s1809 + $0x38] sm:$0xff]
        %v1818 = vld [vmem:[%s1809 + $0x40] sm:$0xff]
        %v1819 = vld [vmem:[%s1809 + $0x48] sm:$0xff]
        %v1820 = vld [vmem:[%s1809 + $0x50] sm:$0xff]
        %v1821 = vld [vmem:[%s1809 + $0x58] sm:$0xff]
        %v1822 = vld [vmem:[%s1809 + $0x60] sm:$0xff]
        %v1823 = vld [vmem:[%s1809 + $0x68] sm:$0xff]
        %v1824 = vld [vmem:[%s1809 + $0x70] sm:$0xff]
        %v1825 = vld [vmem:[%s1809 + $0x78] sm:$0xff]
        %v1828 = vunpack.c.l.b16 %v1790
        %v1829 = vunpack.c.l.b16 %v1808
        %v1830 = vpack.c.b16 %v1829, %v1828
        %v1832 = vshrl.u32 %v1830, 16
        %v1834 = vshll.u32 %v1830, 16
        %v1836 = vrot.slane %v1834, 1
        %v1837 = vor.u32 %v1832, %v1836
        %v1855 = vunpack.c.l.b16 %v1810
        %v1856 = vunpack.c.h.b16 %v1810
        %v1857 = vunpack.c.l.b16 %v1811
        %v1858 = vunpack.c.h.b16 %v1811
        %v1859 = vunpack.c.l.b16 %v1812
        %v1860 = vunpack.c.h.b16 %v1812
        %v1861 = vunpack.c.l.b16 %v1813
        %v1862 = vunpack.c.h.b16 %v1813
        %v1863 = vunpack.c.l.b16 %v1814
        %v1864 = vunpack.c.h.b16 %v1814
        %v1865 = vunpack.c.l.b16 %v1815
        %v1866 = vunpack.c.h.b16 %v1815
        %v1867 = vunpack.c.l.b16 %v1816
        %v1868 = vunpack.c.h.b16 %v1816
        %v1869 = vunpack.c.l.b16 %v1817
        %v1870 = vunpack.c.h.b16 %v1817
        %v1871 = vunpack.c.l.b16 %v1818
        %v1872 = vunpack.c.h.b16 %v1818
        %v1873 = vunpack.c.l.b16 %v1819
        %v1874 = vunpack.c.h.b16 %v1819
        %v1875 = vunpack.c.l.b16 %v1820
        %v1876 = vunpack.c.h.b16 %v1820
        %v1877 = vunpack.c.l.b16 %v1821
        %v1878 = vunpack.c.h.b16 %v1821
        %v1879 = vunpack.c.l.b16 %v1822
        %v1880 = vunpack.c.h.b16 %v1822
        %v1881 = vunpack.c.l.b16 %v1823
        %v1882 = vunpack.c.h.b16 %v1823
        %v1883 = vunpack.c.l.b16 %v1824
        %v1884 = vunpack.c.h.b16 %v1824
        %v1885 = vunpack.c.l.b16 %v1825
        %v1886 = vunpack.c.h.b16 %v1825
        %v1887 = vpack.c.b16 %v1857, %v1855
        %v1888 = vpack.c.b16 %v1858, %v1856
        %v1889 = vpack.c.b16 %v1861, %v1859
        %v1890 = vpack.c.b16 %v1862, %v1860
        %v1891 = vpack.c.b16 %v1865, %v1863
        %v1892 = vpack.c.b16 %v1866, %v1864
        %v1893 = vpack.c.b16 %v1869, %v1867
        %v1894 = vpack.c.b16 %v1870, %v1868
        %v1895 = vpack.c.b16 %v1873, %v1871
        %v1896 = vpack.c.b16 %v1874, %v1872
        %v1897 = vpack.c.b16 %v1877, %v1875
        %v1898 = vpack.c.b16 %v1878, %v1876
        %v1899 = vpack.c.b16 %v1881, %v1879
        %v1900 = vpack.c.b16 %v1882, %v1880
        %v1901 = vpack.c.b16 %v1885, %v1883
        %v1902 = vpack.c.b16 %v1886, %v1884
        %1919 = vmatprep.subr.bf16.mxu0 %v1902
        %1920 = vmatpush1.bf16.msra.mxu0 %v1901
        %1921 = vmatprep.subr.bf16.mxu0 %v1900
        %1922 = vmatpush1.bf16.msra.mxu0 %v1899
        %1923 = vmatprep.subr.bf16.mxu0 %v1898
        %1924 = vmatpush1.bf16.msra.mxu0 %v1897
        %1925 = vmatprep.subr.bf16.mxu0 %v1896
        %1926 = vmatpush1.bf16.msra.mxu0 %v1895
        %1927 = vmatprep.subr.bf16.mxu0 %v1894
        %1928 = vmatpush1.bf16.msra.mxu0 %v1893
        %1929 = vmatprep.subr.bf16.mxu0 %v1892
        %1930 = vmatpush1.bf16.msra.mxu0 %v1891
        %1931 = vmatprep.subr.bf16.mxu0 %v1890
        %1932 = vmatpush1.bf16.msra.mxu0 %v1889
        %1933 = vmatprep.subr.bf16.mxu0 %v1888
        %1934 = vmatpush1.bf16.msra.mxu0 %v1887
        %1935 = vmatprep.subr.bf16.mxu0 0
        %1936 = vmatpush2.bf16.msra.mxu0 0
        %1937 = vmatprep.subr.bf16.mxu0 0
        %1938 = vmatpush2.bf16.msra.mxu0 0
        %1939 = vmatprep.subr.bf16.mxu0 0
        %1940 = vmatpush2.bf16.msra.mxu0 0
        %1941 = vmatprep.subr.bf16.mxu0 0
        %1942 = vmatpush2.bf16.msra.mxu0 0
        %1943 = vmatprep.subr.bf16.mxu0 0
        %1944 = vmatpush2.bf16.msra.mxu0 0
        %1945 = vmatprep.subr.bf16.mxu0 0
        %1946 = vmatpush2.bf16.msra.mxu0 0
        %1947 = vmatprep.subr.bf16.mxu0 0
        %1948 = vmatpush2.bf16.msra.mxu0 0
        %1949 = vmatprep.subr.bf16.mxu0 0
        %1950 = vmatpush2.bf16.msra.mxu0 0
        %1951 = vmatprep.mubr.bf16.mxu0 0
        %1952 = vmatmul.mubr.bf16.gmra.mxu0 %v1837
        %v1953 = vpop.f32.mrf.mxu0
        %v1954 = vadd.f32 0.0, %v1953
        %v1955 = vpop.f32.mrf.mxu0
        %v1956 = vadd.f32 0.0, %v1955
        %v1957 = vpop.f32.mrf.mxu0
        %v1958 = vadd.f32 0.0, %v1957
        %v1959 = vpop.f32.mrf.mxu0
        %v1960 = vadd.f32 0.0, %v1959
        %1961 = vdwg.mxu0
        %v1963 = vunpack.c.l.b16 %v1791
        %v1964 = vpack.c.b16 %v1963, %v1828
        %v1982 = vunpack.c.l.b16 %v1792
        %v1983 = vunpack.c.h.b16 %v1792
        %v1984 = vunpack.c.l.b16 %v1793
        %v1985 = vunpack.c.h.b16 %v1793
        %v1986 = vunpack.c.l.b16 %v1794
        %v1987 = vunpack.c.h.b16 %v1794
        %v1988 = vunpack.c.l.b16 %v1795
        %v1989 = vunpack.c.h.b16 %v1795
        %v1990 = vunpack.c.l.b16 %v1796
        %v1991 = vunpack.c.h.b16 %v1796
        %v1992 = vunpack.c.l.b16 %v1797
        %v1993 = vunpack.c.h.b16 %v1797
        %v1994 = vunpack.c.l.b16 %v1798
        %v1995 = vunpack.c.h.b16 %v1798
        %v1996 = vunpack.c.l.b16 %v1799
        %v1997 = vunpack.c.h.b16 %v1799
        %v1998 = vunpack.c.l.b16 %v1800
        %v1999 = vunpack.c.h.b16 %v1800
        %v2000 = vunpack.c.l.b16 %v1801
        %v2001 = vunpack.c.h.b16 %v1801
        %v2002 = vunpack.c.l.b16 %v1802
        %v2003 = vunpack.c.h.b16 %v1802
        %v2004 = vunpack.c.l.b16 %v1803
        %v2005 = vunpack.c.h.b16 %v1803
        %v2006 = vunpack.c.l.b16 %v1804
        %v2007 = vunpack.c.h.b16 %v1804
        %v2008 = vunpack.c.l.b16 %v1805
        %v2009 = vunpack.c.h.b16 %v1805
        %v2010 = vunpack.c.l.b16 %v1806
        %v2011 = vunpack.c.h.b16 %v1806
        %v2012 = vunpack.c.l.b16 %v1807
        %v2013 = vunpack.c.h.b16 %v1807
        %v2014 = vpack.c.b16 %v1984, %v1982
        %v2015 = vpack.c.b16 %v1985, %v1983
        %v2016 = vpack.c.b16 %v1988, %v1986
        %v2017 = vpack.c.b16 %v1989, %v1987
        %v2018 = vpack.c.b16 %v1992, %v1990
        %v2019 = vpack.c.b16 %v1993, %v1991
        %v2020 = vpack.c.b16 %v1996, %v1994
        %v2021 = vpack.c.b16 %v1997, %v1995
        %v2022 = vpack.c.b16 %v2000, %v1998
        %v2023 = vpack.c.b16 %v2001, %v1999
        %v2024 = vpack.c.b16 %v2004, %v2002
        %v2025 = vpack.c.b16 %v2005, %v2003
        %v2026 = vpack.c.b16 %v2008, %v2006
        %v2027 = vpack.c.b16 %v2009, %v2007
        %v2028 = vpack.c.b16 %v2012, %v2010
        %v2029 = vpack.c.b16 %v2013, %v2011
        %2046 = vmatprep.subr.bf16.mxu0 %v2029
        %2047 = vmatpush1.bf16.msra.mxu0 %v2028
        %2048 = vmatprep.subr.bf16.mxu0 %v2027
        %2049 = vmatpush1.bf16.msra.mxu0 %v2026
        %2050 = vmatprep.subr.bf16.mxu0 %v2025
        %2051 = vmatpush1.bf16.msra.mxu0 %v2024
        %2052 = vmatprep.subr.bf16.mxu0 %v2023
        %2053 = vmatpush1.bf16.msra.mxu0 %v2022
        %2054 = vmatprep.subr.bf16.mxu0 %v2021
        %2055 = vmatpush1.bf16.msra.mxu0 %v2020
        %2056 = vmatprep.subr.bf16.mxu0 %v2019
        %2057 = vmatpush1.bf16.msra.mxu0 %v2018
        %2058 = vmatprep.subr.bf16.mxu0 %v2017
        %2059 = vmatpush1.bf16.msra.mxu0 %v2016
        %2060 = vmatprep.subr.bf16.mxu0 %v2015
        %2061 = vmatpush1.bf16.msra.mxu0 %v2014
        %2062 = vmatprep.subr.bf16.mxu0 0
        %2063 = vmatpush2.bf16.msra.mxu0 0
        %2064 = vmatprep.subr.bf16.mxu0 0
        %2065 = vmatpush2.bf16.msra.mxu0 0
        %2066 = vmatprep.subr.bf16.mxu0 0
        %2067 = vmatpush2.bf16.msra.mxu0 0
        %2068 = vmatprep.subr.bf16.mxu0 0
        %2069 = vmatpush2.bf16.msra.mxu0 0
        %2070 = vmatprep.subr.bf16.mxu0 0
        %2071 = vmatpush2.bf16.msra.mxu0 0
        %2072 = vmatprep.subr.bf16.mxu0 0
        %2073 = vmatpush2.bf16.msra.mxu0 0
        %2074 = vmatprep.subr.bf16.mxu0 0
        %2075 = vmatpush2.bf16.msra.mxu0 0
        %2076 = vmatprep.subr.bf16.mxu0 0
        %2077 = vmatpush2.bf16.msra.mxu0 0
        %2078 = vmatprep.mubr.bf16.mxu0 0
        %2079 = vmatmul.mubr.bf16.gmra.mxu0 %v1964
        %v2080 = vpop.f32.mrf.mxu0
        %v2081 = vadd.f32 %v1954, %v2080
        %v2082 = vpop.f32.mrf.mxu0
        %v2083 = vadd.f32 %v1956, %v2082
        %v2084 = vpop.f32.mrf.mxu0
        %v2085 = vadd.f32 %v1958, %v2084
        %v2086 = vpop.f32.mrf.mxu0
        %v2087 = vadd.f32 %v1960, %v2086
        %2088 = vdwg.mxu0
        %v2089 = vld [vmem:[#allocation2] sm:$0xe]
        %s2090 = scalar_lea.vmem [#allocation12], 256
        %v2091 = vld [vmem:[%s2090] sm:$0xff]
        %v2092 = vld [vmem:[%s2090 + $0x8] sm:$0xff]
        %v2093 = vld [vmem:[%s2090 + $0x10] sm:$0xff]
        %v2094 = vld [vmem:[%s2090 + $0x18] sm:$0xff]
        %v2095 = vld [vmem:[%s2090 + $0x20] sm:$0xff]
        %v2096 = vld [vmem:[%s2090 + $0x28] sm:$0xff]
        %v2097 = vld [vmem:[%s2090 + $0x30] sm:$0xff]
        %v2098 = vld [vmem:[%s2090 + $0x38] sm:$0xff]
        %v2099 = vld [vmem:[%s2090 + $0x40] sm:$0xff]
        %v2100 = vld [vmem:[%s2090 + $0x48] sm:$0xff]
        %v2101 = vld [vmem:[%s2090 + $0x50] sm:$0xff]
        %v2102 = vld [vmem:[%s2090 + $0x58] sm:$0xff]
        %v2103 = vld [vmem:[%s2090 + $0x60] sm:$0xff]
        %v2104 = vld [vmem:[%s2090 + $0x68] sm:$0xff]
        %v2105 = vld [vmem:[%s2090 + $0x70] sm:$0xff]
        %v2106 = vld [vmem:[%s2090 + $0x78] sm:$0xff]
        %v2108 = vunpack.c.l.b16 %v2089
        %v2109 = vpack.c.b16 %v1829, %v2108
        %v2110 = vrot.slane %v2109, 1
        %v2128 = vunpack.c.l.b16 %v2091
        %v2129 = vunpack.c.h.b16 %v2091
        %v2130 = vunpack.c.l.b16 %v2092
        %v2131 = vunpack.c.h.b16 %v2092
        %v2132 = vunpack.c.l.b16 %v2093
        %v2133 = vunpack.c.h.b16 %v2093
        %v2134 = vunpack.c.l.b16 %v2094
        %v2135 = vunpack.c.h.b16 %v2094
        %v2136 = vunpack.c.l.b16 %v2095
        %v2137 = vunpack.c.h.b16 %v2095
        %v2138 = vunpack.c.l.b16 %v2096
        %v2139 = vunpack.c.h.b16 %v2096
        %v2140 = vunpack.c.l.b16 %v2097
        %v2141 = vunpack.c.h.b16 %v2097
        %v2142 = vunpack.c.l.b16 %v2098
        %v2143 = vunpack.c.h.b16 %v2098
        %v2144 = vunpack.c.l.b16 %v2099
        %v2145 = vunpack.c.h.b16 %v2099
        %v2146 = vunpack.c.l.b16 %v2100
        %v2147 = vunpack.c.h.b16 %v2100
        %v2148 = vunpack.c.l.b16 %v2101
        %v2149 = vunpack.c.h.b16 %v2101
        %v2150 = vunpack.c.l.b16 %v2102
        %v2151 = vunpack.c.h.b16 %v2102
        %v2152 = vunpack.c.l.b16 %v2103
        %v2153 = vunpack.c.h.b16 %v2103
        %v2154 = vunpack.c.l.b16 %v2104
        %v2155 = vunpack.c.h.b16 %v2104
        %v2156 = vunpack.c.l.b16 %v2105
        %v2157 = vunpack.c.h.b16 %v2105
        %v2158 = vunpack.c.l.b16 %v2106
        %v2159 = vunpack.c.h.b16 %v2106
        %v2160 = vpack.c.b16 %v2130, %v2128
        %v2161 = vpack.c.b16 %v2131, %v2129
        %v2162 = vpack.c.b16 %v2134, %v2132
        %v2163 = vpack.c.b16 %v2135, %v2133
        %v2164 = vpack.c.b16 %v2138, %v2136
        %v2165 = vpack.c.b16 %v2139, %v2137
        %v2166 = vpack.c.b16 %v2142, %v2140
        %v2167 = vpack.c.b16 %v2143, %v2141
        %v2168 = vpack.c.b16 %v2146, %v2144
        %v2169 = vpack.c.b16 %v2147, %v2145
        %v2170 = vpack.c.b16 %v2150, %v2148
        %v2171 = vpack.c.b16 %v2151, %v2149
        %v2172 = vpack.c.b16 %v2154, %v2152
        %v2173 = vpack.c.b16 %v2155, %v2153
        %v2174 = vpack.c.b16 %v2158, %v2156
        %v2175 = vpack.c.b16 %v2159, %v2157
        %2192 = vmatprep.subr.bf16.mxu0 %v2175
        %2193 = vmatpush1.bf16.msra.mxu0 %v2174
        %2194 = vmatprep.subr.bf16.mxu0 %v2173
        %2195 = vmatpush1.bf16.msra.mxu0 %v2172
        %2196 = vmatprep.subr.bf16.mxu0 %v2171
        %2197 = vmatpush1.bf16.msra.mxu0 %v2170
        %2198 = vmatprep.subr.bf16.mxu0 %v2169
        %2199 = vmatpush1.bf16.msra.mxu0 %v2168
        %2200 = vmatprep.subr.bf16.mxu0 %v2167
        %2201 = vmatpush1.bf16.msra.mxu0 %v2166
        %2202 = vmatprep.subr.bf16.mxu0 %v2165
        %2203 = vmatpush1.bf16.msra.mxu0 %v2164
        %2204 = vmatprep.subr.bf16.mxu0 %v2163
        %2205 = vmatpush1.bf16.msra.mxu0 %v2162
        %2206 = vmatprep.subr.bf16.mxu0 %v2161
        %2207 = vmatpush1.bf16.msra.mxu0 %v2160
        %2208 = vmatprep.subr.bf16.mxu0 0
        %2209 = vmatpush2.bf16.msra.mxu0 0
        %2210 = vmatprep.subr.bf16.mxu0 0
        %2211 = vmatpush2.bf16.msra.mxu0 0
        %2212 = vmatprep.subr.bf16.mxu0 0
        %2213 = vmatpush2.bf16.msra.mxu0 0
        %2214 = vmatprep.subr.bf16.mxu0 0
        %2215 = vmatpush2.bf16.msra.mxu0 0
        %2216 = vmatprep.subr.bf16.mxu0 0
        %2217 = vmatpush2.bf16.msra.mxu0 0
        %2218 = vmatprep.subr.bf16.mxu0 0
        %2219 = vmatpush2.bf16.msra.mxu0 0
        %2220 = vmatprep.subr.bf16.mxu0 0
        %2221 = vmatpush2.bf16.msra.mxu0 0
        %2222 = vmatprep.subr.bf16.mxu0 0
        %2223 = vmatpush2.bf16.msra.mxu0 0
        %2224 = vmatprep.mubr.bf16.mxu0 0
        %2225 = vmatmul.mubr.bf16.gmra.mxu0 %v2110
        %v2226 = vpop.f32.mrf.mxu0
        %v2227 = vadd.f32 0.0, %v2226
        %v2228 = vpop.f32.mrf.mxu0
        %v2229 = vadd.f32 0.0, %v2228
        %v2230 = vpop.f32.mrf.mxu0
        %v2231 = vadd.f32 0.0, %v2230
        %v2232 = vpop.f32.mrf.mxu0
        %v2233 = vadd.f32 0.0, %v2232
        %2234 = vdwg.mxu0
        %v2235 = vadd.f32 %v2081, %v2227
        %v2236 = vadd.f32 %v2083, %v2229
        %v2237 = vadd.f32 %v2085, %v2231
        %v2238 = vadd.f32 %v2087, %v2233
        %v2239 = vld [vmem:[#allocation2 + $0x4] sm:$0x7]
        %s2240 = scalar_lea.vmem [#allocation12], 384
        %v2241 = vld [vmem:[%s2240] sm:$0xff]
        %v2242 = vld [vmem:[%s2240 + $0x8] sm:$0xff]
        %v2243 = vld [vmem:[%s2240 + $0x10] sm:$0xff]
        %v2244 = vld [vmem:[%s2240 + $0x18] sm:$0xff]
        %v2245 = vld [vmem:[%s2240 + $0x20] sm:$0xff]
        %v2246 = vld [vmem:[%s2240 + $0x28] sm:$0xff]
        %v2247 = vld [vmem:[%s2240 + $0x30] sm:$0xff]
        %v2248 = vld [vmem:[%s2240 + $0x38] sm:$0xff]
        %v2249 = vld [vmem:[%s2240 + $0x40] sm:$0xff]
        %v2250 = vld [vmem:[%s2240 + $0x48] sm:$0xff]
        %v2251 = vld [vmem:[%s2240 + $0x50] sm:$0xff]
        %v2252 = vld [vmem:[%s2240 + $0x58] sm:$0xff]
        %v2253 = vld [vmem:[%s2240 + $0x60] sm:$0xff]
        %v2254 = vld [vmem:[%s2240 + $0x68] sm:$0xff]
        %v2255 = vld [vmem:[%s2240 + $0x70] sm:$0xff]
        %v2256 = vld [vmem:[%s2240 + $0x78] sm:$0xff]
        %v2258 = vunpack.c.l.b16 %v2239
        %v2259 = vpack.c.b16 %v2258, %v2108
        %v2261 = vshrl.u32 %v2259, 16
        %v2263 = vrot.slane %v2261, 1
        %v2264 = vshll.u32 %v2259, 16
        %v2266 = vrot.slane %v2264, 2
        %v2267 = vor.u32 %v2263, %v2266
        %v2285 = vunpack.c.l.b16 %v2241
        %v2286 = vunpack.c.h.b16 %v2241
        %v2287 = vunpack.c.l.b16 %v2242
        %v2288 = vunpack.c.h.b16 %v2242
        %v2289 = vunpack.c.l.b16 %v2243
        %v2290 = vunpack.c.h.b16 %v2243
        %v2291 = vunpack.c.l.b16 %v2244
        %v2292 = vunpack.c.h.b16 %v2244
        %v2293 = vunpack.c.l.b16 %v2245
        %v2294 = vunpack.c.h.b16 %v2245
        %v2295 = vunpack.c.l.b16 %v2246
        %v2296 = vunpack.c.h.b16 %v2246
        %v2297 = vunpack.c.l.b16 %v2247
        %v2298 = vunpack.c.h.b16 %v2247
        %v2299 = vunpack.c.l.b16 %v2248
        %v2300 = vunpack.c.h.b16 %v2248
        %v2301 = vunpack.c.l.b16 %v2249
        %v2302 = vunpack.c.h.b16 %v2249
        %v2303 = vunpack.c.l.b16 %v2250
        %v2304 = vunpack.c.h.b16 %v2250
        %v2305 = vunpack.c.l.b16 %v2251
        %v2306 = vunpack.c.h.b16 %v2251
        %v2307 = vunpack.c.l.b16 %v2252
        %v2308 = vunpack.c.h.b16 %v2252
        %v2309 = vunpack.c.l.b16 %v2253
        %v2310 = vunpack.c.h.b16 %v2253
        %v2311 = vunpack.c.l.b16 %v2254
        %v2312 = vunpack.c.h.b16 %v2254
        %v2313 = vunpack.c.l.b16 %v2255
        %v2314 = vunpack.c.h.b16 %v2255
        %v2315 = vunpack.c.l.b16 %v2256
        %v2316 = vunpack.c.h.b16 %v2256
        %v2317 = vpack.c.b16 %v2287, %v2285
        %v2318 = vpack.c.b16 %v2288, %v2286
        %v2319 = vpack.c.b16 %v2291, %v2289
        %v2320 = vpack.c.b16 %v2292, %v2290
        %v2321 = vpack.c.b16 %v2295, %v2293
        %v2322 = vpack.c.b16 %v2296, %v2294
        %v2323 = vpack.c.b16 %v2299, %v2297
        %v2324 = vpack.c.b16 %v2300, %v2298
        %v2325 = vpack.c.b16 %v2303, %v2301
        %v2326 = vpack.c.b16 %v2304, %v2302
        %v2327 = vpack.c.b16 %v2307, %v2305
        %v2328 = vpack.c.b16 %v2308, %v2306
        %v2329 = vpack.c.b16 %v2311, %v2309
        %v2330 = vpack.c.b16 %v2312, %v2310
        %v2331 = vpack.c.b16 %v2315, %v2313
        %v2332 = vpack.c.b16 %v2316, %v2314
        %2349 = vmatprep.subr.bf16.mxu0 %v2332
        %2350 = vmatpush1.bf16.msra.mxu0 %v2331
        %2351 = vmatprep.subr.bf16.mxu0 %v2330
        %2352 = vmatpush1.bf16.msra.mxu0 %v2329
        %2353 = vmatprep.subr.bf16.mxu0 %v2328
        %2354 = vmatpush1.bf16.msra.mxu0 %v2327
        %2355 = vmatprep.subr.bf16.mxu0 %v2326
        %2356 = vmatpush1.bf16.msra.mxu0 %v2325
        %2357 = vmatprep.subr.bf16.mxu0 %v2324
        %2358 = vmatpush1.bf16.msra.mxu0 %v2323
        %2359 = vmatprep.subr.bf16.mxu0 %v2322
        %2360 = vmatpush1.bf16.msra.mxu0 %v2321
        %2361 = vmatprep.subr.bf16.mxu0 %v2320
        %2362 = vmatpush1.bf16.msra.mxu0 %v2319
        %2363 = vmatprep.subr.bf16.mxu0 %v2318
        %2364 = vmatpush1.bf16.msra.mxu0 %v2317
        %2365 = vmatprep.subr.bf16.mxu0 0
        %2366 = vmatpush2.bf16.msra.mxu0 0
        %2367 = vmatprep.subr.bf16.mxu0 0
        %2368 = vmatpush2.bf16.msra.mxu0 0
        %2369 = vmatprep.subr.bf16.mxu0 0
        %2370 = vmatpush2.bf16.msra.mxu0 0
        %2371 = vmatprep.subr.bf16.mxu0 0
        %2372 = vmatpush2.bf16.msra.mxu0 0
        %2373 = vmatprep.subr.bf16.mxu0 0
        %2374 = vmatpush2.bf16.msra.mxu0 0
        %2375 = vmatprep.subr.bf16.mxu0 0
        %2376 = vmatpush2.bf16.msra.mxu0 0
        %2377 = vmatprep.subr.bf16.mxu0 0
        %2378 = vmatpush2.bf16.msra.mxu0 0
        %2379 = vmatprep.subr.bf16.mxu0 0
        %2380 = vmatpush2.bf16.msra.mxu0 0
        %2381 = vmatprep.mubr.bf16.mxu0 0
        %2382 = vmatmul.mubr.bf16.gmra.mxu0 %v2267
        %v2383 = vpop.f32.mrf.mxu0
        %v2384 = vadd.f32 0.0, %v2383
        %v2385 = vpop.f32.mrf.mxu0
        %v2386 = vadd.f32 0.0, %v2385
        %v2387 = vpop.f32.mrf.mxu0
        %v2388 = vadd.f32 0.0, %v2387
        %v2389 = vpop.f32.mrf.mxu0
        %v2390 = vadd.f32 0.0, %v2389
        %2391 = vdwg.mxu0
        %v2392 = vadd.f32 %v2235, %v2384
        %v2393 = vadd.f32 %v2236, %v2386
        %v2394 = vadd.f32 %v2237, %v2388
        %v2395 = vadd.f32 %v2238, %v2390
        %v2396 = vld [vmem:[#allocation2] sm:$0xc]
        %s2397 = scalar_lea.vmem [#allocation12], 512
        %v2398 = vld [vmem:[%s2397] sm:$0xff]
        %v2399 = vld [vmem:[%s2397 + $0x8] sm:$0xff]
        %v2400 = vld [vmem:[%s2397 + $0x10] sm:$0xff]
        %v2401 = vld [vmem:[%s2397 + $0x18] sm:$0xff]
        %v2402 = vld [vmem:[%s2397 + $0x20] sm:$0xff]
        %v2403 = vld [vmem:[%s2397 + $0x28] sm:$0xff]
        %v2404 = vld [vmem:[%s2397 + $0x30] sm:$0xff]
        %v2405 = vld [vmem:[%s2397 + $0x38] sm:$0xff]
        %v2406 = vld [vmem:[%s2397 + $0x40] sm:$0xff]
        %v2407 = vld [vmem:[%s2397 + $0x48] sm:$0xff]
        %v2408 = vld [vmem:[%s2397 + $0x50] sm:$0xff]
        %v2409 = vld [vmem:[%s2397 + $0x58] sm:$0xff]
        %v2410 = vld [vmem:[%s2397 + $0x60] sm:$0xff]
        %v2411 = vld [vmem:[%s2397 + $0x68] sm:$0xff]
        %v2412 = vld [vmem:[%s2397 + $0x70] sm:$0xff]
        %v2413 = vld [vmem:[%s2397 + $0x78] sm:$0xff]
        %v2415 = vunpack.c.l.b16 %v2396
        %v2416 = vpack.c.b16 %v2258, %v2415
        %v2417 = vrot.slane %v2416, 2
        %v2435 = vunpack.c.l.b16 %v2398
        %v2436 = vunpack.c.h.b16 %v2398
        %v2437 = vunpack.c.l.b16 %v2399
        %v2438 = vunpack.c.h.b16 %v2399
        %v2439 = vunpack.c.l.b16 %v2400
        %v2440 = vunpack.c.h.b16 %v2400
        %v2441 = vunpack.c.l.b16 %v2401
        %v2442 = vunpack.c.h.b16 %v2401
        %v2443 = vunpack.c.l.b16 %v2402
        %v2444 = vunpack.c.h.b16 %v2402
        %v2445 = vunpack.c.l.b16 %v2403
        %v2446 = vunpack.c.h.b16 %v2403
        %v2447 = vunpack.c.l.b16 %v2404
        %v2448 = vunpack.c.h.b16 %v2404
        %v2449 = vunpack.c.l.b16 %v2405
        %v2450 = vunpack.c.h.b16 %v2405
        %v2451 = vunpack.c.l.b16 %v2406
        %v2452 = vunpack.c.h.b16 %v2406
        %v2453 = vunpack.c.l.b16 %v2407
        %v2454 = vunpack.c.h.b16 %v2407
        %v2455 = vunpack.c.l.b16 %v2408
        %v2456 = vunpack.c.h.b16 %v2408
        %v2457 = vunpack.c.l.b16 %v2409
        %v2458 = vunpack.c.h.b16 %v2409
        %v2459 = vunpack.c.l.b16 %v2410
        %v2460 = vunpack.c.h.b16 %v2410
        %v2461 = vunpack.c.l.b16 %v2411
        %v2462 = vunpack.c.h.b16 %v2411
        %v2463 = vunpack.c.l.b16 %v2412
        %v2464 = vunpack.c.h.b16 %v2412
        %v2465 = vunpack.c.l.b16 %v2413
        %v2466 = vunpack.c.h.b16 %v2413
        %v2467 = vpack.c.b16 %v2437, %v2435
        %v2468 = vpack.c.b16 %v2438, %v2436
        %v2469 = vpack.c.b16 %v2441, %v2439
        %v2470 = vpack.c.b16 %v2442, %v2440
        %v2471 = vpack.c.b16 %v2445, %v2443
        %v2472 = vpack.c.b16 %v2446, %v2444
        %v2473 = vpack.c.b16 %v2449, %v2447
        %v2474 = vpack.c.b16 %v2450, %v2448
        %v2475 = vpack.c.b16 %v2453, %v2451
        %v2476 = vpack.c.b16 %v2454, %v2452
        %v2477 = vpack.c.b16 %v2457, %v2455
        %v2478 = vpack.c.b16 %v2458, %v2456
        %v2479 = vpack.c.b16 %v2461, %v2459
        %v2480 = vpack.c.b16 %v2462, %v2460
        %v2481 = vpack.c.b16 %v2465, %v2463
        %v2482 = vpack.c.b16 %v2466, %v2464
        %2499 = vmatprep.subr.bf16.mxu0 %v2482
        %2500 = vmatpush1.bf16.msra.mxu0 %v2481
        %2501 = vmatprep.subr.bf16.mxu0 %v2480
        %2502 = vmatpush1.bf16.msra.mxu0 %v2479
        %2503 = vmatprep.subr.bf16.mxu0 %v2478
        %2504 = vmatpush1.bf16.msra.mxu0 %v2477
        %2505 = vmatprep.subr.bf16.mxu0 %v2476
        %2506 = vmatpush1.bf16.msra.mxu0 %v2475
        %2507 = vmatprep.subr.bf16.mxu0 %v2474
        %2508 = vmatpush1.bf16.msra.mxu0 %v2473
        %2509 = vmatprep.subr.bf16.mxu0 %v2472
        %2510 = vmatpush1.bf16.msra.mxu0 %v2471
        %2511 = vmatprep.subr.bf16.mxu0 %v2470
        %2512 = vmatpush1.bf16.msra.mxu0 %v2469
        %2513 = vmatprep.subr.bf16.mxu0 %v2468
        %2514 = vmatpush1.bf16.msra.mxu0 %v2467
        %2515 = vmatprep.subr.bf16.mxu0 0
        %2516 = vmatpush2.bf16.msra.mxu0 0
        %2517 = vmatprep.subr.bf16.mxu0 0
        %2518 = vmatpush2.bf16.msra.mxu0 0
        %2519 = vmatprep.subr.bf16.mxu0 0
        %2520 = vmatpush2.bf16.msra.mxu0 0
        %2521 = vmatprep.subr.bf16.mxu0 0
        %2522 = vmatpush2.bf16.msra.mxu0 0
        %2523 = vmatprep.subr.bf16.mxu0 0
        %2524 = vmatpush2.bf16.msra.mxu0 0
        %2525 = vmatprep.subr.bf16.mxu0 0
        %2526 = vmatpush2.bf16.msra.mxu0 0
        %2527 = vmatprep.subr.bf16.mxu0 0
        %2528 = vmatpush2.bf16.msra.mxu0 0
        %2529 = vmatprep.subr.bf16.mxu0 0
        %2530 = vmatpush2.bf16.msra.mxu0 0
        %2531 = vmatprep.mubr.bf16.mxu0 0
        %2532 = vmatmul.mubr.bf16.gmra.mxu0 %v2417
        %v2533 = vpop.f32.mrf.mxu0
        %v2534 = vadd.f32 0.0, %v2533
        %v2535 = vpop.f32.mrf.mxu0
        %v2536 = vadd.f32 0.0, %v2535
        %v2537 = vpop.f32.mrf.mxu0
        %v2538 = vadd.f32 0.0, %v2537
        %v2539 = vpop.f32.mrf.mxu0
        %v2540 = vadd.f32 0.0, %v2539
        %2541 = vdwg.mxu0
        %v2542 = vadd.f32 %v2392, %v2534
        %v2543 = vadd.f32 %v2393, %v2536
        %v2544 = vadd.f32 %v2394, %v2538
        %v2545 = vadd.f32 %v2395, %v2540
        %v2546 = vld [vmem:[%s6] sm:$0x3]
        %v2548 = vlaneseq
        %v2549 = vshrl.u32 %v2548, 7
        %v2550 = vsub.s32 0, %v2549
        %v2551 = vrot.slane %v2546, %v2550
        %v2552 = vlaneseq
        %v2553 = vshrl.u32 %v2552, 7
        %v2554 = vsub.s32 1, %v2553
        %v2555 = vrot.slane %v2546, %v2554
        %v2558 = vadd.f32 %v2542, %v2551
        %v2559 = vadd.f32 %v2543, %v2555
        %v2560 = vadd.f32 %v2544, %v2551
        %v2561 = vadd.f32 %v2545, %v2555
        %v2562 = vsub.f32 0.0, %v2558
        %v2563 = vsub.f32 0.0, %v2559
        %v2564 = vsub.f32 0.0, %v2560
        %v2565 = vsub.f32 0.0, %v2561
        %v2566 = vmul.f32 %v2562, 1.442695
        %v2567 = vpow.pop %v2566
        %v2568 = vmul.f32 %v2563, 1.442695
        %v2569 = vpow.pop %v2568
        %v2570 = vmul.f32 %v2564, 1.442695
        %v2571 = vpow.pop %v2570
        %v2572 = vmul.f32 %v2565, 1.442695
        %v2573 = vpow.pop %v2572
        %v2574 = vadd.f32 %v2567, 1.0
        %v2575 = vadd.f32 %v2569, 1.0
        %v2576 = vadd.f32 %v2571, 1.0
        %v2577 = vadd.f32 %v2573, 1.0
        %v2578 = vrcp.pop %v2574
        %v2579 = vrcp.pop %v2575
        %v2580 = vrcp.pop %v2576
        %v2581 = vrcp.pop %v2577
        %v2582 = vpack.c.bf16 %v2580, %v2578
        %v2583 = vpack.c.bf16 %v2581, %v2579
        %v2584 = vld [vmem:[%s7] sm:$0xf]
        %v2585 = vld [vmem:[%s7 + $0x4] sm:$0xf]
        %v2588 = vunpack.c.l.b16 %v2584
        %v2589 = vunpack.c.l.b16 %v2585
        %v2590 = vpack.c.b16 %v2589, %v2588
        %vm2591 = vcmask 80896
        %v2593 = vsel %vm2591, %v2590, 0
        %vm2595 = vcmask 1044480
        %v2597 = vsel %vm2595, %v2582, 0
        %v2600 = vsel %vm2595, %v2583, 0
        %2602 = vmatprep.subr.bf16.mxu0 0
        %2603 = vmatpush1.bf16.msra.mxu0 0
        %2604 = vmatprep.subr.bf16.mxu0 0
        %2605 = vmatpush1.bf16.msra.mxu0 0
        %2606 = vmatprep.subr.bf16.mxu0 0
        %2607 = vmatpush1.bf16.msra.mxu0 0
        %2608 = vmatprep.subr.bf16.mxu0 0
        %2609 = vmatpush1.bf16.msra.mxu0 0
        %2610 = vmatprep.subr.bf16.mxu0 0
        %2611 = vmatpush1.bf16.msra.mxu0 0
        %2612 = vmatprep.subr.bf16.mxu0 0
        %2613 = vmatpush1.bf16.msra.mxu0 0
        %2614 = vmatprep.subr.bf16.mxu0 0
        %2615 = vmatpush1.bf16.msra.mxu0 0
        %2616 = vmatprep.subr.bf16.mxu0 %v2600
        %2617 = vmatpush1.bf16.msra.mxu0 %v2597
        %2618 = vmatprep.subr.bf16.mxu0 0
        %2619 = vmatpush2.bf16.msra.mxu0 0
        %2620 = vmatprep.subr.bf16.mxu0 0
        %2621 = vmatpush2.bf16.msra.mxu0 0
        %2622 = vmatprep.subr.bf16.mxu0 0
        %2623 = vmatpush2.bf16.msra.mxu0 0
        %2624 = vmatprep.subr.bf16.mxu0 0
        %2625 = vmatpush2.bf16.msra.mxu0 0
        %2626 = vmatprep.subr.bf16.mxu0 0
        %2627 = vmatpush2.bf16.msra.mxu0 0
        %2628 = vmatprep.subr.bf16.mxu0 0
        %2629 = vmatpush2.bf16.msra.mxu0 0
        %2630 = vmatprep.subr.bf16.mxu0 0
        %2631 = vmatpush2.bf16.msra.mxu0 0
        %2632 = vmatprep.subr.bf16.mxu0 0
        %2633 = vmatpush2.bf16.msra.mxu0 0
        %2634 = vmatprep.mubr.bf16.mxu0 0
        %2635 = vmatmul.mubr.bf16.gmra.mxu0 %v2593
        %v2636 = vpop.f32.mrf.mxu0
        %v2637 = vadd.f32 0.0, %v2636
        %v2638 = vpop.f32.mrf.mxu0
        %v2639 = vadd.f32 0.0, %v2638
        %v2640 = vpop.f32.mrf.mxu0
        %v2641 = vadd.f32 0.0, %v2640
        %v2642 = vpop.f32.mrf.mxu0
        %v2643 = vadd.f32 0.0, %v2642
        %2644 = vdwg.mxu0
        %v2645 = vpack.c.bf16 %v2641, %v2637
        %v2646 = vpack.c.bf16 %v2643, %v2639
        %v2647 = vld [vmem:[#allocation13] sm:$0xf]
        %v2648 = vld [vmem:[#allocation13 + $0x4] sm:$0xf]
        %v2649 = vld [vmem:[#allocation13 + $0x8] sm:$0xf]
        %v2650 = vld [vmem:[#allocation13 + $0xc] sm:$0xf]
        %v2651 = vld [vmem:[#allocation13 + $0x10] sm:$0xf]
        %v2652 = vld [vmem:[#allocation13 + $0x14] sm:$0xf]
        %v2653 = vld [vmem:[#allocation13 + $0x18] sm:$0xf]
        %v2654 = vld [vmem:[#allocation13 + $0x1c] sm:$0xf]
        %v2655 = vld [vmem:[#allocation13 + $0x20] sm:$0xf]
        %v2656 = vld [vmem:[#allocation13 + $0x24] sm:$0xf]
        %v2657 = vld [vmem:[#allocation13 + $0x28] sm:$0xf]
        %v2658 = vld [vmem:[#allocation13 + $0x2c] sm:$0xf]
        %v2659 = vld [vmem:[#allocation13 + $0x30] sm:$0xf]
        %v2660 = vld [vmem:[#allocation13 + $0x34] sm:$0xf]
        %v2661 = vld [vmem:[#allocation13 + $0x38] sm:$0xf]
        %v2662 = vld [vmem:[#allocation13 + $0x3c] sm:$0xf]
        %v2663 = vld [vmem:[#allocation13 + $0x40] sm:$0xf]
        %v2664 = vld [vmem:[#allocation13 + $0x44] sm:$0xf]
        %v2665 = vld [vmem:[#allocation13 + $0x48] sm:$0xf]
        %v2666 = vld [vmem:[#allocation13 + $0x4c] sm:$0xf]
        %v2667 = vld [vmem:[#allocation13 + $0x50] sm:$0xf]
        %v2668 = vld [vmem:[#allocation13 + $0x54] sm:$0xf]
        %v2669 = vld [vmem:[#allocation13 + $0x58] sm:$0xf]
        %v2670 = vld [vmem:[#allocation13 + $0x5c] sm:$0xf]
        %v2671 = vld [vmem:[#allocation13 + $0x60] sm:$0xf]
        %v2672 = vld [vmem:[#allocation13 + $0x64] sm:$0xf]
        %v2673 = vld [vmem:[#allocation13 + $0x68] sm:$0xf]
        %v2674 = vld [vmem:[#allocation13 + $0x6c] sm:$0xf]
        %v2675 = vld [vmem:[#allocation13 + $0x70] sm:$0xf]
        %v2676 = vld [vmem:[#allocation13 + $0x74] sm:$0xf]
        %v2677 = vld [vmem:[#allocation13 + $0x78] sm:$0xf]
        %v2678 = vld [vmem:[#allocation13 + $0x7c] sm:$0xf]
        %v2711 = vunpack.c.l.b16 %v2647
        %v2712 = vunpack.c.l.b16 %v2648
        %v2713 = vunpack.c.l.b16 %v2649
        %v2714 = vunpack.c.l.b16 %v2650
        %v2715 = vunpack.c.l.b16 %v2651
        %v2716 = vunpack.c.l.b16 %v2652
        %v2717 = vunpack.c.l.b16 %v2653
        %v2718 = vunpack.c.l.b16 %v2654
        %v2719 = vunpack.c.l.b16 %v2655
        %v2720 = vunpack.c.l.b16 %v2656
        %v2721 = vunpack.c.l.b16 %v2657
        %v2722 = vunpack.c.l.b16 %v2658
        %v2723 = vunpack.c.l.b16 %v2659
        %v2724 = vunpack.c.l.b16 %v2660
        %v2725 = vunpack.c.l.b16 %v2661
        %v2726 = vunpack.c.l.b16 %v2662
        %v2727 = vunpack.c.l.b16 %v2663
        %v2728 = vunpack.c.l.b16 %v2664
        %v2729 = vunpack.c.l.b16 %v2665
        %v2730 = vunpack.c.l.b16 %v2666
        %v2731 = vunpack.c.l.b16 %v2667
        %v2732 = vunpack.c.l.b16 %v2668
        %v2733 = vunpack.c.l.b16 %v2669
        %v2734 = vunpack.c.l.b16 %v2670
        %v2735 = vunpack.c.l.b16 %v2671
        %v2736 = vunpack.c.l.b16 %v2672
        %v2737 = vunpack.c.l.b16 %v2673
        %v2738 = vunpack.c.l.b16 %v2674
        %v2739 = vunpack.c.l.b16 %v2675
        %v2740 = vunpack.c.l.b16 %v2676
        %v2741 = vunpack.c.l.b16 %v2677
        %v2742 = vunpack.c.l.b16 %v2678
        %v2743 = vpack.c.b16 %v2712, %v2711
        %v2744 = vpack.c.b16 %v2714, %v2713
        %v2745 = vpack.c.b16 %v2716, %v2715
        %v2746 = vpack.c.b16 %v2718, %v2717
        %v2747 = vpack.c.b16 %v2720, %v2719
        %v2748 = vpack.c.b16 %v2722, %v2721
        %v2749 = vpack.c.b16 %v2724, %v2723
        %v2750 = vpack.c.b16 %v2726, %v2725
        %v2751 = vpack.c.b16 %v2728, %v2727
        %v2752 = vpack.c.b16 %v2730, %v2729
        %v2753 = vpack.c.b16 %v2732, %v2731
        %v2754 = vpack.c.b16 %v2734, %v2733
        %v2755 = vpack.c.b16 %v2736, %v2735
        %v2756 = vpack.c.b16 %v2738, %v2737
        %v2757 = vpack.c.b16 %v2740, %v2739
        %v2758 = vpack.c.b16 %v2742, %v2741
        %2775 = vmatprep.subr.bf16.mxu0 0
        %2776 = vmatpush1.bf16.msra.mxu0 %v2750
        %2777 = vmatprep.subr.bf16.mxu0 0
        %2778 = vmatpush1.bf16.msra.mxu0 %v2749
        %2779 = vmatprep.subr.bf16.mxu0 0
        %2780 = vmatpush1.bf16.msra.mxu0 %v2748
        %2781 = vmatprep.subr.bf16.mxu0 0
        %2782 = vmatpush1.bf16.msra.mxu0 %v2747
        %2783 = vmatprep.subr.bf16.mxu0 0
        %2784 = vmatpush1.bf16.msra.mxu0 %v2746
        %2785 = vmatprep.subr.bf16.mxu0 0
        %2786 = vmatpush1.bf16.msra.mxu0 %v2745
        %2787 = vmatprep.subr.bf16.mxu0 0
        %2788 = vmatpush1.bf16.msra.mxu0 %v2744
        %2789 = vmatprep.subr.bf16.mxu0 0
        %2790 = vmatpush1.bf16.msra.mxu0 %v2743
        %2791 = vmatprep.subr.bf16.mxu0 0
        %2792 = vmatpush2.bf16.msra.mxu0 %v2758
        %2793 = vmatprep.subr.bf16.mxu0 0
        %2794 = vmatpush2.bf16.msra.mxu0 %v2757
        %2795 = vmatprep.subr.bf16.mxu0 0
        %2796 = vmatpush2.bf16.msra.mxu0 %v2756
        %2797 = vmatprep.subr.bf16.mxu0 0
        %2798 = vmatpush2.bf16.msra.mxu0 %v2755
        %2799 = vmatprep.subr.bf16.mxu0 0
        %2800 = vmatpush2.bf16.msra.mxu0 %v2754
        %2801 = vmatprep.subr.bf16.mxu0 0
        %2802 = vmatpush2.bf16.msra.mxu0 %v2753
        %2803 = vmatprep.subr.bf16.mxu0 0
        %2804 = vmatpush2.bf16.msra.mxu0 %v2752
        %2805 = vmatprep.subr.bf16.mxu0 0
        %2806 = vmatpush2.bf16.msra.mxu0 %v2751
        %2807 = vmatprep.mubr.bf16.mxu0 %v2646
        %2808 = vmatmul.mubr.bf16.gmra.mxu0 %v2645
        %v2809 = vpop.f32.mrf.mxu0
        %v2810 = vadd.f32 0.0, %v2809
        %v2811 = vpop.f32.mrf.mxu0
        %v2812 = vpop.f32.mrf.mxu0
        %v2813 = vadd.f32 0.0, %v2812
        %v2814 = vpop.f32.mrf.mxu0
        %2815 = vdwg.mxu0
        %v2816 = vpack.c.bf16 %v2813, %v2810
        %v2818 = vunpack.c.l.b16 %v2816
        %v2819 = vunpack.c.h.b16 %v2816
        %v2820 = vpack.c.b16 %v2818, %v2818
        %v2821 = vpack.c.b16 %v2819, %v2819
        %2824 = vst [vmem:[#allocation3] sm:$0xf] %v2820
        %2825 = vst [vmem:[#allocation3 + $0x4] sm:$0xf] %v2821
        %v2826 = vld [vmem:[%s10] sm:$0x1]
        %v2827 = vld [vmem:[#allocation3] sm:$0x1]
        %v2828 = vld [vmem:[#allocation15] sm:$0xf]
        %v2829 = vld [vmem:[#allocation15 + $0x4] sm:$0xf]
        %v2830 = vld [vmem:[#allocation15 + $0x8] sm:$0xf]
        %v2831 = vld [vmem:[#allocation15 + $0xc] sm:$0xf]
        %v2832 = vld [vmem:[#allocation15 + $0x10] sm:$0xf]
        %v2833 = vld [vmem:[#allocation15 + $0x14] sm:$0xf]
        %v2834 = vld [vmem:[#allocation15 + $0x18] sm:$0xf]
        %v2835 = vld [vmem:[#allocation15 + $0x1c] sm:$0xf]
        %v2836 = vld [vmem:[#allocation15 + $0x20] sm:$0xf]
        %v2837 = vld [vmem:[#allocation15 + $0x24] sm:$0xf]
        %v2838 = vld [vmem:[#allocation15 + $0x28] sm:$0xf]
        %v2839 = vld [vmem:[#allocation15 + $0x2c] sm:$0xf]
        %v2840 = vld [vmem:[#allocation15 + $0x30] sm:$0xf]
        %v2841 = vld [vmem:[#allocation15 + $0x34] sm:$0xf]
        %v2842 = vld [vmem:[#allocation15 + $0x38] sm:$0xf]
        %v2843 = vld [vmem:[#allocation15 + $0x3c] sm:$0xf]
        %v2860 = vunpack.c.l.b16 %v2828
        %v2861 = vunpack.c.l.b16 %v2829
        %v2862 = vunpack.c.l.b16 %v2830
        %v2863 = vunpack.c.l.b16 %v2831
        %v2864 = vunpack.c.l.b16 %v2832
        %v2865 = vunpack.c.l.b16 %v2833
        %v2866 = vunpack.c.l.b16 %v2834
        %v2867 = vunpack.c.l.b16 %v2835
        %v2868 = vunpack.c.l.b16 %v2836
        %v2869 = vunpack.c.l.b16 %v2837
        %v2870 = vunpack.c.l.b16 %v2838
        %v2871 = vunpack.c.l.b16 %v2839
        %v2872 = vunpack.c.l.b16 %v2840
        %v2873 = vunpack.c.l.b16 %v2841
        %v2874 = vunpack.c.l.b16 %v2842
        %v2875 = vunpack.c.l.b16 %v2843
        %v2876 = vpack.c.b16 %v2861, %v2860
        %v2877 = vpack.c.b16 %v2863, %v2862
        %v2878 = vpack.c.b16 %v2865, %v2864
        %v2879 = vpack.c.b16 %v2867, %v2866
        %v2880 = vpack.c.b16 %v2869, %v2868
        %v2881 = vpack.c.b16 %v2871, %v2870
        %v2882 = vpack.c.b16 %v2873, %v2872
        %v2883 = vpack.c.b16 %v2875, %v2874
        %2892 = vmatprep.subr.bf16.mxu0 0
        %2893 = vmatpush1.bf16.msra.mxu0 %v2883
        %2894 = vmatprep.subr.bf16.mxu0 0
        %2895 = vmatpush1.bf16.msra.mxu0 %v2882
        %2896 = vmatprep.subr.bf16.mxu0 0
        %2897 = vmatpush1.bf16.msra.mxu0 %v2881
        %2898 = vmatprep.subr.bf16.mxu0 0
        %2899 = vmatpush1.bf16.msra.mxu0 %v2880
        %2900 = vmatprep.subr.bf16.mxu0 0
        %2901 = vmatpush1.bf16.msra.mxu0 %v2879
        %2902 = vmatprep.subr.bf16.mxu0 0
        %2903 = vmatpush1.bf16.msra.mxu0 %v2878
        %2904 = vmatprep.subr.bf16.mxu0 0
        %2905 = vmatpush1.bf16.msra.mxu0 %v2877
        %2906 = vmatprep.subr.bf16.mxu0 0
        %2907 = vmatpush1.bf16.msra.mxu0 %v2876
        %2908 = vmatprep.subr.bf16.mxu0 0
        %2909 = vmatpush2.bf16.msra.mxu0 0
        %2910 = vmatprep.subr.bf16.mxu0 0
        %2911 = vmatpush2.bf16.msra.mxu0 0
        %2912 = vmatprep.subr.bf16.mxu0 0
        %2913 = vmatpush2.bf16.msra.mxu0 0
        %2914 = vmatprep.subr.bf16.mxu0 0
        %2915 = vmatpush2.bf16.msra.mxu0 0
        %2916 = vmatprep.subr.bf16.mxu0 0
        %2917 = vmatpush2.bf16.msra.mxu0 0
        %2918 = vmatprep.subr.bf16.mxu0 0
        %2919 = vmatpush2.bf16.msra.mxu0 0
        %2920 = vmatprep.subr.bf16.mxu0 0
        %2921 = vmatpush2.bf16.msra.mxu0 0
        %2922 = vmatprep.subr.bf16.mxu0 0
        %2923 = vmatpush2.bf16.msra.mxu0 0
        %2924 = vmatprep.mubr.bf16.mxu0 0
        %2925 = vmatmul.mubr.bf16.gmra.mxu0 %v2827
        %v2926 = vpop.f32.mrf.mxu0
        %v2927 = vadd.f32 0.0, %v2926
        %v2928 = vpop.f32.mrf.mxu0
        %v2929 = vpop.f32.mrf.mxu0
        %v2930 = vpop.f32.mrf.mxu0
        %2931 = vdwg.mxu0
        %v2932 = vadd.f32 %v2826, %v2927
        %s2933 = scalar_lea.vmem [#allocation15], 64
        %v2934 = vld [vmem:[%s2933] sm:$0xf]
        %v2935 = vld [vmem:[%s2933 + $0x4] sm:$0xf]
        %v2936 = vld [vmem:[%s2933 + $0x8] sm:$0xf]
        %v2937 = vld [vmem:[%s2933 + $0xc] sm:$0xf]
        %v2938 = vld [vmem:[%s2933 + $0x10] sm:$0xf]
        %v2939 = vld [vmem:[%s2933 + $0x14] sm:$0xf]
        %v2940 = vld [vmem:[%s2933 + $0x18] sm:$0xf]
        %v2941 = vld [vmem:[%s2933 + $0x1c] sm:$0xf]
        %v2942 = vld [vmem:[%s2933 + $0x20] sm:$0xf]
        %v2943 = vld [vmem:[%s2933 + $0x24] sm:$0xf]
        %v2944 = vld [vmem:[%s2933 + $0x28] sm:$0xf]
        %v2945 = vld [vmem:[%s2933 + $0x2c] sm:$0xf]
        %v2946 = vld [vmem:[%s2933 + $0x30] sm:$0xf]
        %v2947 = vld [vmem:[%s2933 + $0x34] sm:$0xf]
        %v2948 = vld [vmem:[%s2933 + $0x38] sm:$0xf]
        %v2949 = vld [vmem:[%s2933 + $0x3c] sm:$0xf]
        %v2951 = vunpack.c.l.b16 %v2827
        %v2952 = vpack.c.b16 %v2951, %v2951
        %v2954 = vshrl.u32 %v2952, 16
        %v2973 = vunpack.c.l.b16 %v2934
        %v2974 = vunpack.c.l.b16 %v2935
        %v2975 = vunpack.c.l.b16 %v2936
        %v2976 = vunpack.c.l.b16 %v2937
        %v2977 = vunpack.c.l.b16 %v2938
        %v2978 = vunpack.c.l.b16 %v2939
        %v2979 = vunpack.c.l.b16 %v2940
        %v2980 = vunpack.c.l.b16 %v2941
        %v2981 = vunpack.c.l.b16 %v2942
        %v2982 = vunpack.c.l.b16 %v2943
        %v2983 = vunpack.c.l.b16 %v2944
        %v2984 = vunpack.c.l.b16 %v2945
        %v2985 = vunpack.c.l.b16 %v2946
        %v2986 = vunpack.c.l.b16 %v2947
        %v2987 = vunpack.c.l.b16 %v2948
        %v2988 = vunpack.c.l.b16 %v2949
        %v2989 = vpack.c.b16 %v2974, %v2973
        %v2990 = vpack.c.b16 %v2976, %v2975
        %v2991 = vpack.c.b16 %v2978, %v2977
        %v2992 = vpack.c.b16 %v2980, %v2979
        %v2993 = vpack.c.b16 %v2982, %v2981
        %v2994 = vpack.c.b16 %v2984, %v2983
        %v2995 = vpack.c.b16 %v2986, %v2985
        %v2996 = vpack.c.b16 %v2988, %v2987
        %3005 = vmatprep.subr.bf16.mxu0 0
        %3006 = vmatpush1.bf16.msra.mxu0 %v2996
        %3007 = vmatprep.subr.bf16.mxu0 0
        %3008 = vmatpush1.bf16.msra.mxu0 %v2995
        %3009 = vmatprep.subr.bf16.mxu0 0
        %3010 = vmatpush1.bf16.msra.mxu0 %v2994
        %3011 = vmatprep.subr.bf16.mxu0 0
        %3012 = vmatpush1.bf16.msra.mxu0 %v2993
        %3013 = vmatprep.subr.bf16.mxu0 0
        %3014 = vmatpush1.bf16.msra.mxu0 %v2992
        %3015 = vmatprep.subr.bf16.mxu0 0
        %3016 = vmatpush1.bf16.msra.mxu0 %v2991
        %3017 = vmatprep.subr.bf16.mxu0 0
        %3018 = vmatpush1.bf16.msra.mxu0 %v2990
        %3019 = vmatprep.subr.bf16.mxu0 0
        %3020 = vmatpush1.bf16.msra.mxu0 %v2989
        %3021 = vmatprep.subr.bf16.mxu0 0
        %3022 = vmatpush2.bf16.msra.mxu0 0
        %3023 = vmatprep.subr.bf16.mxu0 0
        %3024 = vmatpush2.bf16.msra.mxu0 0
        %3025 = vmatprep.subr.bf16.mxu0 0
        %3026 = vmatpush2.bf16.msra.mxu0 0
        %3027 = vmatprep.subr.bf16.mxu0 0
        %3028 = vmatpush2.bf16.msra.mxu0 0
        %3029 = vmatprep.subr.bf16.mxu0 0
        %3030 = vmatpush2.bf16.msra.mxu0 0
        %3031 = vmatprep.subr.bf16.mxu0 0
        %3032 = vmatpush2.bf16.msra.mxu0 0
        %3033 = vmatprep.subr.bf16.mxu0 0
        %3034 = vmatpush2.bf16.msra.mxu0 0
        %3035 = vmatprep.subr.bf16.mxu0 0
        %3036 = vmatpush2.bf16.msra.mxu0 0
        %3037 = vmatprep.mubr.bf16.mxu0 0
        %3038 = vmatmul.mubr.bf16.gmra.mxu0 %v2954
        %v3039 = vpop.f32.mrf.mxu0
        %v3040 = vadd.f32 0.0, %v3039
        %v3041 = vpop.f32.mrf.mxu0
        %v3042 = vpop.f32.mrf.mxu0
        %v3043 = vpop.f32.mrf.mxu0
        %3044 = vdwg.mxu0
        %v3045 = vadd.f32 %v2932, %v3040
        %v3046 = vld [vmem:[#allocation3] sm:$0x2]
        %s3047 = scalar_lea.vmem [#allocation15], 128
        %v3048 = vld [vmem:[%s3047] sm:$0xf]
        %v3049 = vld [vmem:[%s3047 + $0x4] sm:$0xf]
        %v3050 = vld [vmem:[%s3047 + $0x8] sm:$0xf]
        %v3051 = vld [vmem:[%s3047 + $0xc] sm:$0xf]
        %v3052 = vld [vmem:[%s3047 + $0x10] sm:$0xf]
        %v3053 = vld [vmem:[%s3047 + $0x14] sm:$0xf]
        %v3054 = vld [vmem:[%s3047 + $0x18] sm:$0xf]
        %v3055 = vld [vmem:[%s3047 + $0x1c] sm:$0xf]
        %v3056 = vld [vmem:[%s3047 + $0x20] sm:$0xf]
        %v3057 = vld [vmem:[%s3047 + $0x24] sm:$0xf]
        %v3058 = vld [vmem:[%s3047 + $0x28] sm:$0xf]
        %v3059 = vld [vmem:[%s3047 + $0x2c] sm:$0xf]
        %v3060 = vld [vmem:[%s3047 + $0x30] sm:$0xf]
        %v3061 = vld [vmem:[%s3047 + $0x34] sm:$0xf]
        %v3062 = vld [vmem:[%s3047 + $0x38] sm:$0xf]
        %v3063 = vld [vmem:[%s3047 + $0x3c] sm:$0xf]
        %v3065 = vunpack.c.l.b16 %v3046
        %v3066 = vpack.c.b16 %v3065, %v3065
        %v3067 = vrot.slane %v3066, 1
        %v3085 = vunpack.c.l.b16 %v3048
        %v3086 = vunpack.c.l.b16 %v3049
        %v3087 = vunpack.c.l.b16 %v3050
        %v3088 = vunpack.c.l.b16 %v3051
        %v3089 = vunpack.c.l.b16 %v3052
        %v3090 = vunpack.c.l.b16 %v3053
        %v3091 = vunpack.c.l.b16 %v3054
        %v3092 = vunpack.c.l.b16 %v3055
        %v3093 = vunpack.c.l.b16 %v3056
        %v3094 = vunpack.c.l.b16 %v3057
        %v3095 = vunpack.c.l.b16 %v3058
        %v3096 = vunpack.c.l.b16 %v3059
        %v3097 = vunpack.c.l.b16 %v3060
        %v3098 = vunpack.c.l.b16 %v3061
        %v3099 = vunpack.c.l.b16 %v3062
        %v3100 = vunpack.c.l.b16 %v3063
        %v3101 = vpack.c.b16 %v3086, %v3085
        %v3102 = vpack.c.b16 %v3088, %v3087
        %v3103 = vpack.c.b16 %v3090, %v3089
        %v3104 = vpack.c.b16 %v3092, %v3091
        %v3105 = vpack.c.b16 %v3094, %v3093
        %v3106 = vpack.c.b16 %v3096, %v3095
        %v3107 = vpack.c.b16 %v3098, %v3097
        %v3108 = vpack.c.b16 %v3100, %v3099
        %3117 = vmatprep.subr.bf16.mxu0 0
        %3118 = vmatpush1.bf16.msra.mxu0 %v3108
        %3119 = vmatprep.subr.bf16.mxu0 0
        %3120 = vmatpush1.bf16.msra.mxu0 %v3107
        %3121 = vmatprep.subr.bf16.mxu0 0
        %3122 = vmatpush1.bf16.msra.mxu0 %v3106
        %3123 = vmatprep.subr.bf16.mxu0 0
        %3124 = vmatpush1.bf16.msra.mxu0 %v3105
        %3125 = vmatprep.subr.bf16.mxu0 0
        %3126 = vmatpush1.bf16.msra.mxu0 %v3104
        %3127 = vmatprep.subr.bf16.mxu0 0
        %3128 = vmatpush1.bf16.msra.mxu0 %v3103
        %3129 = vmatprep.subr.bf16.mxu0 0
        %3130 = vmatpush1.bf16.msra.mxu0 %v3102
        %3131 = vmatprep.subr.bf16.mxu0 0
        %3132 = vmatpush1.bf16.msra.mxu0 %v3101
        %3133 = vmatprep.subr.bf16.mxu0 0
        %3134 = vmatpush2.bf16.msra.mxu0 0
        %3135 = vmatprep.subr.bf16.mxu0 0
        %3136 = vmatpush2.bf16.msra.mxu0 0
        %3137 = vmatprep.subr.bf16.mxu0 0
        %3138 = vmatpush2.bf16.msra.mxu0 0
        %3139 = vmatprep.subr.bf16.mxu0 0
        %3140 = vmatpush2.bf16.msra.mxu0 0
        %3141 = vmatprep.subr.bf16.mxu0 0
        %3142 = vmatpush2.bf16.msra.mxu0 0
        %3143 = vmatprep.subr.bf16.mxu0 0
        %3144 = vmatpush2.bf16.msra.mxu0 0
        %3145 = vmatprep.subr.bf16.mxu0 0
        %3146 = vmatpush2.bf16.msra.mxu0 0
        %3147 = vmatprep.subr.bf16.mxu0 0
        %3148 = vmatpush2.bf16.msra.mxu0 0
        %3149 = vmatprep.mubr.bf16.mxu0 0
        %3150 = vmatmul.mubr.bf16.gmra.mxu0 %v3067
        %v3151 = vpop.f32.mrf.mxu0
        %v3152 = vadd.f32 0.0, %v3151
        %v3153 = vpop.f32.mrf.mxu0
        %v3154 = vpop.f32.mrf.mxu0
        %v3155 = vpop.f32.mrf.mxu0
        %3156 = vdwg.mxu0
        %v3157 = vadd.f32 %v3045, %v3152
        %s3158 = scalar_lea.vmem [#allocation15], 192
        %v3159 = vld [vmem:[%s3158] sm:$0xf]
        %v3160 = vld [vmem:[%s3158 + $0x4] sm:$0xf]
        %v3161 = vld [vmem:[%s3158 + $0x8] sm:$0xf]
        %v3162 = vld [vmem:[%s3158 + $0xc] sm:$0xf]
        %v3163 = vld [vmem:[%s3158 + $0x10] sm:$0xf]
        %v3164 = vld [vmem:[%s3158 + $0x14] sm:$0xf]
        %v3165 = vld [vmem:[%s3158 + $0x18] sm:$0xf]
        %v3166 = vld [vmem:[%s3158 + $0x1c] sm:$0xf]
        %v3167 = vld [vmem:[%s3158 + $0x20] sm:$0xf]
        %v3168 = vld [vmem:[%s3158 + $0x24] sm:$0xf]
        %v3169 = vld [vmem:[%s3158 + $0x28] sm:$0xf]
        %v3170 = vld [vmem:[%s3158 + $0x2c] sm:$0xf]
        %v3171 = vld [vmem:[%s3158 + $0x30] sm:$0xf]
        %v3172 = vld [vmem:[%s3158 + $0x34] sm:$0xf]
        %v3173 = vld [vmem:[%s3158 + $0x38] sm:$0xf]
        %v3174 = vld [vmem:[%s3158 + $0x3c] sm:$0xf]
        %v3176 = vshrl.u32 %v3066, 16
        %v3178 = vrot.slane %v3176, 1
        %v3196 = vunpack.c.l.b16 %v3159
        %v3197 = vunpack.c.l.b16 %v3160
        %v3198 = vunpack.c.l.b16 %v3161
        %v3199 = vunpack.c.l.b16 %v3162
        %v3200 = vunpack.c.l.b16 %v3163
        %v3201 = vunpack.c.l.b16 %v3164
        %v3202 = vunpack.c.l.b16 %v3165
        %v3203 = vunpack.c.l.b16 %v3166
        %v3204 = vunpack.c.l.b16 %v3167
        %v3205 = vunpack.c.l.b16 %v3168
        %v3206 = vunpack.c.l.b16 %v3169
        %v3207 = vunpack.c.l.b16 %v3170
        %v3208 = vunpack.c.l.b16 %v3171
        %v3209 = vunpack.c.l.b16 %v3172
        %v3210 = vunpack.c.l.b16 %v3173
        %v3211 = vunpack.c.l.b16 %v3174
        %v3212 = vpack.c.b16 %v3197, %v3196
        %v3213 = vpack.c.b16 %v3199, %v3198
        %v3214 = vpack.c.b16 %v3201, %v3200
        %v3215 = vpack.c.b16 %v3203, %v3202
        %v3216 = vpack.c.b16 %v3205, %v3204
        %v3217 = vpack.c.b16 %v3207, %v3206
        %v3218 = vpack.c.b16 %v3209, %v3208
        %v3219 = vpack.c.b16 %v3211, %v3210
        %3228 = vmatprep.subr.bf16.mxu0 0
        %3229 = vmatpush1.bf16.msra.mxu0 %v3219
        %3230 = vmatprep.subr.bf16.mxu0 0
        %3231 = vmatpush1.bf16.msra.mxu0 %v3218
        %3232 = vmatprep.subr.bf16.mxu0 0
        %3233 = vmatpush1.bf16.msra.mxu0 %v3217
        %3234 = vmatprep.subr.bf16.mxu0 0
        %3235 = vmatpush1.bf16.msra.mxu0 %v3216
        %3236 = vmatprep.subr.bf16.mxu0 0
        %3237 = vmatpush1.bf16.msra.mxu0 %v3215
        %3238 = vmatprep.subr.bf16.mxu0 0
        %3239 = vmatpush1.bf16.msra.mxu0 %v3214
        %3240 = vmatprep.subr.bf16.mxu0 0
        %3241 = vmatpush1.bf16.msra.mxu0 %v3213
        %3242 = vmatprep.subr.bf16.mxu0 0
        %3243 = vmatpush1.bf16.msra.mxu0 %v3212
        %3244 = vmatprep.subr.bf16.mxu0 0
        %3245 = vmatpush2.bf16.msra.mxu0 0
        %3246 = vmatprep.subr.bf16.mxu0 0
        %3247 = vmatpush2.bf16.msra.mxu0 0
        %3248 = vmatprep.subr.bf16.mxu0 0
        %3249 = vmatpush2.bf16.msra.mxu0 0
        %3250 = vmatprep.subr.bf16.mxu0 0
        %3251 = vmatpush2.bf16.msra.mxu0 0
        %3252 = vmatprep.subr.bf16.mxu0 0
        %3253 = vmatpush2.bf16.msra.mxu0 0
        %3254 = vmatprep.subr.bf16.mxu0 0
        %3255 = vmatpush2.bf16.msra.mxu0 0
        %3256 = vmatprep.subr.bf16.mxu0 0
        %3257 = vmatpush2.bf16.msra.mxu0 0
        %3258 = vmatprep.subr.bf16.mxu0 0
        %3259 = vmatpush2.bf16.msra.mxu0 0
        %3260 = vmatprep.mubr.bf16.mxu0 0
        %3261 = vmatmul.mubr.bf16.gmra.mxu0 %v3178
        %v3262 = vpop.f32.mrf.mxu0
        %v3263 = vadd.f32 0.0, %v3262
        %v3264 = vpop.f32.mrf.mxu0
        %v3265 = vpop.f32.mrf.mxu0
        %v3266 = vpop.f32.mrf.mxu0
        %3267 = vdwg.mxu0
        %v3268 = vadd.f32 %v3157, %v3263
        %v3269 = vld [vmem:[#allocation3] sm:$0x4]
        %s3270 = scalar_lea.vmem [#allocation15], 256
        %v3271 = vld [vmem:[%s3270] sm:$0xf]
        %v3272 = vld [vmem:[%s3270 + $0x4] sm:$0xf]
        %v3273 = vld [vmem:[%s3270 + $0x8] sm:$0xf]
        %v3274 = vld [vmem:[%s3270 + $0xc] sm:$0xf]
        %v3275 = vld [vmem:[%s3270 + $0x10] sm:$0xf]
        %v3276 = vld [vmem:[%s3270 + $0x14] sm:$0xf]
        %v3277 = vld [vmem:[%s3270 + $0x18] sm:$0xf]
        %v3278 = vld [vmem:[%s3270 + $0x1c] sm:$0xf]
        %v3279 = vld [vmem:[%s3270 + $0x20] sm:$0xf]
        %v3280 = vld [vmem:[%s3270 + $0x24] sm:$0xf]
        %v3281 = vld [vmem:[%s3270 + $0x28] sm:$0xf]
        %v3282 = vld [vmem:[%s3270 + $0x2c] sm:$0xf]
        %v3283 = vld [vmem:[%s3270 + $0x30] sm:$0xf]
        %v3284 = vld [vmem:[%s3270 + $0x34] sm:$0xf]
        %v3285 = vld [vmem:[%s3270 + $0x38] sm:$0xf]
        %v3286 = vld [vmem:[%s3270 + $0x3c] sm:$0xf]
        %v3288 = vunpack.c.l.b16 %v3269
        %v3289 = vpack.c.b16 %v3288, %v3288
        %v3290 = vrot.slane %v3289, 2
        %v3308 = vunpack.c.l.b16 %v3271
        %v3309 = vunpack.c.l.b16 %v3272
        %v3310 = vunpack.c.l.b16 %v3273
        %v3311 = vunpack.c.l.b16 %v3274
        %v3312 = vunpack.c.l.b16 %v3275
        %v3313 = vunpack.c.l.b16 %v3276
        %v3314 = vunpack.c.l.b16 %v3277
        %v3315 = vunpack.c.l.b16 %v3278
        %v3316 = vunpack.c.l.b16 %v3279
        %v3317 = vunpack.c.l.b16 %v3280
        %v3318 = vunpack.c.l.b16 %v3281
        %v3319 = vunpack.c.l.b16 %v3282
        %v3320 = vunpack.c.l.b16 %v3283
        %v3321 = vunpack.c.l.b16 %v3284
        %v3322 = vunpack.c.l.b16 %v3285
        %v3323 = vunpack.c.l.b16 %v3286
        %v3324 = vpack.c.b16 %v3309, %v3308
        %v3325 = vpack.c.b16 %v3311, %v3310
        %v3326 = vpack.c.b16 %v3313, %v3312
        %v3327 = vpack.c.b16 %v3315, %v3314
        %v3328 = vpack.c.b16 %v3317, %v3316
        %v3329 = vpack.c.b16 %v3319, %v3318
        %v3330 = vpack.c.b16 %v3321, %v3320
        %v3331 = vpack.c.b16 %v3323, %v3322
        %3340 = vmatprep.subr.bf16.mxu0 0
        %3341 = vmatpush1.bf16.msra.mxu0 %v3331
        %3342 = vmatprep.subr.bf16.mxu0 0
        %3343 = vmatpush1.bf16.msra.mxu0 %v3330
        %3344 = vmatprep.subr.bf16.mxu0 0
        %3345 = vmatpush1.bf16.msra.mxu0 %v3329
        %3346 = vmatprep.subr.bf16.mxu0 0
        %3347 = vmatpush1.bf16.msra.mxu0 %v3328
        %3348 = vmatprep.subr.bf16.mxu0 0
        %3349 = vmatpush1.bf16.msra.mxu0 %v3327
        %3350 = vmatprep.subr.bf16.mxu0 0
        %3351 = vmatpush1.bf16.msra.mxu0 %v3326
        %3352 = vmatprep.subr.bf16.mxu0 0
        %3353 = vmatpush1.bf16.msra.mxu0 %v3325
        %3354 = vmatprep.subr.bf16.mxu0 0
        %3355 = vmatpush1.bf16.msra.mxu0 %v3324
        %3356 = vmatprep.subr.bf16.mxu0 0
        %3357 = vmatpush2.bf16.msra.mxu0 0
        %3358 = vmatprep.subr.bf16.mxu0 0
        %3359 = vmatpush2.bf16.msra.mxu0 0
        %3360 = vmatprep.subr.bf16.mxu0 0
        %3361 = vmatpush2.bf16.msra.mxu0 0
        %3362 = vmatprep.subr.bf16.mxu0 0
        %3363 = vmatpush2.bf16.msra.mxu0 0
        %3364 = vmatprep.subr.bf16.mxu0 0
        %3365 = vmatpush2.bf16.msra.mxu0 0
        %3366 = vmatprep.subr.bf16.mxu0 0
        %3367 = vmatpush2.bf16.msra.mxu0 0
        %3368 = vmatprep.subr.bf16.mxu0 0
        %3369 = vmatpush2.bf16.msra.mxu0 0
        %3370 = vmatprep.subr.bf16.mxu0 0
        %3371 = vmatpush2.bf16.msra.mxu0 0
        %3372 = vmatprep.mubr.bf16.mxu0 0
        %3373 = vmatmul.mubr.bf16.gmra.mxu0 %v3290
        %v3374 = vpop.f32.mrf.mxu0
        %v3375 = vadd.f32 0.0, %v3374
        %v3376 = vpop.f32.mrf.mxu0
        %v3377 = vpop.f32.mrf.mxu0
        %v3378 = vpop.f32.mrf.mxu0
        %3379 = vdwg.mxu0
        %v3380 = vadd.f32 %v3268, %v3375
        %v3381 = vsub.f32 0.0, %v3380
        %v3382 = vmul.f32 %v3381, 1.442695
        %v3383 = vpow.pop %v3382
        %v3384 = vadd.f32 %v3383, 1.0
        %v3385 = vrcp.pop %v3384
        %v3386 = vpack.c.bf16 %v3385, %v3385
        %v3387 = vld [vmem:[#allocation16] sm:$0xf]
        %v3388 = vld [vmem:[#allocation16 + $0x4] sm:$0xf]
        %v3389 = vld [vmem:[#allocation16 + $0x8] sm:$0xf]
        %v3390 = vld [vmem:[#allocation16 + $0xc] sm:$0xf]
        %v3391 = vld [vmem:[#allocation16 + $0x10] sm:$0xf]
        %v3392 = vld [vmem:[#allocation16 + $0x14] sm:$0xf]
        %v3393 = vld [vmem:[#allocation16 + $0x18] sm:$0xf]
        %v3394 = vld [vmem:[#allocation16 + $0x1c] sm:$0xf]
        %v3395 = vld [vmem:[#allocation16 + $0x20] sm:$0xf]
        %v3396 = vld [vmem:[#allocation16 + $0x24] sm:$0xf]
        %v3397 = vld [vmem:[#allocation16 + $0x28] sm:$0xf]
        %v3398 = vld [vmem:[#allocation16 + $0x2c] sm:$0xf]
        %v3399 = vld [vmem:[#allocation16 + $0x30] sm:$0xf]
        %v3400 = vld [vmem:[#allocation16 + $0x34] sm:$0xf]
        %v3401 = vld [vmem:[#allocation16 + $0x38] sm:$0xf]
        %v3402 = vld [vmem:[#allocation16 + $0x3c] sm:$0xf]
        %v3403 = vld [vmem:[%s12] sm:$0x1]
        %v3420 = vunpack.c.l.b16 %v3387
        %v3421 = vunpack.c.l.b16 %v3388
        %v3422 = vunpack.c.l.b16 %v3389
        %v3423 = vunpack.c.l.b16 %v3390
        %v3424 = vunpack.c.l.b16 %v3391
        %v3425 = vunpack.c.l.b16 %v3392
        %v3426 = vunpack.c.l.b16 %v3393
        %v3427 = vunpack.c.l.b16 %v3394
        %v3428 = vunpack.c.l.b16 %v3395
        %v3429 = vunpack.c.l.b16 %v3396
        %v3430 = vunpack.c.l.b16 %v3397
        %v3431 = vunpack.c.l.b16 %v3398
        %v3432 = vunpack.c.l.b16 %v3399
        %v3433 = vunpack.c.l.b16 %v3400
        %v3434 = vunpack.c.l.b16 %v3401
        %v3435 = vunpack.c.l.b16 %v3402
        %v3436 = vpack.c.b16 %v3421, %v3420
        %v3437 = vpack.c.b16 %v3423, %v3422
        %v3438 = vpack.c.b16 %v3425, %v3424
        %v3439 = vpack.c.b16 %v3427, %v3426
        %v3440 = vpack.c.b16 %v3429, %v3428
        %v3441 = vpack.c.b16 %v3431, %v3430
        %v3442 = vpack.c.b16 %v3433, %v3432
        %v3443 = vpack.c.b16 %v3435, %v3434
        %3452 = vmatprep.subr.bf16.mxu0 0
        %3453 = vmatpush1.bf16.msra.mxu0 %v3443
        %3454 = vmatprep.subr.bf16.mxu0 0
        %3455 = vmatpush1.bf16.msra.mxu0 %v3442
        %3456 = vmatprep.subr.bf16.mxu0 0
        %3457 = vmatpush1.bf16.msra.mxu0 %v3441
        %3458 = vmatprep.subr.bf16.mxu0 0
        %3459 = vmatpush1.bf16.msra.mxu0 %v3440
        %3460 = vmatprep.subr.bf16.mxu0 0
        %3461 = vmatpush1.bf16.msra.mxu0 %v3439
        %3462 = vmatprep.subr.bf16.mxu0 0
        %3463 = vmatpush1.bf16.msra.mxu0 %v3438
        %3464 = vmatprep.subr.bf16.mxu0 0
        %3465 = vmatpush1.bf16.msra.mxu0 %v3437
        %3466 = vmatprep.subr.bf16.mxu0 0
        %3467 = vmatpush1.bf16.msra.mxu0 %v3436
        %3468 = vmatprep.subr.bf16.mxu0 0
        %3469 = vmatpush2.bf16.msra.mxu0 0
        %3470 = vmatprep.subr.bf16.mxu0 0
        %3471 = vmatpush2.bf16.msra.mxu0 0
        %3472 = vmatprep.subr.bf16.mxu0 0
        %3473 = vmatpush2.bf16.msra.mxu0 0
        %3474 = vmatprep.subr.bf16.mxu0 0
        %3475 = vmatpush2.bf16.msra.mxu0 0
        %3476 = vmatprep.subr.bf16.mxu0 0
        %3477 = vmatpush2.bf16.msra.mxu0 0
        %3478 = vmatprep.subr.bf16.mxu0 0
        %3479 = vmatpush2.bf16.msra.mxu0 0
        %3480 = vmatprep.subr.bf16.mxu0 0
        %3481 = vmatpush2.bf16.msra.mxu0 0
        %3482 = vmatprep.subr.bf16.mxu0 0
        %3483 = vmatpush2.bf16.msra.mxu0 0
        %3484 = vmatprep.mubr.bf16.mxu0 0
        %3485 = vmatmul.mubr.bf16.gmra.mxu0 %v3386
        %v3486 = vpop.f32.mrf.mxu0
        %v3487 = vadd.f32 %v3403, %v3486
        %v3488 = vpop.f32.mrf.mxu0
        %v3489 = vpop.f32.mrf.mxu0
        %v3490 = vpop.f32.mrf.mxu0
        %3491 = vdwg.mxu0
        %v3492 = vsub.f32 0.0, %v3487
        %v3493 = vmul.f32 %v3492, 1.442695
        %v3494 = vpow.pop %v3493
        %v3495 = vadd.f32 %v3494, 1.0
        %v3496 = vrcp.pop %v3495
        %v3497 = vpack.c.bf16 %v3496, %v3496
        %v3498 = vld [vmem:[#allocation18] sm:$0xf]
        %v3499 = vld [vmem:[#allocation18 + $0x4] sm:$0xf]
        %v3500 = vld [vmem:[#allocation18 + $0x8] sm:$0xf]
        %v3501 = vld [vmem:[#allocation18 + $0xc] sm:$0xf]
        %v3502 = vld [vmem:[#allocation18 + $0x10] sm:$0xf]
        %v3503 = vld [vmem:[#allocation18 + $0x14] sm:$0xf]
        %v3504 = vld [vmem:[#allocation18 + $0x18] sm:$0xf]
        %v3505 = vld [vmem:[#allocation18 + $0x1c] sm:$0xf]
        %v3506 = vld [vmem:[#allocation18 + $0x20] sm:$0xf]
        %v3507 = vld [vmem:[#allocation18 + $0x24] sm:$0xf]
        %v3508 = vld [vmem:[#allocation18 + $0x28] sm:$0xf]
        %v3509 = vld [vmem:[#allocation18 + $0x2c] sm:$0xf]
        %v3510 = vld [vmem:[#allocation18 + $0x30] sm:$0xf]
        %v3511 = vld [vmem:[#allocation18 + $0x34] sm:$0xf]
        %v3512 = vld [vmem:[#allocation18 + $0x38] sm:$0xf]
        %v3513 = vld [vmem:[#allocation18 + $0x3c] sm:$0xf]
        %v3514 = vld [vmem:[%s14] sm:$0x1]
        %v3531 = vunpack.c.l.b16 %v3498
        %v3532 = vunpack.c.l.b16 %v3499
        %v3533 = vunpack.c.l.b16 %v3500
        %v3534 = vunpack.c.l.b16 %v3501
        %v3535 = vunpack.c.l.b16 %v3502
        %v3536 = vunpack.c.l.b16 %v3503
        %v3537 = vunpack.c.l.b16 %v3504
        %v3538 = vunpack.c.l.b16 %v3505
        %v3539 = vunpack.c.l.b16 %v3506
        %v3540 = vunpack.c.l.b16 %v3507
        %v3541 = vunpack.c.l.b16 %v3508
        %v3542 = vunpack.c.l.b16 %v3509
        %v3543 = vunpack.c.l.b16 %v3510
        %v3544 = vunpack.c.l.b16 %v3511
        %v3545 = vunpack.c.l.b16 %v3512
        %v3546 = vunpack.c.l.b16 %v3513
        %v3547 = vpack.c.b16 %v3532, %v3531
        %v3548 = vpack.c.b16 %v3534, %v3533
        %v3549 = vpack.c.b16 %v3536, %v3535
        %v3550 = vpack.c.b16 %v3538, %v3537
        %v3551 = vpack.c.b16 %v3540, %v3539
        %v3552 = vpack.c.b16 %v3542, %v3541
        %v3553 = vpack.c.b16 %v3544, %v3543
        %v3554 = vpack.c.b16 %v3546, %v3545
        %3563 = vmatprep.subr.bf16.mxu0 0
        %3564 = vmatpush1.bf16.msra.mxu0 %v3554
        %3565 = vmatprep.subr.bf16.mxu0 0
        %3566 = vmatpush1.bf16.msra.mxu0 %v3553
        %3567 = vmatprep.subr.bf16.mxu0 0
        %3568 = vmatpush1.bf16.msra.mxu0 %v3552
        %3569 = vmatprep.subr.bf16.mxu0 0
        %3570 = vmatpush1.bf16.msra.mxu0 %v3551
        %3571 = vmatprep.subr.bf16.mxu0 0
        %3572 = vmatpush1.bf16.msra.mxu0 %v3550
        %3573 = vmatprep.subr.bf16.mxu0 0
        %3574 = vmatpush1.bf16.msra.mxu0 %v3549
        %3575 = vmatprep.subr.bf16.mxu0 0
        %3576 = vmatpush1.bf16.msra.mxu0 %v3548
        %3577 = vmatprep.subr.bf16.mxu0 0
        %3578 = vmatpush1.bf16.msra.mxu0 %v3547
        %3579 = vmatprep.subr.bf16.mxu0 0
        %3580 = vmatpush2.bf16.msra.mxu0 0
        %3581 = vmatprep.subr.bf16.mxu0 0
        %3582 = vmatpush2.bf16.msra.mxu0 0
        %3583 = vmatprep.subr.bf16.mxu0 0
        %3584 = vmatpush2.bf16.msra.mxu0 0
        %3585 = vmatprep.subr.bf16.mxu0 0
        %3586 = vmatpush2.bf16.msra.mxu0 0
        %3587 = vmatprep.subr.bf16.mxu0 0
        %3588 = vmatpush2.bf16.msra.mxu0 0
        %3589 = vmatprep.subr.bf16.mxu0 0
        %3590 = vmatpush2.bf16.msra.mxu0 0
        %3591 = vmatprep.subr.bf16.mxu0 0
        %3592 = vmatpush2.bf16.msra.mxu0 0
        %3593 = vmatprep.subr.bf16.mxu0 0
        %3594 = vmatpush2.bf16.msra.mxu0 0
        %3595 = vmatprep.mubr.bf16.mxu0 0
        %3596 = vmatmul.mubr.bf16.gmra.mxu0 %v3497
        %v3597 = vpop.f32.mrf.mxu0
        %v3598 = vadd.f32 %v3514, %v3597
        %v3599 = vpop.f32.mrf.mxu0
        %v3600 = vpop.f32.mrf.mxu0
        %v3601 = vpop.f32.mrf.mxu0
        %3602 = vdwg.mxu0
        %3603 = vst [vmem:[%s627] sm:$0x1] %v3598
        %s3604 = sand.u32 %s364, 1
        %s3605 = scalar_lea.sflag [#allocation6], %s3604
        %s3606 = sand.u32 %s364, 1
        %s3607 = scalar_lea.vmem [#allocation19], %s3606
        // Predicated region
        $region117: #{tpu_custom_call.1} parent=79 // pred_check
          %p3608 = pneg %p374
        $region118: #{tpu_custom_call.1} parent=79 // pred_check_branch
          %3610 = sbr.rel (%p3608) target = $region120
        $region119: #{tpu_custom_call.1} parent=79 // pred_region
          %s3612 = ssub.s32 16, 16
          %3613 = vsyncadd %s3605, %s3612
          %s3614 = smul.addr %s36, 16
          %s3615 = scalar_lea.hbm %s15, %s3614
          %s3617 = sshll.u32 %s3607, 4
          %s3618 = int_to_ptr.vmem [resolvable:$true] %s3617
          %3620 = dma.vmem_to_hbm [thread:$0]  %s3618, 16, %s3615, %s3605
        $region120: #{tpu_custom_call.1} parent=79 // pred_fallthru
          _
      $region80: #{tpu_custom_call.1} parent=5 // pred_fallthru
        _
      %p3621 = scmp.le.s32.totalorder 2, %s31
      // Predicated region
      $region121: #{tpu_custom_call.1} parent=5 // pred_check
        %p3622 = pneg %p3621
      $region122: #{tpu_custom_call.1} parent=5 // pred_check_branch
        %3624 = sbr.rel (%p3622) target = $region124
      $region123: #{tpu_custom_call.1} parent=5 // pred_region
        %s3625 = ssub.s32 %s31, 2
        // Predicated region
        $region125: #{tpu_custom_call.1} parent=123 // pred_check
          %p3626 = pneg %p380
        $region126: #{tpu_custom_call.1} parent=123 // pred_check_branch
          %3628 = sbr.rel (%p3626) target = $region128
        $region127: #{tpu_custom_call.1} parent=123 // pred_region
          %s3629 = sand.u32 %s365, 1
          %s3630 = scalar_lea.sflag [#allocation6], %s3629
          %s3631 = sand.u32 %s365, 1
          %s3632 = scalar_lea.vmem [#allocation19], %s3631
          %3633 = dma.done %s3630, 16
        $region128: #{tpu_custom_call.1} parent=123 // pred_fallthru
          _
      $region124: #{tpu_custom_call.1} parent=5 // pred_fallthru
        _
    $region6: #{tpu_custom_call.1} parent=1 // loop_footer
      %s35 = sadd.s32 1, %s31
    $region7: #{tpu_custom_call.1} parent=1 // loop_footer_branch
      %30 = sbr.rel target = $region3
    $region8: #{tpu_custom_call.1} parent=1 // loop_exit
      _
    %3634 = vsyncpa [#allocation5], 1
    %s3635 = scalar_lea.sflag [#allocation5], 1
    %3636 = vsyncpa %s3635, 1
    %3637 = vsyncpa [#allocation8], 1
    %3638 = vsyncpa [#allocation11], 1
    %3639 = vsyncpa [#allocation14], 1
    %3640 = vsyncpa [#allocation17], 1
    %3641 = vsyncpa [#allocation6], 1
    %s3642 = scalar_lea.sflag [#allocation6], 1
    %3643 = vsyncpa %s3642, 1

</llo_original>
